<compile_context>
chip_gen: v7x
topology: tpu7x:2x2x1
jax: 0.10.0
libtpu: 0.0.40
codegen_flags: <defaults>
</compile_context>

<pallas_src>
import jax
import jax.numpy as jnp
from jax import lax
from jax.experimental import pallas as pl
from jax.experimental.pallas import tpu as pltpu


def _round_up(x, m):
    return (x + m - 1) // m * m


# -----------------------------------------------------------------------------
# One-shot eager probes for pltpu.roll:
#   * does it follow np.roll's "shift toward higher indices" convention?
#   * does a dynamic (traced) shift amount lower on this backend?
# If the dynamic probe fails we fall back to a static-shift kernel (the whole
# disparity loop inside one grid step), which always lowers.
# -----------------------------------------------------------------------------
_ROLL_PROBE = None  # (dynamic_roll_ok, numpy_like_convention)


def _roll_probes():
    global _ROLL_PROBE
    if _ROLL_PROBE is not None:
        return _ROLL_PROBE

    x = jnp.tile(jnp.arange(128, dtype=jnp.float32)[None, :], (8, 1))

    np_like = True
    try:
        def sprobe(x_ref, o_ref):
            o_ref[...] = pltpu.roll(x_ref[...], 1, axis=1)

        ys = pl.pallas_call(
            sprobe, out_shape=jax.ShapeDtypeStruct((8, 128), jnp.float32))(x)
        np_like = bool(jnp.allclose(jax.block_until_ready(ys),
                                    jnp.roll(x, 1, axis=1)))
    except Exception:
        np_like = True  # documented np.roll-like convention

    dyn_ok = False
    try:
        def dprobe(s_ref, x_ref, o_ref):
            o_ref[...] = pltpu.roll(x_ref[...], s_ref[0], axis=1)

        yd = pl.pallas_call(
            dprobe,
            out_shape=jax.ShapeDtypeStruct((8, 128), jnp.float32),
            in_specs=[pl.BlockSpec(memory_space=pltpu.MemorySpace.SMEM),
                      pl.BlockSpec(memory_space=pltpu.MemorySpace.VMEM)],
            out_specs=pl.BlockSpec(memory_space=pltpu.MemorySpace.VMEM),
        )(jnp.array([1], jnp.int32), x)
        expect = jnp.roll(x, 1 if np_like else -1, axis=1)
        dyn_ok = bool(jnp.allclose(jax.block_until_ready(yd), expect))
    except Exception:
        dyn_ok = False

    _ROLL_PROBE = (dyn_ok, np_like)
    return _ROLL_PROBE


# -----------------------------------------------------------------------------
# Pallas kernel.  Block shapes:
#   left         : (1, C, TH, Wk)      (Wk = W rounded up to 128 lanes)
#   right/rshift : (1, C, TH, Wp)      (Wp = Wk + P, left-zero-padded by P>=D)
#   out          : (1, 2, d_tile, TH, Wk)
# Grid: (B, Hp/TH, D/d_tile) with dims ("parallel", "parallel", "arbitrary").
# -----------------------------------------------------------------------------
def _make_double_psm_kernel(C, d_tile, Wk, Wp, *, roll_np_like, upcast_scratch,
                            static_disparity):
    P = Wp - Wk

    def kernel(l_ref, r_ref, rs_ref, o_ref, *scratch):
        th = l_ref.shape[2]
        inv_c = jnp.float32(1.0 / C)

        if upcast_scratch:
            l_s, r_s, rs_s = scratch

            # Upcast sub-f32 feature planes to f32 scratch ONCE per
            # (batch, H-tile) block; the scratch persists across the innermost
            # "arbitrary" disparity steps, so casts are not repeated per (c, i).
            @pl.when(pl.program_id(2) == 0)
            def _upcast():
                for c in range(C):
                    l_s[c] = l_ref[0, c].astype(jnp.float32)
                    r_s[c] = r_ref[0, c].astype(jnp.float32)
                    rs_s[c] = rs_ref[0, c].astype(jnp.float32)

            read_l = lambda c: l_s[c]
            read_r = lambda c: r_s[c]
            read_rs = lambda c: rs_s[c]
        else:
            read_l = lambda c: l_ref[0, c]
            read_r = lambda c: r_ref[0, c]
            read_rs = lambda c: rs_ref[0, c]

        d_base = 0 if static_disparity else pl.program_id(2) * d_tile

        # Channel loop: fori_loop (bounds program size / live ranges) with a
        # manual unroll-by-2 when C is even.
        u = 2 if C % 2 == 0 else 1
        steps = C // u

        for j in range(d_tile):
            i = d_base + j  # python int when static_disparity, else traced
            # Align the left-zero-padded right features with the left ones:
            #   r_aligned[w] = Rpad[w + P - i] = R[w - i]   (0 for w < i)
            # so the w<i mask comes for free from the padding.
            shift = (Wk + i) if roll_np_like else (P - i)

            def body(cc, accs):
                a1, a2 = accs
                for t in range(u):
                    c = cc * u + t
                    l_c = read_l(c)                                    # (th, Wk)
                    r_al = pltpu.roll(read_r(c), shift, axis=1)[:, :Wk]
                    rs_al = pltpu.roll(read_rs(c), shift, axis=1)[:, :Wk]
                    a1 = a1 + l_c * r_al
                    a2 = a2 + l_c * rs_al
                return (a1, a2)

            zero = jnp.zeros((th, Wk), jnp.float32)
            acc1, acc2 = lax.fori_loop(0, steps, body, (zero, zero))
            o_ref[0, 0, j] = (acc1 * inv_c).astype(o_ref.dtype)
            o_ref[0, 1, j] = (acc2 * inv_c).astype(o_ref.dtype)

    return kernel


def _pick_d_tile(D, max_tile=8):
    """Largest divisor of D that is <= max_tile (amortizes grid-step overhead)."""
    for t in range(min(max_tile, D), 0, -1):
        if D % t == 0:
            return t
    return 1


def _pick_tile_h(H, B, per_row_bytes, Wk, row_align,
                 vreg_plane_cap=8192, budget_bytes=24 << 20):
    """H-tile: multiple of row_align, accumulators stay in vregs
    (TH*Wk <= vreg_plane_cap), double-buffered working set within the VMEM
    budget, and >= ~4 parallel grid steps so dual-core parts get >= 2 each."""
    def _floor_align(x):
        return max(row_align, (x // row_align) * row_align)

    rows_vreg = _floor_align(vreg_plane_cap // max(Wk, 1))
    rows_vmem = _floor_align(budget_bytes // max(per_row_bytes, 1))
    h_aligned = _round_up(H, row_align)
    rows_par = h_aligned if B >= 4 else _floor_align((h_aligned * B) // 4)
    cap = max(row_align, min(rows_vreg, rows_vmem, rows_par, h_aligned, 512))

    best_t, best_hp = row_align, _round_up(H, row_align)
    t = row_align
    while t <= cap:
        hp = _round_up(H, t)
        if hp < best_hp or (hp == best_hp and t > best_t):
            best_t, best_hp = t, hp
        t += row_align
    return best_t, best_hp


def double_psm_cost_volume(left, right, right_shifted, depth_channel, *,
                           d_tile=None, tile_h=None, out_dtype=jnp.float32,
                           vmem_budget_bytes=24 << 20):
    B, C, H, W = left.shape
    D = int(depth_channel)
    assert right.shape == (B, C, H, W) and right_shifted.shape == (B, C, H, W)

    in_dtype = jnp.dtype(left.dtype)
    out_dtype = jnp.dtype(out_dtype)
    right = right.astype(in_dtype)
    right_shifted = right_shifted.astype(in_dtype)
    upcast_scratch = in_dtype != jnp.dtype(jnp.float32)

    dyn_roll_ok, roll_np_like = _roll_probes()

    # Lane-dense padding: feature width to a multiple of 128; right features
    # additionally LEFT-padded by P >= D zero columns so every disparity's
    # w<i band comes straight out of the padding (no in-kernel mask).
    Wk = _round_up(W, 128)
    Wp = _round_up(Wk + D, 128)
    P = Wp - Wk

    if d_tile is None or not dyn_roll_ok:
        d_tile = _pick_d_tile(D) if dyn_roll_ok else D
    assert D % d_tile == 0
    num_d_blocks = D // d_tile
    static_disparity = num_d_blocks == 1  # all shifts are python ints

    # Sublane alignment of the H tile (16 rows for 16-bit streams, 32 for 8-bit).
    min_isz = min(in_dtype.itemsize, out_dtype.itemsize)
    row_align = max(8, 32 // min_isz)

    per_row = (2 * C * (Wk + 2 * Wp) * in_dtype.itemsize          # inputs, x2 buf
               + 2 * (2 * d_tile * Wk) * out_dtype.itemsize)      # output, x2 buf
    if upcast_scratch:
        per_row += C * (Wk + 2 * Wp) * 4                          # f32 scratch
    if tile_h is None:
        tile_h, Hp = _pick_tile_h(H, B, per_row, Wk, row_align,
                                  budget_bytes=vmem_budget_bytes)
    else:
        assert tile_h % row_align == 0
        Hp = _round_up(H, tile_h)

    lp = jnp.pad(left, ((0, 0), (0, 0), (0, Hp - H), (0, Wk - W)))
    rp = jnp.pad(right, ((0, 0), (0, 0), (0, Hp - H), (P, Wp - P - W)))
    rsp = jnp.pad(right_shifted, ((0, 0), (0, 0), (0, Hp - H), (P, Wp - P - W)))

    grid = (B, Hp // tile_h, num_d_blocks)
    in_specs = [
        pl.BlockSpec((1, C, tile_h, Wk), lambda b, h, d: (b, 0, h, 0)),
        pl.BlockSpec((1, C, tile_h, Wp), lambda b, h, d: (b, 0, h, 0)),
        pl.BlockSpec((1, C, tile_h, Wp), lambda b, h, d: (b, 0, h, 0)),
    ]
    out_spec = pl.BlockSpec((1, 2, d_tile, tile_h, Wk),
                            lambda b, h, d: (b, 0, d, h, 0))
    scratch_shapes = ()
    if upcast_scratch:
        scratch_shapes = (
            pltpu.VMEM((C, tile_h, Wk), jnp.float32),
            pltpu.VMEM((C, tile_h, Wp), jnp.float32),
            pltpu.VMEM((C, tile_h, Wp), jnp.float32),
        )

    kernel = _make_double_psm_kernel(
        C, d_tile, Wk, Wp,
        roll_np_like=roll_np_like,
        upcast_scratch=upcast_scratch,
        static_disparity=static_disparity)

    flops = 4 * B * C * D * H * W  # two streams x (mul + add) per (b,c,i,h,w)
    bytes_accessed = (B * Hp * C * (Wk + 2 * Wp) * in_dtype.itemsize
                      + B * 2 * D * Hp * Wk * out_dtype.itemsize)

    # TODO(synk): for very large C (e.g. 512-channel features) add a channel-
    # chunked accumulation grid axis; a single 8-row block can exceed VMEM.
    block_bytes = per_row * tile_h
    vmem_limit = int(min(max(48 << 20, int(block_bytes * 1.25) + (2 << 20)),
                         128 << 20))

    out = pl.pallas_call(
        kernel,
        out_shape=jax.ShapeDtypeStruct((B, 2, D, Hp, Wk), out_dtype),
        grid=grid,
        in_specs=in_specs,
        out_specs=out_spec,
        scratch_shapes=scratch_shapes,
        compiler_params=pltpu.CompilerParams(
            dimension_semantics=("parallel", "parallel", "arbitrary"),
            vmem_limit_bytes=vmem_limit),
        cost_estimate=pl.CostEstimate(flops=flops, transcendentals=0,
                                      bytes_accessed=bytes_accessed),
    )(lp, rp, rsp)

    out = out.reshape(B, 2 * D, Hp, Wk)  # free: merges adjacent dims
    if Hp != H or Wk != W:
        out = out[:, :, :H, :W]
    return out


# -----------------------------------------------------------------------------
# Host-side glue: the module's shifted grid_sample, done as two separable
# banded 1-D bilinear interpolations (matmuls) instead of a 4-D gather.
# TODO(synk): cross-check against a torch F.grid_sample golden (esp. H != W);
# here it is only validated against the in-script pure-JAX reference.
# -----------------------------------------------------------------------------
def _interp_matrix(coords, size):
    """(n, size) bilinear interpolation matrix with zeros padding (<=2 nnz/row)."""
    c0 = jnp.floor(coords)
    w1 = coords - c0
    w0 = 1.0 - w1
    i0 = c0.astype(jnp.int32)
    i1 = i0 + 1
    idx = jnp.arange(size, dtype=jnp.int32)
    m0 = (idx[None, :] == i0[:, None]).astype(jnp.float32)  # OOB never matches
    m1 = (idx[None, :] == i1[:, None]).astype(jnp.float32)
    return m0 * w0[:, None] + m1 * w1[:, None]


def grid_sample_shifted(right):
    """Reproduces the module exactly (including its quirks): the sampling grid is
    stack([grid_y, grid_x - 1/C], -1), so the sampled x (width) coordinate
    depends only on the output row h and the sampled y (height) coordinate only
    on the output column w.  Bilinear, zeros padding, align_corners=False."""
    B, C, H, W = right.shape
    x_norm = -1.0 + 2.0 * jnp.arange(H, dtype=jnp.float32) / H             # per output h
    y_norm = -1.0 + 2.0 * jnp.arange(W, dtype=jnp.float32) / W - 1.0 / C   # per output w
    ix = ((x_norm + 1.0) * W - 1.0) / 2.0   # pixel x sampled for output row h
    iy = ((y_norm + 1.0) * H - 1.0) / 2.0   # pixel y sampled for output col w
    A = _interp_matrix(iy, H)    # (W, H): interpolates input rows, indexed by w
    Bm = _interp_matrix(ix, W)   # (H, W): interpolates input cols, indexed by h
    # RS[b,c,h,w] = sum_{y,x} A[w,y] * right[b,c,y,x] * Bm[h,x]
    return jnp.einsum("wy,bcyx,hx->bchw", A, right.astype(jnp.float32), Bm)


def double_psm_cosine_forward(left, right, max_disp=192, downsample_scale=4, *,
                              feature_dtype=None, out_dtype=jnp.float32):
    depth_channel = int(max_disp // downsample_scale)
    right_shifted = grid_sample_shifted(right)
    if feature_dtype is not None:
        # bf16 DMA halves feature HBM traffic; the kernel upcasts each plane to
        # f32 scratch once per block and accumulates in f32.
        left = left.astype(feature_dtype)
        right = right.astype(feature_dtype)
        right_shifted = right_shifted.astype(feature_dtype)
    else:
        right_shifted = right_shifted.astype(left.dtype)
    return double_psm_cost_volume(left, right, right_shifted, depth_channel,
                                  out_dtype=out_dtype)


# -----------------------------------------------------------------------------
# Pure-JAX reference mirroring the PyTorch loop (sanity check only).
# -----------------------------------------------------------------------------
def _psm_cost_ref(L, R, D):
    B, C, H, W = L.shape
    cost = jnp.zeros((B, D, H, W), jnp.float32)
    for i in range(D):
        if i == 0:
            cost = cost.at[:, 0, :, :].set(jnp.mean(L * R, axis=1))
        else:
            cost = cost.at[:, i, :, i:].set(
                jnp.mean(L[:, :, :, i:] * R[:, :, :, :W - i], axis=1))
    return cost


if __name__ == "__main__":
    # W=128 keeps all loads/stores lane-dense; D=16 exercises the disparity
    # grid axis (two d-blocks of d_tile=8) and the masked w<i band.
    B, C, H, W = 2, 4, 32, 128
    max_disp, downsample_scale = 64, 4          # depth_channel D = 16
    D = max_disp // downsample_scale

    key = jax.random.PRNGKey(0)
    k1, k2 = jax.random.split(key)
    left = jax.random.normal(k1, (B, C, H, W), dtype=jnp.float32)
    right = jax.random.normal(k2, (B, C, H, W), dtype=jnp.float32)

    out = double_psm_cosine_forward(left, right, max_disp, downsample_scale)
    out = jax.block_until_ready(out)

    # sanity check against the PyTorch-equivalent pure-JAX reference
    right_shifted = grid_sample_shifted(right)
    ref = jnp.concatenate(
        [_psm_cost_ref(left, right, D), _psm_cost_ref(left, right_shifted, D)],
        axis=1)
    assert out.shape == (B, 2 * D, H, W)
    assert out.dtype == jnp.float32
    assert jnp.allclose(out, ref, atol=1e-5, rtol=1e-5), "f32 cost volume mismatch"

    # reduced-precision path: bf16 feature DMA + bf16 cost-volume output
    out_bf16 = double_psm_cosine_forward(
        left, right, max_disp, downsample_scale,
        feature_dtype=jnp.bfloat16, out_dtype=jnp.bfloat16)
    out_bf16 = jax.block_until_ready(out_bf16)
    assert out_bf16.shape == (B, 2 * D, H, W)
    assert out_bf16.dtype == jnp.bfloat16
    err = jnp.abs(out_bf16.astype(jnp.float32) - ref).reshape(B, 2 * D, -1)
    assert bool(jnp.all(jnp.max(err, axis=-1) < 0.2)), "bf16 per-plane max error"
    assert bool(jnp.all(jnp.mean(err, axis=-1) < 0.02)), "bf16 per-plane mean error"

    print("KERNEL_OK")
</pallas_src>

<mosaic_0001>
module attributes {stable_mosaic.version = 11 : i64} {
  func.func @sprobe(%arg0: memref<8x128xf32, #tpu.memory_space<vmem>>, %arg1: memref<8x128xf32, #tpu.memory_space<vmem>>) attributes {dimension_semantics = [], scalar_prefetch = 0 : i64, scratch_operands = 0 : i64, tpu.core_type = #tpu.core_type<tc>} {
    %c0 = arith.constant 0 : index
    %c0_0 = arith.constant 0 : index
    %0 = vector.load %arg0[%c0, %c0_0] : memref<8x128xf32, #tpu.memory_space<vmem>>, vector<8x128xf32>
    %c1_i32 = arith.constant 1 : i32
    %1 = tpu.dynamic_rotate %0 by %c1_i32 dim 1 : vector<8x128xf32>, i32 -> vector<8x128xf32>
    %c0_1 = arith.constant 0 : index
    %c0_2 = arith.constant 0 : index
    %2 = vector.load %arg1[%c0_1, %c0_2] : memref<8x128xf32, #tpu.memory_space<vmem>>, vector<8x128xf32>
    tpu.vector_store %arg1[%c0_1, %c0_2], %1 {strides = array<i32>} : memref<8x128xf32, #tpu.memory_space<vmem>>, vector<8x128xf32>,
    return
  }
}

module attributes {stable_mosaic.version = 11 : i64} {
  func.func @dprobe(%arg0: memref<1xi32, #tpu.memory_space<smem>>, %arg1: memref<8x128xf32, #tpu.memory_space<vmem>>, %arg2: memref<8x128xf32, #tpu.memory_space<vmem>>) attributes {dimension_semantics = [], scalar_prefetch = 0 : i64, scratch_operands = 0 : i64, tpu.core_type = #tpu.core_type<tc>} {
    %c0 = arith.constant 0 : index
    %c0_0 = arith.constant 0 : index
    %0 = vector.load %arg1[%c0, %c0_0] : memref<8x128xf32, #tpu.memory_space<vmem>>, vector<8x128xf32>
    %c0_1 = arith.constant 0 : index
    %1 = memref.load %arg0[%c0_1] : memref<1xi32, #tpu.memory_space<smem>>
    %2 = tpu.dynamic_rotate %0 by %1 dim 1 : vector<8x128xf32>, i32 -> vector<8x128xf32>
    %c0_2 = arith.constant 0 : index
    %c0_3 = arith.constant 0 : index
    %3 = vector.load %arg2[%c0_2, %c0_3] : memref<8x128xf32, #tpu.memory_space<vmem>>, vector<8x128xf32>
    tpu.vector_store %arg2[%c0_2, %c0_3], %2 {strides = array<i32>} : memref<8x128xf32, #tpu.memory_space<vmem>>, vector<8x128xf32>,
    return
  }
}

module attributes {stable_mosaic.version = 11 : i64} {
  func.func @kernel(%arg0: i32, %arg1: i32, %arg2: i32, %arg3: memref<1x4x16x128xf32, #tpu.memory_space<vmem>>, %arg4: memref<1x4x16x256xf32, #tpu.memory_space<vmem>>, %arg5: memref<1x4x16x256xf32, #tpu.memory_space<vmem>>, %arg6: memref<1x2x16x16x128xf32, #tpu.memory_space<vmem>>) attributes {dimension_semantics = [#tpu.dimension_semantics<parallel>, #tpu.dimension_semantics<parallel>, #tpu.dimension_semantics<arbitrary>], iteration_bounds = array<i64: 2, 2, 1>, scalar_prefetch = 0 : i64, scratch_operands = 0 : i64, tpu.core_type = #tpu.core_type<tc>, window_params = [{transform_indices = @transform_0, window_bounds = array<i64: 1, 4, 16, 128>}, {transform_indices = @transform_1, window_bounds = array<i64: 1, 4, 16, 256>}, {transform_indices = @transform_2, window_bounds = array<i64: 1, 4, 16, 256>}, {transform_indices = @transform_3, window_bounds = array<i64: 1, 2, 16, 16, 128>}]} {
    %cst = arith.constant 0.000000e+00 : f32
    %0 = vector.broadcast %cst : f32 to vector<16x128xf32>
    %c0_i32 = arith.constant 0 : i32
    %c2_i32 = arith.constant 2 : i32
    %1 = arith.addi %c0_i32, %c2_i32 : i32
    %c1_i32 = arith.constant 1 : i32
    %2:2 = scf.for %arg7 = %c0_i32 to %1 step %c1_i32 iter_args(%arg8 = %0, %arg9 = %0) -> (vector<16x128xf32>, vector<16x128xf32>)  : i32 {
      %c2_i32_252 = arith.constant 2 : i32
      %208 = arith.muli %arg7, %c2_i32_252 : i32
      %c0_i32_253 = arith.constant 0 : i32
      %209 = arith.addi %208, %c0_i32_253 : i32
      %c0_254 = arith.constant 0 : index
      %210 = arith.index_cast %209 : i32 to index
      %c0_255 = arith.constant 0 : index
      %c0_256 = arith.constant 0 : index
      %211 = vector.load %arg3[%c0_254, %210, %c0_255, %c0_256] : memref<1x4x16x128xf32, #tpu.memory_space<vmem>>, vector<1x1x16x128xf32>
      %212 = vector.shape_cast %211 : vector<1x1x16x128xf32> to vector<16x128xf32>
      %c0_257 = arith.constant 0 : index
      %213 = arith.index_cast %209 : i32 to index
      %c0_258 = arith.constant 0 : index
      %c0_259 = arith.constant 0 : index
      %214 = vector.load %arg4[%c0_257, %213, %c0_258, %c0_259] : memref<1x4x16x256xf32, #tpu.memory_space<vmem>>, vector<1x1x16x256xf32>
      %215 = vector.shape_cast %214 : vector<1x1x16x256xf32> to vector<16x256xf32>
      %c128_i32 = arith.constant 128 : i32
      %216 = tpu.dynamic_rotate %215 by %c128_i32 dim 1 : vector<16x256xf32>, i32 -> vector<16x256xf32>
      %217 = vector.extract_strided_slice %216 {offsets = [0, 0], sizes = [16, 128], strides = [1, 1]} : vector<16x256xf32> to vector<16x128xf32>
      %c0_260 = arith.constant 0 : index
      %218 = arith.index_cast %209 : i32 to index
      %c0_261 = arith.constant 0 : index
      %c0_262 = arith.constant 0 : index
      %219 = vector.load %arg5[%c0_260, %218, %c0_261, %c0_262] : memref<1x4x16x256xf32, #tpu.memory_space<vmem>>, vector<1x1x16x256xf32>
      %220 = vector.shape_cast %219 : vector<1x1x16x256xf32> to vector<16x256xf32>
      %c128_i32_263 = arith.constant 128 : i32
      %221 = tpu.dynamic_rotate %220 by %c128_i32_263 dim 1 : vector<16x256xf32>, i32 -> vector<16x256xf32>
      %222 = vector.extract_strided_slice %221 {offsets = [0, 0], sizes = [16, 128], strides = [1, 1]} : vector<16x256xf32> to vector<16x128xf32>
      %223 = arith.mulf %212, %217 : vector<16x128xf32>
      %224 = arith.addf %arg8, %223 : vector<16x128xf32>
      %225 = arith.mulf %212, %222 : vector<16x128xf32>
      %226 = arith.addf %arg9, %225 : vector<16x128xf32>
      %c2_i32_264 = arith.constant 2 : i32
      %227 = arith.muli %arg7, %c2_i32_264 : i32
      %c1_i32_265 = arith.constant 1 : i32
      %228 = arith.addi %227, %c1_i32_265 : i32
      %c0_266 = arith.constant 0 : index
      %229 = arith.index_cast %228 : i32 to index
      %c0_267 = arith.constant 0 : index
      %c0_268 = arith.constant 0 : index
      %230 = vector.load %arg3[%c0_266, %229, %c0_267, %c0_268] : memref<1x4x16x128xf32, #tpu.memory_space<vmem>>, vector<1x1x16x128xf32>
      %231 = vector.shape_cast %230 : vector<1x1x16x128xf32> to vector<16x128xf32>
      %c0_269 = arith.constant 0 : index
      %232 = arith.index_cast %228 : i32 to index
      %c0_270 = arith.constant 0 : index
      %c0_271 = arith.constant 0 : index
      %233 = vector.load %arg4[%c0_269, %232, %c0_270, %c0_271] : memref<1x4x16x256xf32, #tpu.memory_space<vmem>>, vector<1x1x16x256xf32>
      %234 = vector.shape_cast %233 : vector<1x1x16x256xf32> to vector<16x256xf32>
      %c128_i32_272 = arith.constant 128 : i32
      %235 = tpu.dynamic_rotate %234 by %c128_i32_272 dim 1 : vector<16x256xf32>, i32 -> vector<16x256xf32>
      %236 = vector.extract_strided_slice %235 {offsets = [0, 0], sizes = [16, 128], strides = [1, 1]} : vector<16x256xf32> to vector<16x128xf32>
      %c0_273 = arith.constant 0 : index
      %237 = arith.index_cast %228 : i32 to index
      %c0_274 = arith.constant 0 : index
      %c0_275 = arith.constant 0 : index
      %238 = vector.load %arg5[%c0_273, %237, %c0_274, %c0_275] : memref<1x4x16x256xf32, #tpu.memory_space<vmem>>, vector<1x1x16x256xf32>
      %239 = vector.shape_cast %238 : vector<1x1x16x256xf32> to vector<16x256xf32>
      %c128_i32_276 = arith.constant 128 : i32
      %240 = tpu.dynamic_rotate %239 by %c128_i32_276 dim 1 : vector<16x256xf32>, i32 -> vector<16x256xf32>
      %241 = vector.extract_strided_slice %240 {offsets = [0, 0], sizes = [16, 128], strides = [1, 1]} : vector<16x256xf32> to vector<16x128xf32>
      %242 = arith.mulf %231, %236 : vector<16x128xf32>
      %243 = arith.addf %224, %242 : vector<16x128xf32>
      %244 = arith.mulf %231, %241 : vector<16x128xf32>
      %245 = arith.addf %226, %244 : vector<16x128xf32>
      scf.yield %243, %245 : vector<16x128xf32>, vector<16x128xf32>
    }
    %c2_i32_0 = arith.constant 2 : i32
    %cst_1 = arith.constant 2.500000e-01 : f32
    %3 = vector.broadcast %cst_1 : f32 to vector<16x128xf32>
    %4 = arith.mulf %2#0, %3 : vector<16x128xf32>
    %c0 = arith.constant 0 : index
    %c0_2 = arith.constant 0 : index
    %c0_3 = arith.constant 0 : index
    %c0_4 = arith.constant 0 : index
    %c0_5 = arith.constant 0 : index
    %5 = vector.load %arg6[%c0, %c0_2, %c0_3, %c0_4, %c0_5] : memref<1x2x16x16x128xf32, #tpu.memory_space<vmem>>, vector<1x1x1x16x128xf32>
    %6 = vector.shape_cast %5 : vector<1x1x1x16x128xf32> to vector<16x128xf32>
    %7 = vector.shape_cast %4 : vector<16x128xf32> to vector<1x1x1x16x128xf32>
    tpu.vector_store %arg6[%c0, %c0_2, %c0_3, %c0_4, %c0_5], %7 {strides = array<i32>} : memref<1x2x16x16x128xf32, #tpu.memory_space<vmem>>, vector<1x1x1x16x128xf32>,
    %cst_6 = arith.constant 2.500000e-01 : f32
    %8 = vector.broadcast %cst_6 : f32 to vector<16x128xf32>
    %9 = arith.mulf %2#1, %8 : vector<16x128xf32>
    %c0_7 = arith.constant 0 : index
    %c1 = arith.constant 1 : index
    %c0_8 = arith.constant 0 : index
    %c0_9 = arith.constant 0 : index
    %c0_10 = arith.constant 0 : index
    %10 = vector.load %arg6[%c0_7, %c1, %c0_8, %c0_9, %c0_10] : memref<1x2x16x16x128xf32, #tpu.memory_space<vmem>>, vector<1x1x1x16x128xf32>
    %11 = vector.shape_cast %10 : vector<1x1x1x16x128xf32> to vector<16x128xf32>
    %12 = vector.shape_cast %9 : vector<16x128xf32> to vector<1x1x1x16x128xf32>
    tpu.vector_store %arg6[%c0_7, %c1, %c0_8, %c0_9, %c0_10], %12 {strides = array<i32>} : memref<1x2x16x16x128xf32, #tpu.memory_space<vmem>>, vector<1x1x1x16x128xf32>,
    %cst_11 = arith.constant 0.000000e+00 : f32
    %13 = vector.broadcast %cst_11 : f32 to vector<16x128xf32>
    %c0_i32_12 = arith.constant 0 : i32
    %c2_i32_13 = arith.constant 2 : i32
    %14 = arith.addi %c0_i32_12, %c2_i32_13 : i32
    %c1_i32_14 = arith.constant 1 : i32
    %15:2 = scf.for %arg7 = %c0_i32_12 to %14 step %c1_i32_14 iter_args(%arg8 = %13, %arg9 = %13) -> (vector<16x128xf32>, vector<16x128xf32>)  : i32 {
      %c2_i32_252 = arith.constant 2 : i32
      %208 = arith.muli %arg7, %c2_i32_252 : i32
      %c0_i32_253 = arith.constant 0 : i32
      %209 = arith.addi %208, %c0_i32_253 : i32
      %c0_254 = arith.constant 0 : index
      %210 = arith.index_cast %209 : i32 to index
      %c0_255 = arith.constant 0 : index
      %c0_256 = arith.constant 0 : index
      %211 = vector.load %arg3[%c0_254, %210, %c0_255, %c0_256] : memref<1x4x16x128xf32, #tpu.memory_space<vmem>>, vector<1x1x16x128xf32>
      %212 = vector.shape_cast %211 : vector<1x1x16x128xf32> to vector<16x128xf32>
      %c0_257 = arith.constant 0 : index
      %213 = arith.index_cast %209 : i32 to index
      %c0_258 = arith.constant 0 : index
      %c0_259 = arith.constant 0 : index
      %214 = vector.load %arg4[%c0_257, %213, %c0_258, %c0_259] : memref<1x4x16x256xf32, #tpu.memory_space<vmem>>, vector<1x1x16x256xf32>
      %215 = vector.shape_cast %214 : vector<1x1x16x256xf32> to vector<16x256xf32>
      %c129_i32 = arith.constant 129 : i32
      %216 = tpu.dynamic_rotate %215 by %c129_i32 dim 1 : vector<16x256xf32>, i32 -> vector<16x256xf32>
      %217 = vector.extract_strided_slice %216 {offsets = [0, 0], sizes = [16, 128], strides = [1, 1]} : vector<16x256xf32> to vector<16x128xf32>
      %c0_260 = arith.constant 0 : index
      %218 = arith.index_cast %209 : i32 to index
      %c0_261 = arith.constant 0 : index
      %c0_262 = arith.constant 0 : index
      %219 = vector.load %arg5[%c0_260, %218, %c0_261, %c0_262] : memref<1x4x16x256xf32, #tpu.memory_space<vmem>>, vector<1x1x16x256xf32>
      %220 = vector.shape_cast %219 : vector<1x1x16x256xf32> to vector<16x256xf32>
      %c129_i32_263 = arith.constant 129 : i32
      %221 = tpu.dynamic_rotate %220 by %c129_i32_263 dim 1 : vector<16x256xf32>, i32 -> vector<16x256xf32>
      %222 = vector.extract_strided_slice %221 {offsets = [0, 0], sizes = [16, 128], strides = [1, 1]} : vector<16x256xf32> to vector<16x128xf32>
      %223 = arith.mulf %212, %217 : vector<16x128xf32>
      %224 = arith.addf %arg8, %223 : vector<16x128xf32>
      %225 = arith.mulf %212, %222 : vector<16x128xf32>
      %226 = arith.addf %arg9, %225 : vector<16x128xf32>
      %c2_i32_264 = arith.constant 2 : i32
      %227 = arith.muli %arg7, %c2_i32_264 : i32
      %c1_i32_265 = arith.constant 1 : i32
      %228 = arith.addi %227, %c1_i32_265 : i32
      %c0_266 = arith.constant 0 : index
      %229 = arith.index_cast %228 : i32 to index
      %c0_267 = arith.constant 0 : index
      %c0_268 = arith.constant 0 : index
      %230 = vector.load %arg3[%c0_266, %229, %c0_267, %c0_268] : memref<1x4x16x128xf32, #tpu.memory_space<vmem>>, vector<1x1x16x128xf32>
      %231 = vector.shape_cast %230 : vector<1x1x16x128xf32> to vector<16x128xf32>
      %c0_269 = arith.constant 0 : index
      %232 = arith.index_cast %228 : i32 to index
      %c0_270 = arith.constant 0 : index
      %c0_271 = arith.constant 0 : index
      %233 = vector.load %arg4[%c0_269, %232, %c0_270, %c0_271] : memref<1x4x16x256xf32, #tpu.memory_space<vmem>>, vector<1x1x16x256xf32>
      %234 = vector.shape_cast %233 : vector<1x1x16x256xf32> to vector<16x256xf32>
      %c129_i32_272 = arith.constant 129 : i32
      %235 = tpu.dynamic_rotate %234 by %c129_i32_272 dim 1 : vector<16x256xf32>, i32 -> vector<16x256xf32>
      %236 = vector.extract_strided_slice %235 {offsets = [0, 0], sizes = [16, 128], strides = [1, 1]} : vector<16x256xf32> to vector<16x128xf32>
      %c0_273 = arith.constant 0 : index
      %237 = arith.index_cast %228 : i32 to index
      %c0_274 = arith.constant 0 : index
      %c0_275 = arith.constant 0 : index
      %238 = vector.load %arg5[%c0_273, %237, %c0_274, %c0_275] : memref<1x4x16x256xf32, #tpu.memory_space<vmem>>, vector<1x1x16x256xf32>
      %239 = vector.shape_cast %238 : vector<1x1x16x256xf32> to vector<16x256xf32>
      %c129_i32_276 = arith.constant 129 : i32
      %240 = tpu.dynamic_rotate %239 by %c129_i32_276 dim 1 : vector<16x256xf32>, i32 -> vector<16x256xf32>
      %241 = vector.extract_strided_slice %240 {offsets = [0, 0], sizes = [16, 128], strides = [1, 1]} : vector<16x256xf32> to vector<16x128xf32>
      %242 = arith.mulf %231, %236 : vector<16x128xf32>
      %243 = arith.addf %224, %242 : vector<16x128xf32>
      %244 = arith.mulf %231, %241 : vector<16x128xf32>
      %245 = arith.addf %226, %244 : vector<16x128xf32>
      scf.yield %243, %245 : vector<16x128xf32>, vector<16x128xf32>
    }
    %c2_i32_15 = arith.constant 2 : i32
    %cst_16 = arith.constant 2.500000e-01 : f32
    %16 = vector.broadcast %cst_16 : f32 to vector<16x128xf32>
    %17 = arith.mulf %15#0, %16 : vector<16x128xf32>
    %c0_17 = arith.constant 0 : index
    %c0_18 = arith.constant 0 : index
    %c1_19 = arith.constant 1 : index
    %c0_20 = arith.constant 0 : index
    %c0_21 = arith.constant 0 : index
    %18 = vector.load %arg6[%c0_17, %c0_18, %c1_19, %c0_20, %c0_21] : memref<1x2x16x16x128xf32, #tpu.memory_space<vmem>>, vector<1x1x1x16x128xf32>
    %19 = vector.shape_cast %18 : vector<1x1x1x16x128xf32> to vector<16x128xf32>
    %20 = vector.shape_cast %17 : vector<16x128xf32> to vector<1x1x1x16x128xf32>
    tpu.vector_store %arg6[%c0_17, %c0_18, %c1_19, %c0_20, %c0_21], %20 {strides = array<i32>} : memref<1x2x16x16x128xf32, #tpu.memory_space<vmem>>, vector<1x1x1x16x128xf32>,
    %cst_22 = arith.constant 2.500000e-01 : f32
    %21 = vector.broadcast %cst_22 : f32 to vector<16x128xf32>
    %22 = arith.mulf %15#1, %21 : vector<16x128xf32>
    %c0_23 = arith.constant 0 : index
    %c1_24 = arith.constant 1 : index
    %c1_25 = arith.constant 1 : index
    %c0_26 = arith.constant 0 : index
    %c0_27 = arith.constant 0 : index
    %23 = vector.load %arg6[%c0_23, %c1_24, %c1_25, %c0_26, %c0_27] : memref<1x2x16x16x128xf32, #tpu.memory_space<vmem>>, vector<1x1x1x16x128xf32>
    %24 = vector.shape_cast %23 : vector<1x1x1x16x128xf32> to vector<16x128xf32>
    %25 = vector.shape_cast %22 : vector<16x128xf32> to vector<1x1x1x16x128xf32>
    tpu.vector_store %arg6[%c0_23, %c1_24, %c1_25, %c0_26, %c0_27], %25 {strides = array<i32>} : memref<1x2x16x16x128xf32, #tpu.memory_space<vmem>>, vector<1x1x1x16x128xf32>,
    %cst_28 = arith.constant 0.000000e+00 : f32
    %26 = vector.broadcast %cst_28 : f32 to vector<16x128xf32>
    %c0_i32_29 = arith.constant 0 : i32
    %c2_i32_30 = arith.constant 2 : i32
    %27 = arith.addi %c0_i32_29, %c2_i32_30 : i32
    %c1_i32_31 = arith.constant 1 : i32
    %28:2 = scf.for %arg7 = %c0_i32_29 to %27 step %c1_i32_31 iter_args(%arg8 = %26, %arg9 = %26) -> (vector<16x128xf32>, vector<16x128xf32>)  : i32 {
      %c2_i32_252 = arith.constant 2 : i32
      %208 = arith.muli %arg7, %c2_i32_252 : i32
      %c0_i32_253 = arith.constant 0 : i32
      %209 = arith.addi %208, %c0_i32_253 : i32
      %c0_254 = arith.constant 0 : index
      %210 = arith.index_cast %209 : i32 to index
      %c0_255 = arith.constant 0 : index
      %c0_256 = arith.constant 0 : index
      %211 = vector.load %arg3[%c0_254, %210, %c0_255, %c0_256] : memref<1x4x16x128xf32, #tpu.memory_space<vmem>>, vector<1x1x16x128xf32>
      %212 = vector.shape_cast %211 : vector<1x1x16x128xf32> to vector<16x128xf32>
      %c0_257 = arith.constant 0 : index
      %213 = arith.index_cast %209 : i32 to index
      %c0_258 = arith.constant 0 : index
      %c0_259 = arith.constant 0 : index
      %214 = vector.load %arg4[%c0_257, %213, %c0_258, %c0_259] : memref<1x4x16x256xf32, #tpu.memory_space<vmem>>, vector<1x1x16x256xf32>
      %215 = vector.shape_cast %214 : vector<1x1x16x256xf32> to vector<16x256xf32>
      %c130_i32 = arith.constant 130 : i32
      %216 = tpu.dynamic_rotate %215 by %c130_i32 dim 1 : vector<16x256xf32>, i32 -> vector<16x256xf32>
      %217 = vector.extract_strided_slice %216 {offsets = [0, 0], sizes = [16, 128], strides = [1, 1]} : vector<16x256xf32> to vector<16x128xf32>
      %c0_260 = arith.constant 0 : index
      %218 = arith.index_cast %209 : i32 to index
      %c0_261 = arith.constant 0 : index
      %c0_262 = arith.constant 0 : index
      %219 = vector.load %arg5[%c0_260, %218, %c0_261, %c0_262] : memref<1x4x16x256xf32, #tpu.memory_space<vmem>>, vector<1x1x16x256xf32>
      %220 = vector.shape_cast %219 : vector<1x1x16x256xf32> to vector<16x256xf32>
      %c130_i32_263 = arith.constant 130 : i32
      %221 = tpu.dynamic_rotate %220 by %c130_i32_263 dim 1 : vector<16x256xf32>, i32 -> vector<16x256xf32>
      %222 = vector.extract_strided_slice %221 {offsets = [0, 0], sizes = [16, 128], strides = [1, 1]} : vector<16x256xf32> to vector<16x128xf32>
      %223 = arith.mulf %212, %217 : vector<16x128xf32>
      %224 = arith.addf %arg8, %223 : vector<16x128xf32>
      %225 = arith.mulf %212, %222 : vector<16x128xf32>
      %226 = arith.addf %arg9, %225 : vector<16x128xf32>
      %c2_i32_264 = arith.constant 2 : i32
      %227 = arith.muli %arg7, %c2_i32_264 : i32
      %c1_i32_265 = arith.constant 1 : i32
      %228 = arith.addi %227, %c1_i32_265 : i32
      %c0_266 = arith.constant 0 : index
      %229 = arith.index_cast %228 : i32 to index
      %c0_267 = arith.constant 0 : index
      %c0_268 = arith.constant 0 : index
      %230 = vector.load %arg3[%c0_266, %229, %c0_267, %c0_268] : memref<1x4x16x128xf32, #tpu.memory_space<vmem>>, vector<1x1x16x128xf32>
      %231 = vector.shape_cast %230 : vector<1x1x16x128xf32> to vector<16x128xf32>
      %c0_269 = arith.constant 0 : index
      %232 = arith.index_cast %228 : i32 to index
      %c0_270 = arith.constant 0 : index
      %c0_271 = arith.constant 0 : index
      %233 = vector.load %arg4[%c0_269, %232, %c0_270, %c0_271] : memref<1x4x16x256xf32, #tpu.memory_space<vmem>>, vector<1x1x16x256xf32>
      %234 = vector.shape_cast %233 : vector<1x1x16x256xf32> to vector<16x256xf32>
      %c130_i32_272 = arith.constant 130 : i32
      %235 = tpu.dynamic_rotate %234 by %c130_i32_272 dim 1 : vector<16x256xf32>, i32 -> vector<16x256xf32>
      %236 = vector.extract_strided_slice %235 {offsets = [0, 0], sizes = [16, 128], strides = [1, 1]} : vector<16x256xf32> to vector<16x128xf32>
      %c0_273 = arith.constant 0 : index
      %237 = arith.index_cast %228 : i32 to index
      %c0_274 = arith.constant 0 : index
      %c0_275 = arith.constant 0 : index
      %238 = vector.load %arg5[%c0_273, %237, %c0_274, %c0_275] : memref<1x4x16x256xf32, #tpu.memory_space<vmem>>, vector<1x1x16x256xf32>
      %239 = vector.shape_cast %238 : vector<1x1x16x256xf32> to vector<16x256xf32>
      %c130_i32_276 = arith.constant 130 : i32
      %240 = tpu.dynamic_rotate %239 by %c130_i32_276 dim 1 : vector<16x256xf32>, i32 -> vector<16x256xf32>
      %241 = vector.extract_strided_slice %240 {offsets = [0, 0], sizes = [16, 128], strides = [1, 1]} : vector<16x256xf32> to vector<16x128xf32>
      %242 = arith.mulf %231, %236 : vector<16x128xf32>
      %243 = arith.addf %224, %242 : vector<16x128xf32>
      %244 = arith.mulf %231, %241 : vector<16x128xf32>
      %245 = arith.addf %226, %244 : vector<16x128xf32>
      scf.yield %243, %245 : vector<16x128xf32>, vector<16x128xf32>
    }
    %c2_i32_32 = arith.constant 2 : i32
    %cst_33 = arith.constant 2.500000e-01 : f32
    %29 = vector.broadcast %cst_33 : f32 to vector<16x128xf32>
    %30 = arith.mulf %28#0, %29 : vector<16x128xf32>
    %c0_34 = arith.constant 0 : index
    %c0_35 = arith.constant 0 : index
    %c2 = arith.constant 2 : index
    %c0_36 = arith.constant 0 : index
    %c0_37 = arith.constant 0 : index
    %31 = vector.load %arg6[%c0_34, %c0_35, %c2, %c0_36, %c0_37] : memref<1x2x16x16x128xf32, #tpu.memory_space<vmem>>, vector<1x1x1x16x128xf32>
    %32 = vector.shape_cast %31 : vector<1x1x1x16x128xf32> to vector<16x128xf32>
    %33 = vector.shape_cast %30 : vector<16x128xf32> to vector<1x1x1x16x128xf32>
    tpu.vector_store %arg6[%c0_34, %c0_35, %c2, %c0_36, %c0_37], %33 {strides = array<i32>} : memref<1x2x16x16x128xf32, #tpu.memory_space<vmem>>, vector<1x1x1x16x128xf32>,
    %cst_38 = arith.constant 2.500000e-01 : f32
    %34 = vector.broadcast %cst_38 : f32 to vector<16x128xf32>
    %35 = arith.mulf %28#1, %34 : vector<16x128xf32>
    %c0_39 = arith.constant 0 : index
    %c1_40 = arith.constant 1 : index
    %c2_41 = arith.constant 2 : index
    %c0_42 = arith.constant 0 : index
    %c0_43 = arith.constant 0 : index
    %36 = vector.load %arg6[%c0_39, %c1_40, %c2_41, %c0_42, %c0_43] : memref<1x2x16x16x128xf32, #tpu.memory_space<vmem>>, vector<1x1x1x16x128xf32>
    %37 = vector.shape_cast %36 : vector<1x1x1x16x128xf32> to vector<16x128xf32>
    %38 = vector.shape_cast %35 : vector<16x128xf32> to vector<1x1x1x16x128xf32>
    tpu.vector_store %arg6[%c0_39, %c1_40, %c2_41, %c0_42, %c0_43], %38 {strides = array<i32>} : memref<1x2x16x16x128xf32, #tpu.memory_space<vmem>>, vector<1x1x1x16x128xf32>,
    %cst_44 = arith.constant 0.000000e+00 : f32
    %39 = vector.broadcast %cst_44 : f32 to vector<16x128xf32>
    %c0_i32_45 = arith.constant 0 : i32
    %c2_i32_46 = arith.constant 2 : i32
    %40 = arith.addi %c0_i32_45, %c2_i32_46 : i32
    %c1_i32_47 = arith.constant 1 : i32
    %41:2 = scf.for %arg7 = %c0_i32_45 to %40 step %c1_i32_47 iter_args(%arg8 = %39, %arg9 = %39) -> (vector<16x128xf32>, vector<16x128xf32>)  : i32 {
      %c2_i32_252 = arith.constant 2 : i32
      %208 = arith.muli %arg7, %c2_i32_252 : i32
      %c0_i32_253 = arith.constant 0 : i32
      %209 = arith.addi %208, %c0_i32_253 : i32
      %c0_254 = arith.constant 0 : index
      %210 = arith.index_cast %209 : i32 to index
      %c0_255 = arith.constant 0 : index
      %c0_256 = arith.constant 0 : index
      %211 = vector.load %arg3[%c0_254, %210, %c0_255, %c0_256] : memref<1x4x16x128xf32, #tpu.memory_space<vmem>>, vector<1x1x16x128xf32>
      %212 = vector.shape_cast %211 : vector<1x1x16x128xf32> to vector<16x128xf32>
      %c0_257 = arith.constant 0 : index
      %213 = arith.index_cast %209 : i32 to index
      %c0_258 = arith.constant 0 : index
      %c0_259 = arith.constant 0 : index
      %214 = vector.load %arg4[%c0_257, %213, %c0_258, %c0_259] : memref<1x4x16x256xf32, #tpu.memory_space<vmem>>, vector<1x1x16x256xf32>
      %215 = vector.shape_cast %214 : vector<1x1x16x256xf32> to vector<16x256xf32>
      %c131_i32 = arith.constant 131 : i32
      %216 = tpu.dynamic_rotate %215 by %c131_i32 dim 1 : vector<16x256xf32>, i32 -> vector<16x256xf32>
      %217 = vector.extract_strided_slice %216 {offsets = [0, 0], sizes = [16, 128], strides = [1, 1]} : vector<16x256xf32> to vector<16x128xf32>
      %c0_260 = arith.constant 0 : index
      %218 = arith.index_cast %209 : i32 to index
      %c0_261 = arith.constant 0 : index
      %c0_262 = arith.constant 0 : index
      %219 = vector.load %arg5[%c0_260, %218, %c0_261, %c0_262] : memref<1x4x16x256xf32, #tpu.memory_space<vmem>>, vector<1x1x16x256xf32>
      %220 = vector.shape_cast %219 : vector<1x1x16x256xf32> to vector<16x256xf32>
      %c131_i32_263 = arith.constant 131 : i32
      %221 = tpu.dynamic_rotate %220 by %c131_i32_263 dim 1 : vector<16x256xf32>, i32 -> vector<16x256xf32>
      %222 = vector.extract_strided_slice %221 {offsets = [0, 0], sizes = [16, 128], strides = [1, 1]} : vector<16x256xf32> to vector<16x128xf32>
      %223 = arith.mulf %212, %217 : vector<16x128xf32>
      %224 = arith.addf %arg8, %223 : vector<16x128xf32>
      %225 = arith.mulf %212, %222 : vector<16x128xf32>
      %226 = arith.addf %arg9, %225 : vector<16x128xf32>
      %c2_i32_264 = arith.constant 2 : i32
      %227 = arith.muli %arg7, %c2_i32_264 : i32
      %c1_i32_265 = arith.constant 1 : i32
      %228 = arith.addi %227, %c1_i32_265 : i32
      %c0_266 = arith.constant 0 : index
      %229 = arith.index_cast %228 : i32 to index
      %c0_267 = arith.constant 0 : index
      %c0_268 = arith.constant 0 : index
      %230 = vector.load %arg3[%c0_266, %229, %c0_267, %c0_268] : memref<1x4x16x128xf32, #tpu.memory_space<vmem>>, vector<1x1x16x128xf32>
      %231 = vector.shape_cast %230 : vector<1x1x16x128xf32> to vector<16x128xf32>
      %c0_269 = arith.constant 0 : index
      %232 = arith.index_cast %228 : i32 to index
      %c0_270 = arith.constant 0 : index
      %c0_271 = arith.constant 0 : index
      %233 = vector.load %arg4[%c0_269, %232, %c0_270, %c0_271] : memref<1x4x16x256xf32, #tpu.memory_space<vmem>>, vector<1x1x16x256xf32>
      %234 = vector.shape_cast %233 : vector<1x1x16x256xf32> to vector<16x256xf32>
      %c131_i32_272 = arith.constant 131 : i32
      %235 = tpu.dynamic_rotate %234 by %c131_i32_272 dim 1 : vector<16x256xf32>, i32 -> vector<16x256xf32>
      %236 = vector.extract_strided_slice %235 {offsets = [0, 0], sizes = [16, 128], strides = [1, 1]} : vector<16x256xf32> to vector<16x128xf32>
      %c0_273 = arith.constant 0 : index
      %237 = arith.index_cast %228 : i32 to index
      %c0_274 = arith.constant 0 : index
      %c0_275 = arith.constant 0 : index
      %238 = vector.load %arg5[%c0_273, %237, %c0_274, %c0_275] : memref<1x4x16x256xf32, #tpu.memory_space<vmem>>, vector<1x1x16x256xf32>
      %239 = vector.shape_cast %238 : vector<1x1x16x256xf32> to vector<16x256xf32>
      %c131_i32_276 = arith.constant 131 : i32
      %240 = tpu.dynamic_rotate %239 by %c131_i32_276 dim 1 : vector<16x256xf32>, i32 -> vector<16x256xf32>
      %241 = vector.extract_strided_slice %240 {offsets = [0, 0], sizes = [16, 128], strides = [1, 1]} : vector<16x256xf32> to vector<16x128xf32>
      %242 = arith.mulf %231, %236 : vector<16x128xf32>
      %243 = arith.addf %224, %242 : vector<16x128xf32>
      %244 = arith.mulf %231, %241 : vector<16x128xf32>
      %245 = arith.addf %226, %244 : vector<16x128xf32>
      scf.yield %243, %245 : vector<16x128xf32>, vector<16x128xf32>
    }
    %c2_i32_48 = arith.constant 2 : i32
    %cst_49 = arith.constant 2.500000e-01 : f32
    %42 = vector.broadcast %cst_49 : f32 to vector<16x128xf32>
    %43 = arith.mulf %41#0, %42 : vector<16x128xf32>
    %c0_50 = arith.constant 0 : index
    %c0_51 = arith.constant 0 : index
    %c3 = arith.constant 3 : index
    %c0_52 = arith.constant 0 : index
    %c0_53 = arith.constant 0 : index
    %44 = vector.load %arg6[%c0_50, %c0_51, %c3, %c0_52, %c0_53] : memref<1x2x16x16x128xf32, #tpu.memory_space<vmem>>, vector<1x1x1x16x128xf32>
    %45 = vector.shape_cast %44 : vector<1x1x1x16x128xf32> to vector<16x128xf32>
    %46 = vector.shape_cast %43 : vector<16x128xf32> to vector<1x1x1x16x128xf32>
    tpu.vector_store %arg6[%c0_50, %c0_51, %c3, %c0_52, %c0_53], %46 {strides = array<i32>} : memref<1x2x16x16x128xf32, #tpu.memory_space<vmem>>, vector<1x1x1x16x128xf32>,
    %cst_54 = arith.constant 2.500000e-01 : f32
    %47 = vector.broadcast %cst_54 : f32 to vector<16x128xf32>
    %48 = arith.mulf %41#1, %47 : vector<16x128xf32>
    %c0_55 = arith.constant 0 : index
    %c1_56 = arith.constant 1 : index
    %c3_57 = arith.constant 3 : index
    %c0_58 = arith.constant 0 : index
    %c0_59 = arith.constant 0 : index
    %49 = vector.load %arg6[%c0_55, %c1_56, %c3_57, %c0_58, %c0_59] : memref<1x2x16x16x128xf32, #tpu.memory_space<vmem>>, vector<1x1x1x16x128xf32>
    %50 = vector.shape_cast %49 : vector<1x1x1x16x128xf32> to vector<16x128xf32>
    %51 = vector.shape_cast %48 : vector<16x128xf32> to vector<1x1x1x16x128xf32>
    tpu.vector_store %arg6[%c0_55, %c1_56, %c3_57, %c0_58, %c0_59], %51 {strides = array<i32>} : memref<1x2x16x16x128xf32, #tpu.memory_space<vmem>>, vector<1x1x1x16x128xf32>,
    %cst_60 = arith.constant 0.000000e+00 : f32
    %52 = vector.broadcast %cst_60 : f32 to vector<16x128xf32>
    %c0_i32_61 = arith.constant 0 : i32
    %c2_i32_62 = arith.constant 2 : i32
    %53 = arith.addi %c0_i32_61, %c2_i32_62 : i32
    %c1_i32_63 = arith.constant 1 : i32
    %54:2 = scf.for %arg7 = %c0_i32_61 to %53 step %c1_i32_63 iter_args(%arg8 = %52, %arg9 = %52) -> (vector<16x128xf32>, vector<16x128xf32>)  : i32 {
      %c2_i32_252 = arith.constant 2 : i32
      %208 = arith.muli %arg7, %c2_i32_252 : i32
      %c0_i32_253 = arith.constant 0 : i32
      %209 = arith.addi %208, %c0_i32_253 : i32
      %c0_254 = arith.constant 0 : index
      %210 = arith.index_cast %209 : i32 to index
      %c0_255 = arith.constant 0 : index
      %c0_256 = arith.constant 0 : index
      %211 = vector.load %arg3[%c0_254, %210, %c0_255, %c0_256] : memref<1x4x16x128xf32, #tpu.memory_space<vmem>>, vector<1x1x16x128xf32>
      %212 = vector.shape_cast %211 : vector<1x1x16x128xf32> to vector<16x128xf32>
      %c0_257 = arith.constant 0 : index
      %213 = arith.index_cast %209 : i32 to index
      %c0_258 = arith.constant 0 : index
      %c0_259 = arith.constant 0 : index
      %214 = vector.load %arg4[%c0_257, %213, %c0_258, %c0_259] : memref<1x4x16x256xf32, #tpu.memory_space<vmem>>, vector<1x1x16x256xf32>
      %215 = vector.shape_cast %214 : vector<1x1x16x256xf32> to vector<16x256xf32>
      %c132_i32 = arith.constant 132 : i32
      %216 = tpu.dynamic_rotate %215 by %c132_i32 dim 1 : vector<16x256xf32>, i32 -> vector<16x256xf32>
      %217 = vector.extract_strided_slice %216 {offsets = [0, 0], sizes = [16, 128], strides = [1, 1]} : vector<16x256xf32> to vector<16x128xf32>
      %c0_260 = arith.constant 0 : index
      %218 = arith.index_cast %209 : i32 to index
      %c0_261 = arith.constant 0 : index
      %c0_262 = arith.constant 0 : index
      %219 = vector.load %arg5[%c0_260, %218, %c0_261, %c0_262] : memref<1x4x16x256xf32, #tpu.memory_space<vmem>>, vector<1x1x16x256xf32>
      %220 = vector.shape_cast %219 : vector<1x1x16x256xf32> to vector<16x256xf32>
      %c132_i32_263 = arith.constant 132 : i32
      %221 = tpu.dynamic_rotate %220 by %c132_i32_263 dim 1 : vector<16x256xf32>, i32 -> vector<16x256xf32>
      %222 = vector.extract_strided_slice %221 {offsets = [0, 0], sizes = [16, 128], strides = [1, 1]} : vector<16x256xf32> to vector<16x128xf32>
      %223 = arith.mulf %212, %217 : vector<16x128xf32>
      %224 = arith.addf %arg8, %223 : vector<16x128xf32>
      %225 = arith.mulf %212, %222 : vector<16x128xf32>
      %226 = arith.addf %arg9, %225 : vector<16x128xf32>
      %c2_i32_264 = arith.constant 2 : i32
      %227 = arith.muli %arg7, %c2_i32_264 : i32
      %c1_i32_265 = arith.constant 1 : i32
      %228 = arith.addi %227, %c1_i32_265 : i32
      %c0_266 = arith.constant 0 : index
      %229 = arith.index_cast %228 : i32 to index
      %c0_267 = arith.constant 0 : index
      %c0_268 = arith.constant 0 : index
      %230 = vector.load %arg3[%c0_266, %229, %c0_267, %c0_268] : memref<1x4x16x128xf32, #tpu.memory_space<vmem>>, vector<1x1x16x128xf32>
      %231 = vector.shape_cast %230 : vector<1x1x16x128xf32> to vector<16x128xf32>
      %c0_269 = arith.constant 0 : index
      %232 = arith.index_cast %228 : i32 to index
      %c0_270 = arith.constant 0 : index
      %c0_271 = arith.constant 0 : index
      %233 = vector.load %arg4[%c0_269, %232, %c0_270, %c0_271] : memref<1x4x16x256xf32, #tpu.memory_space<vmem>>, vector<1x1x16x256xf32>
      %234 = vector.shape_cast %233 : vector<1x1x16x256xf32> to vector<16x256xf32>
      %c132_i32_272 = arith.constant 132 : i32
      %235 = tpu.dynamic_rotate %234 by %c132_i32_272 dim 1 : vector<16x256xf32>, i32 -> vector<16x256xf32>
      %236 = vector.extract_strided_slice %235 {offsets = [0, 0], sizes = [16, 128], strides = [1, 1]} : vector<16x256xf32> to vector<16x128xf32>
      %c0_273 = arith.constant 0 : index
      %237 = arith.index_cast %228 : i32 to index
      %c0_274 = arith.constant 0 : index
      %c0_275 = arith.constant 0 : index
      %238 = vector.load %arg5[%c0_273, %237, %c0_274, %c0_275] : memref<1x4x16x256xf32, #tpu.memory_space<vmem>>, vector<1x1x16x256xf32>
      %239 = vector.shape_cast %238 : vector<1x1x16x256xf32> to vector<16x256xf32>
      %c132_i32_276 = arith.constant 132 : i32
      %240 = tpu.dynamic_rotate %239 by %c132_i32_276 dim 1 : vector<16x256xf32>, i32 -> vector<16x256xf32>
      %241 = vector.extract_strided_slice %240 {offsets = [0, 0], sizes = [16, 128], strides = [1, 1]} : vector<16x256xf32> to vector<16x128xf32>
      %242 = arith.mulf %231, %236 : vector<16x128xf32>
      %243 = arith.addf %224, %242 : vector<16x128xf32>
      %244 = arith.mulf %231, %241 : vector<16x128xf32>
      %245 = arith.addf %226, %244 : vector<16x128xf32>
      scf.yield %243, %245 : vector<16x128xf32>, vector<16x128xf32>
    }
    %c2_i32_64 = arith.constant 2 : i32
    %cst_65 = arith.constant 2.500000e-01 : f32
    %55 = vector.broadcast %cst_65 : f32 to vector<16x128xf32>
    %56 = arith.mulf %54#0, %55 : vector<16x128xf32>
    %c0_66 = arith.constant 0 : index
    %c0_67 = arith.constant 0 : index
    %c4 = arith.constant 4 : index
    %c0_68 = arith.constant 0 : index
    %c0_69 = arith.constant 0 : index
    %57 = vector.load %arg6[%c0_66, %c0_67, %c4, %c0_68, %c0_69] : memref<1x2x16x16x128xf32, #tpu.memory_space<vmem>>, vector<1x1x1x16x128xf32>
    %58 = vector.shape_cast %57 : vector<1x1x1x16x128xf32> to vector<16x128xf32>
    %59 = vector.shape_cast %56 : vector<16x128xf32> to vector<1x1x1x16x128xf32>
    tpu.vector_store %arg6[%c0_66, %c0_67, %c4, %c0_68, %c0_69], %59 {strides = array<i32>} : memref<1x2x16x16x128xf32, #tpu.memory_space<vmem>>, vector<1x1x1x16x128xf32>,
    %cst_70 = arith.constant 2.500000e-01 : f32
    %60 = vector.broadcast %cst_70 : f32 to vector<16x128xf32>
    %61 = arith.mulf %54#1, %60 : vector<16x128xf32>
    %c0_71 = arith.constant 0 : index
    %c1_72 = arith.constant 1 : index
    %c4_73 = arith.constant 4 : index
    %c0_74 = arith.constant 0 : index
    %c0_75 = arith.constant 0 : index
    %62 = vector.load %arg6[%c0_71, %c1_72, %c4_73, %c0_74, %c0_75] : memref<1x2x16x16x128xf32, #tpu.memory_space<vmem>>, vector<1x1x1x16x128xf32>
    %63 = vector.shape_cast %62 : vector<1x1x1x16x128xf32> to vector<16x128xf32>
    %64 = vector.shape_cast %61 : vector<16x128xf32> to vector<1x1x1x16x128xf32>
    tpu.vector_store %arg6[%c0_71, %c1_72, %c4_73, %c0_74, %c0_75], %64 {strides = array<i32>} : memref<1x2x16x16x128xf32, #tpu.memory_space<vmem>>, vector<1x1x1x16x128xf32>,
    %cst_76 = arith.constant 0.000000e+00 : f32
    %65 = vector.broadcast %cst_76 : f32 to vector<16x128xf32>
    %c0_i32_77 = arith.constant 0 : i32
    %c2_i32_78 = arith.constant 2 : i32
    %66 = arith.addi %c0_i32_77, %c2_i32_78 : i32
    %c1_i32_79 = arith.constant 1 : i32
    %67:2 = scf.for %arg7 = %c0_i32_77 to %66 step %c1_i32_79 iter_args(%arg8 = %65, %arg9 = %65) -> (vector<16x128xf32>, vector<16x128xf32>)  : i32 {
      %c2_i32_252 = arith.constant 2 : i32
      %208 = arith.muli %arg7, %c2_i32_252 : i32
      %c0_i32_253 = arith.constant 0 : i32
      %209 = arith.addi %208, %c0_i32_253 : i32
      %c0_254 = arith.constant 0 : index
      %210 = arith.index_cast %209 : i32 to index
      %c0_255 = arith.constant 0 : index
      %c0_256 = arith.constant 0 : index
      %211 = vector.load %arg3[%c0_254, %210, %c0_255, %c0_256] : memref<1x4x16x128xf32, #tpu.memory_space<vmem>>, vector<1x1x16x128xf32>
      %212 = vector.shape_cast %211 : vector<1x1x16x128xf32> to vector<16x128xf32>
      %c0_257 = arith.constant 0 : index
      %213 = arith.index_cast %209 : i32 to index
      %c0_258 = arith.constant 0 : index
      %c0_259 = arith.constant 0 : index
      %214 = vector.load %arg4[%c0_257, %213, %c0_258, %c0_259] : memref<1x4x16x256xf32, #tpu.memory_space<vmem>>, vector<1x1x16x256xf32>
      %215 = vector.shape_cast %214 : vector<1x1x16x256xf32> to vector<16x256xf32>
      %c133_i32 = arith.constant 133 : i32
      %216 = tpu.dynamic_rotate %215 by %c133_i32 dim 1 : vector<16x256xf32>, i32 -> vector<16x256xf32>
      %217 = vector.extract_strided_slice %216 {offsets = [0, 0], sizes = [16, 128], strides = [1, 1]} : vector<16x256xf32> to vector<16x128xf32>
      %c0_260 = arith.constant 0 : index
      %218 = arith.index_cast %209 : i32 to index
      %c0_261 = arith.constant 0 : index
      %c0_262 = arith.constant 0 : index
      %219 = vector.load %arg5[%c0_260, %218, %c0_261, %c0_262] : memref<1x4x16x256xf32, #tpu.memory_space<vmem>>, vector<1x1x16x256xf32>
      %220 = vector.shape_cast %219 : vector<1x1x16x256xf32> to vector<16x256xf32>
      %c133_i32_263 = arith.constant 133 : i32
      %221 = tpu.dynamic_rotate %220 by %c133_i32_263 dim 1 : vector<16x256xf32>, i32 -> vector<16x256xf32>
      %222 = vector.extract_strided_slice %221 {offsets = [0, 0], sizes = [16, 128], strides = [1, 1]} : vector<16x256xf32> to vector<16x128xf32>
      %223 = arith.mulf %212, %217 : vector<16x128xf32>
      %224 = arith.addf %arg8, %223 : vector<16x128xf32>
      %225 = arith.mulf %212, %222 : vector<16x128xf32>
      %226 = arith.addf %arg9, %225 : vector<16x128xf32>
      %c2_i32_264 = arith.constant 2 : i32
      %227 = arith.muli %arg7, %c2_i32_264 : i32
      %c1_i32_265 = arith.constant 1 : i32
      %228 = arith.addi %227, %c1_i32_265 : i32
      %c0_266 = arith.constant 0 : index
      %229 = arith.index_cast %228 : i32 to index
      %c0_267 = arith.constant 0 : index
      %c0_268 = arith.constant 0 : index
      %230 = vector.load %arg3[%c0_266, %229, %c0_267, %c0_268] : memref<1x4x16x128xf32, #tpu.memory_space<vmem>>, vector<1x1x16x128xf32>
      %231 = vector.shape_cast %230 : vector<1x1x16x128xf32> to vector<16x128xf32>
      %c0_269 = arith.constant 0 : index
      %232 = arith.index_cast %228 : i32 to index
      %c0_270 = arith.constant 0 : index
      %c0_271 = arith.constant 0 : index
      %233 = vector.load %arg4[%c0_269, %232, %c0_270, %c0_271] : memref<1x4x16x256xf32, #tpu.memory_space<vmem>>, vector<1x1x16x256xf32>
      %234 = vector.shape_cast %233 : vector<1x1x16x256xf32> to vector<16x256xf32>
      %c133_i32_272 = arith.constant 133 : i32
      %235 = tpu.dynamic_rotate %234 by %c133_i32_272 dim 1 : vector<16x256xf32>, i32 -> vector<16x256xf32>
      %236 = vector.extract_strided_slice %235 {offsets = [0, 0], sizes = [16, 128], strides = [1, 1]} : vector<16x256xf32> to vector<16x128xf32>
      %c0_273 = arith.constant 0 : index
      %237 = arith.index_cast %228 : i32 to index
      %c0_274 = arith.constant 0 : index
      %c0_275 = arith.constant 0 : index
      %238 = vector.load %arg5[%c0_273, %237, %c0_274, %c0_275] : memref<1x4x16x256xf32, #tpu.memory_space<vmem>>, vector<1x1x16x256xf32>
      %239 = vector.shape_cast %238 : vector<1x1x16x256xf32> to vector<16x256xf32>
      %c133_i32_276 = arith.constant 133 : i32
      %240 = tpu.dynamic_rotate %239 by %c133_i32_276 dim 1 : vector<16x256xf32>, i32 -> vector<16x256xf32>
      %241 = vector.extract_strided_slice %240 {offsets = [0, 0], sizes = [16, 128], strides = [1, 1]} : vector<16x256xf32> to vector<16x128xf32>
      %242 = arith.mulf %231, %236 : vector<16x128xf32>
      %243 = arith.addf %224, %242 : vector<16x128xf32>
      %244 = arith.mulf %231, %241 : vector<16x128xf32>
      %245 = arith.addf %226, %244 : vector<16x128xf32>
      scf.yield %243, %245 : vector<16x128xf32>, vector<16x128xf32>
    }
    %c2_i32_80 = arith.constant 2 : i32
    %cst_81 = arith.constant 2.500000e-01 : f32
    %68 = vector.broadcast %cst_81 : f32 to vector<16x128xf32>
    %69 = arith.mulf %67#0, %68 : vector<16x128xf32>
    %c0_82 = arith.constant 0 : index
    %c0_83 = arith.constant 0 : index
    %c5 = arith.constant 5 : index
    %c0_84 = arith.constant 0 : index
    %c0_85 = arith.constant 0 : index
    %70 = vector.load %arg6[%c0_82, %c0_83, %c5, %c0_84, %c0_85] : memref<1x2x16x16x128xf32, #tpu.memory_space<vmem>>, vector<1x1x1x16x128xf32>
    %71 = vector.shape_cast %70 : vector<1x1x1x16x128xf32> to vector<16x128xf32>
    %72 = vector.shape_cast %69 : vector<16x128xf32> to vector<1x1x1x16x128xf32>
    tpu.vector_store %arg6[%c0_82, %c0_83, %c5, %c0_84, %c0_85], %72 {strides = array<i32>} : memref<1x2x16x16x128xf32, #tpu.memory_space<vmem>>, vector<1x1x1x16x128xf32>,
    %cst_86 = arith.constant 2.500000e-01 : f32
    %73 = vector.broadcast %cst_86 : f32 to vector<16x128xf32>
    %74 = arith.mulf %67#1, %73 : vector<16x128xf32>
    %c0_87 = arith.constant 0 : index
    %c1_88 = arith.constant 1 : index
    %c5_89 = arith.constant 5 : index
    %c0_90 = arith.constant 0 : index
    %c0_91 = arith.constant 0 : index
    %75 = vector.load %arg6[%c0_87, %c1_88, %c5_89, %c0_90, %c0_91] : memref<1x2x16x16x128xf32, #tpu.memory_space<vmem>>, vector<1x1x1x16x128xf32>
    %76 = vector.shape_cast %75 : vector<1x1x1x16x128xf32> to vector<16x128xf32>
    %77 = vector.shape_cast %74 : vector<16x128xf32> to vector<1x1x1x16x128xf32>
    tpu.vector_store %arg6[%c0_87, %c1_88, %c5_89, %c0_90, %c0_91], %77 {strides = array<i32>} : memref<1x2x16x16x128xf32, #tpu.memory_space<vmem>>, vector<1x1x1x16x128xf32>,
    %cst_92 = arith.constant 0.000000e+00 : f32
    %78 = vector.broadcast %cst_92 : f32 to vector<16x128xf32>
    %c0_i32_93 = arith.constant 0 : i32
    %c2_i32_94 = arith.constant 2 : i32
    %79 = arith.addi %c0_i32_93, %c2_i32_94 : i32
    %c1_i32_95 = arith.constant 1 : i32
    %80:2 = scf.for %arg7 = %c0_i32_93 to %79 step %c1_i32_95 iter_args(%arg8 = %78, %arg9 = %78) -> (vector<16x128xf32>, vector<16x128xf32>)  : i32 {
      %c2_i32_252 = arith.constant 2 : i32
      %208 = arith.muli %arg7, %c2_i32_252 : i32
      %c0_i32_253 = arith.constant 0 : i32
      %209 = arith.addi %208, %c0_i32_253 : i32
      %c0_254 = arith.constant 0 : index
      %210 = arith.index_cast %209 : i32 to index
      %c0_255 = arith.constant 0 : index
      %c0_256 = arith.constant 0 : index
      %211 = vector.load %arg3[%c0_254, %210, %c0_255, %c0_256] : memref<1x4x16x128xf32, #tpu.memory_space<vmem>>, vector<1x1x16x128xf32>
      %212 = vector.shape_cast %211 : vector<1x1x16x128xf32> to vector<16x128xf32>
      %c0_257 = arith.constant 0 : index
      %213 = arith.index_cast %209 : i32 to index
      %c0_258 = arith.constant 0 : index
      %c0_259 = arith.constant 0 : index
      %214 = vector.load %arg4[%c0_257, %213, %c0_258, %c0_259] : memref<1x4x16x256xf32, #tpu.memory_space<vmem>>, vector<1x1x16x256xf32>
      %215 = vector.shape_cast %214 : vector<1x1x16x256xf32> to vector<16x256xf32>
      %c134_i32 = arith.constant 134 : i32
      %216 = tpu.dynamic_rotate %215 by %c134_i32 dim 1 : vector<16x256xf32>, i32 -> vector<16x256xf32>
      %217 = vector.extract_strided_slice %216 {offsets = [0, 0], sizes = [16, 128], strides = [1, 1]} : vector<16x256xf32> to vector<16x128xf32>
      %c0_260 = arith.constant 0 : index
      %218 = arith.index_cast %209 : i32 to index
      %c0_261 = arith.constant 0 : index
      %c0_262 = arith.constant 0 : index
      %219 = vector.load %arg5[%c0_260, %218, %c0_261, %c0_262] : memref<1x4x16x256xf32, #tpu.memory_space<vmem>>, vector<1x1x16x256xf32>
      %220 = vector.shape_cast %219 : vector<1x1x16x256xf32> to vector<16x256xf32>
      %c134_i32_263 = arith.constant 134 : i32
      %221 = tpu.dynamic_rotate %220 by %c134_i32_263 dim 1 : vector<16x256xf32>, i32 -> vector<16x256xf32>
      %222 = vector.extract_strided_slice %221 {offsets = [0, 0], sizes = [16, 128], strides = [1, 1]} : vector<16x256xf32> to vector<16x128xf32>
      %223 = arith.mulf %212, %217 : vector<16x128xf32>
      %224 = arith.addf %arg8, %223 : vector<16x128xf32>
      %225 = arith.mulf %212, %222 : vector<16x128xf32>
      %226 = arith.addf %arg9, %225 : vector<16x128xf32>
      %c2_i32_264 = arith.constant 2 : i32
      %227 = arith.muli %arg7, %c2_i32_264 : i32
      %c1_i32_265 = arith.constant 1 : i32
      %228 = arith.addi %227, %c1_i32_265 : i32
      %c0_266 = arith.constant 0 : index
      %229 = arith.index_cast %228 : i32 to index
      %c0_267 = arith.constant 0 : index
      %c0_268 = arith.constant 0 : index
      %230 = vector.load %arg3[%c0_266, %229, %c0_267, %c0_268] : memref<1x4x16x128xf32, #tpu.memory_space<vmem>>, vector<1x1x16x128xf32>
      %231 = vector.shape_cast %230 : vector<1x1x16x128xf32> to vector<16x128xf32>
      %c0_269 = arith.constant 0 : index
      %232 = arith.index_cast %228 : i32 to index
      %c0_270 = arith.constant 0 : index
      %c0_271 = arith.constant 0 : index
      %233 = vector.load %arg4[%c0_269, %232, %c0_270, %c0_271] : memref<1x4x16x256xf32, #tpu.memory_space<vmem>>, vector<1x1x16x256xf32>
      %234 = vector.shape_cast %233 : vector<1x1x16x256xf32> to vector<16x256xf32>
      %c134_i32_272 = arith.constant 134 : i32
      %235 = tpu.dynamic_rotate %234 by %c134_i32_272 dim 1 : vector<16x256xf32>, i32 -> vector<16x256xf32>
      %236 = vector.extract_strided_slice %235 {offsets = [0, 0], sizes = [16, 128], strides = [1, 1]} : vector<16x256xf32> to vector<16x128xf32>
      %c0_273 = arith.constant 0 : index
      %237 = arith.index_cast %228 : i32 to index
      %c0_274 = arith.constant 0 : index
      %c0_275 = arith.constant 0 : index
      %238 = vector.load %arg5[%c0_273, %237, %c0_274, %c0_275] : memref<1x4x16x256xf32, #tpu.memory_space<vmem>>, vector<1x1x16x256xf32>
      %239 = vector.shape_cast %238 : vector<1x1x16x256xf32> to vector<16x256xf32>
      %c134_i32_276 = arith.constant 134 : i32
      %240 = tpu.dynamic_rotate %239 by %c134_i32_276 dim 1 : vector<16x256xf32>, i32 -> vector<16x256xf32>
      %241 = vector.extract_strided_slice %240 {offsets = [0, 0], sizes = [16, 128], strides = [1, 1]} : vector<16x256xf32> to vector<16x128xf32>
      %242 = arith.mulf %231, %236 : vector<16x128xf32>
      %243 = arith.addf %224, %242 : vector<16x128xf32>
      %244 = arith.mulf %231, %241 : vector<16x128xf32>
      %245 = arith.addf %226, %244 : vector<16x128xf32>
      scf.yield %243, %245 : vector<16x128xf32>, vector<16x128xf32>
    }
    %c2_i32_96 = arith.constant 2 : i32
    %cst_97 = arith.constant 2.500000e-01 : f32
    %81 = vector.broadcast %cst_97 : f32 to vector<16x128xf32>
    %82 = arith.mulf %80#0, %81 : vector<16x128xf32>
    %c0_98 = arith.constant 0 : index
    %c0_99 = arith.constant 0 : index
    %c6 = arith.constant 6 : index
    %c0_100 = arith.constant 0 : index
    %c0_101 = arith.constant 0 : index
    %83 = vector.load %arg6[%c0_98, %c0_99, %c6, %c0_100, %c0_101] : memref<1x2x16x16x128xf32, #tpu.memory_space<vmem>>, vector<1x1x1x16x128xf32>
    %84 = vector.shape_cast %83 : vector<1x1x1x16x128xf32> to vector<16x128xf32>
    %85 = vector.shape_cast %82 : vector<16x128xf32> to vector<1x1x1x16x128xf32>
    tpu.vector_store %arg6[%c0_98, %c0_99, %c6, %c0_100, %c0_101], %85 {strides = array<i32>} : memref<1x2x16x16x128xf32, #tpu.memory_space<vmem>>, vector<1x1x1x16x128xf32>,
    %cst_102 = arith.constant 2.500000e-01 : f32
    %86 = vector.broadcast %cst_102 : f32 to vector<16x128xf32>
    %87 = arith.mulf %80#1, %86 : vector<16x128xf32>
    %c0_103 = arith.constant 0 : index
    %c1_104 = arith.constant 1 : index
    %c6_105 = arith.constant 6 : index
    %c0_106 = arith.constant 0 : index
    %c0_107 = arith.constant 0 : index
    %88 = vector.load %arg6[%c0_103, %c1_104, %c6_105, %c0_106, %c0_107] : memref<1x2x16x16x128xf32, #tpu.memory_space<vmem>>, vector<1x1x1x16x128xf32>
    %89 = vector.shape_cast %88 : vector<1x1x1x16x128xf32> to vector<16x128xf32>
    %90 = vector.shape_cast %87 : vector<16x128xf32> to vector<1x1x1x16x128xf32>
    tpu.vector_store %arg6[%c0_103, %c1_104, %c6_105, %c0_106, %c0_107], %90 {strides = array<i32>} : memref<1x2x16x16x128xf32, #tpu.memory_space<vmem>>, vector<1x1x1x16x128xf32>,
    %cst_108 = arith.constant 0.000000e+00 : f32
    %91 = vector.broadcast %cst_108 : f32 to vector<16x128xf32>
    %c0_i32_109 = arith.constant 0 : i32
    %c2_i32_110 = arith.constant 2 : i32
    %92 = arith.addi %c0_i32_109, %c2_i32_110 : i32
    %c1_i32_111 = arith.constant 1 : i32
    %93:2 = scf.for %arg7 = %c0_i32_109 to %92 step %c1_i32_111 iter_args(%arg8 = %91, %arg9 = %91) -> (vector<16x128xf32>, vector<16x128xf32>)  : i32 {
      %c2_i32_252 = arith.constant 2 : i32
      %208 = arith.muli %arg7, %c2_i32_252 : i32
      %c0_i32_253 = arith.constant 0 : i32
      %209 = arith.addi %208, %c0_i32_253 : i32
      %c0_254 = arith.constant 0 : index
      %210 = arith.index_cast %209 : i32 to index
      %c0_255 = arith.constant 0 : index
      %c0_256 = arith.constant 0 : index
      %211 = vector.load %arg3[%c0_254, %210, %c0_255, %c0_256] : memref<1x4x16x128xf32, #tpu.memory_space<vmem>>, vector<1x1x16x128xf32>
      %212 = vector.shape_cast %211 : vector<1x1x16x128xf32> to vector<16x128xf32>
      %c0_257 = arith.constant 0 : index
      %213 = arith.index_cast %209 : i32 to index
      %c0_258 = arith.constant 0 : index
      %c0_259 = arith.constant 0 : index
      %214 = vector.load %arg4[%c0_257, %213, %c0_258, %c0_259] : memref<1x4x16x256xf32, #tpu.memory_space<vmem>>, vector<1x1x16x256xf32>
      %215 = vector.shape_cast %214 : vector<1x1x16x256xf32> to vector<16x256xf32>
      %c135_i32 = arith.constant 135 : i32
      %216 = tpu.dynamic_rotate %215 by %c135_i32 dim 1 : vector<16x256xf32>, i32 -> vector<16x256xf32>
      %217 = vector.extract_strided_slice %216 {offsets = [0, 0], sizes = [16, 128], strides = [1, 1]} : vector<16x256xf32> to vector<16x128xf32>
      %c0_260 = arith.constant 0 : index
      %218 = arith.index_cast %209 : i32 to index
      %c0_261 = arith.constant 0 : index
      %c0_262 = arith.constant 0 : index
      %219 = vector.load %arg5[%c0_260, %218, %c0_261, %c0_262] : memref<1x4x16x256xf32, #tpu.memory_space<vmem>>, vector<1x1x16x256xf32>
      %220 = vector.shape_cast %219 : vector<1x1x16x256xf32> to vector<16x256xf32>
      %c135_i32_263 = arith.constant 135 : i32
      %221 = tpu.dynamic_rotate %220 by %c135_i32_263 dim 1 : vector<16x256xf32>, i32 -> vector<16x256xf32>
      %222 = vector.extract_strided_slice %221 {offsets = [0, 0], sizes = [16, 128], strides = [1, 1]} : vector<16x256xf32> to vector<16x128xf32>
      %223 = arith.mulf %212, %217 : vector<16x128xf32>
      %224 = arith.addf %arg8, %223 : vector<16x128xf32>
      %225 = arith.mulf %212, %222 : vector<16x128xf32>
      %226 = arith.addf %arg9, %225 : vector<16x128xf32>
      %c2_i32_264 = arith.constant 2 : i32
      %227 = arith.muli %arg7, %c2_i32_264 : i32
      %c1_i32_265 = arith.constant 1 : i32
      %228 = arith.addi %227, %c1_i32_265 : i32
      %c0_266 = arith.constant 0 : index
      %229 = arith.index_cast %228 : i32 to index
      %c0_267 = arith.constant 0 : index
      %c0_268 = arith.constant 0 : index
      %230 = vector.load %arg3[%c0_266, %229, %c0_267, %c0_268] : memref<1x4x16x128xf32, #tpu.memory_space<vmem>>, vector<1x1x16x128xf32>
      %231 = vector.shape_cast %230 : vector<1x1x16x128xf32> to vector<16x128xf32>
      %c0_269 = arith.constant 0 : index
      %232 = arith.index_cast %228 : i32 to index
      %c0_270 = arith.constant 0 : index
      %c0_271 = arith.constant 0 : index
      %233 = vector.load %arg4[%c0_269, %232, %c0_270, %c0_271] : memref<1x4x16x256xf32, #tpu.memory_space<vmem>>, vector<1x1x16x256xf32>
      %234 = vector.shape_cast %233 : vector<1x1x16x256xf32> to vector<16x256xf32>
      %c135_i32_272 = arith.constant 135 : i32
      %235 = tpu.dynamic_rotate %234 by %c135_i32_272 dim 1 : vector<16x256xf32>, i32 -> vector<16x256xf32>
      %236 = vector.extract_strided_slice %235 {offsets = [0, 0], sizes = [16, 128], strides = [1, 1]} : vector<16x256xf32> to vector<16x128xf32>
      %c0_273 = arith.constant 0 : index
      %237 = arith.index_cast %228 : i32 to index
      %c0_274 = arith.constant 0 : index
      %c0_275 = arith.constant 0 : index
      %238 = vector.load %arg5[%c0_273, %237, %c0_274, %c0_275] : memref<1x4x16x256xf32, #tpu.memory_space<vmem>>, vector<1x1x16x256xf32>
      %239 = vector.shape_cast %238 : vector<1x1x16x256xf32> to vector<16x256xf32>
      %c135_i32_276 = arith.constant 135 : i32
      %240 = tpu.dynamic_rotate %239 by %c135_i32_276 dim 1 : vector<16x256xf32>, i32 -> vector<16x256xf32>
      %241 = vector.extract_strided_slice %240 {offsets = [0, 0], sizes = [16, 128], strides = [1, 1]} : vector<16x256xf32> to vector<16x128xf32>
      %242 = arith.mulf %231, %236 : vector<16x128xf32>
      %243 = arith.addf %224, %242 : vector<16x128xf32>
      %244 = arith.mulf %231, %241 : vector<16x128xf32>
      %245 = arith.addf %226, %244 : vector<16x128xf32>
      scf.yield %243, %245 : vector<16x128xf32>, vector<16x128xf32>
    }
    %c2_i32_112 = arith.constant 2 : i32
    %cst_113 = arith.constant 2.500000e-01 : f32
    %94 = vector.broadcast %cst_113 : f32 to vector<16x128xf32>
    %95 = arith.mulf %93#0, %94 : vector<16x128xf32>
    %c0_114 = arith.constant 0 : index
    %c0_115 = arith.constant 0 : index
    %c7 = arith.constant 7 : index
    %c0_116 = arith.constant 0 : index
    %c0_117 = arith.constant 0 : index
    %96 = vector.load %arg6[%c0_114, %c0_115, %c7, %c0_116, %c0_117] : memref<1x2x16x16x128xf32, #tpu.memory_space<vmem>>, vector<1x1x1x16x128xf32>
    %97 = vector.shape_cast %96 : vector<1x1x1x16x128xf32> to vector<16x128xf32>
    %98 = vector.shape_cast %95 : vector<16x128xf32> to vector<1x1x1x16x128xf32>
    tpu.vector_store %arg6[%c0_114, %c0_115, %c7, %c0_116, %c0_117], %98 {strides = array<i32>} : memref<1x2x16x16x128xf32, #tpu.memory_space<vmem>>, vector<1x1x1x16x128xf32>,
    %cst_118 = arith.constant 2.500000e-01 : f32
    %99 = vector.broadcast %cst_118 : f32 to vector<16x128xf32>
    %100 = arith.mulf %93#1, %99 : vector<16x128xf32>
    %c0_119 = arith.constant 0 : index
    %c1_120 = arith.constant 1 : index
    %c7_121 = arith.constant 7 : index
    %c0_122 = arith.constant 0 : index
    %c0_123 = arith.constant 0 : index
    %101 = vector.load %arg6[%c0_119, %c1_120, %c7_121, %c0_122, %c0_123] : memref<1x2x16x16x128xf32, #tpu.memory_space<vmem>>, vector<1x1x1x16x128xf32>
    %102 = vector.shape_cast %101 : vector<1x1x1x16x128xf32> to vector<16x128xf32>
    %103 = vector.shape_cast %100 : vector<16x128xf32> to vector<1x1x1x16x128xf32>
    tpu.vector_store %arg6[%c0_119, %c1_120, %c7_121, %c0_122, %c0_123], %103 {strides = array<i32>} : memref<1x2x16x16x128xf32, #tpu.memory_space<vmem>>, vector<1x1x1x16x128xf32>,
    %cst_124 = arith.constant 0.000000e+00 : f32
    %104 = vector.broadcast %cst_124 : f32 to vector<16x128xf32>
    %c0_i32_125 = arith.constant 0 : i32
    %c2_i32_126 = arith.constant 2 : i32
    %105 = arith.addi %c0_i32_125, %c2_i32_126 : i32
    %c1_i32_127 = arith.constant 1 : i32
    %106:2 = scf.for %arg7 = %c0_i32_125 to %105 step %c1_i32_127 iter_args(%arg8 = %104, %arg9 = %104) -> (vector<16x128xf32>, vector<16x128xf32>)  : i32 {
      %c2_i32_252 = arith.constant 2 : i32
      %208 = arith.muli %arg7, %c2_i32_252 : i32
      %c0_i32_253 = arith.constant 0 : i32
      %209 = arith.addi %208, %c0_i32_253 : i32
      %c0_254 = arith.constant 0 : index
      %210 = arith.index_cast %209 : i32 to index
      %c0_255 = arith.constant 0 : index
      %c0_256 = arith.constant 0 : index
      %211 = vector.load %arg3[%c0_254, %210, %c0_255, %c0_256] : memref<1x4x16x128xf32, #tpu.memory_space<vmem>>, vector<1x1x16x128xf32>
      %212 = vector.shape_cast %211 : vector<1x1x16x128xf32> to vector<16x128xf32>
      %c0_257 = arith.constant 0 : index
      %213 = arith.index_cast %209 : i32 to index
      %c0_258 = arith.constant 0 : index
      %c0_259 = arith.constant 0 : index
      %214 = vector.load %arg4[%c0_257, %213, %c0_258, %c0_259] : memref<1x4x16x256xf32, #tpu.memory_space<vmem>>, vector<1x1x16x256xf32>
      %215 = vector.shape_cast %214 : vector<1x1x16x256xf32> to vector<16x256xf32>
      %c136_i32 = arith.constant 136 : i32
      %216 = tpu.dynamic_rotate %215 by %c136_i32 dim 1 : vector<16x256xf32>, i32 -> vector<16x256xf32>
      %217 = vector.extract_strided_slice %216 {offsets = [0, 0], sizes = [16, 128], strides = [1, 1]} : vector<16x256xf32> to vector<16x128xf32>
      %c0_260 = arith.constant 0 : index
      %218 = arith.index_cast %209 : i32 to index
      %c0_261 = arith.constant 0 : index
      %c0_262 = arith.constant 0 : index
      %219 = vector.load %arg5[%c0_260, %218, %c0_261, %c0_262] : memref<1x4x16x256xf32, #tpu.memory_space<vmem>>, vector<1x1x16x256xf32>
      %220 = vector.shape_cast %219 : vector<1x1x16x256xf32> to vector<16x256xf32>
      %c136_i32_263 = arith.constant 136 : i32
      %221 = tpu.dynamic_rotate %220 by %c136_i32_263 dim 1 : vector<16x256xf32>, i32 -> vector<16x256xf32>
      %222 = vector.extract_strided_slice %221 {offsets = [0, 0], sizes = [16, 128], strides = [1, 1]} : vector<16x256xf32> to vector<16x128xf32>
      %223 = arith.mulf %212, %217 : vector<16x128xf32>
      %224 = arith.addf %arg8, %223 : vector<16x128xf32>
      %225 = arith.mulf %212, %222 : vector<16x128xf32>
      %226 = arith.addf %arg9, %225 : vector<16x128xf32>
      %c2_i32_264 = arith.constant 2 : i32
      %227 = arith.muli %arg7, %c2_i32_264 : i32
      %c1_i32_265 = arith.constant 1 : i32
      %228 = arith.addi %227, %c1_i32_265 : i32
      %c0_266 = arith.constant 0 : index
      %229 = arith.index_cast %228 : i32 to index
      %c0_267 = arith.constant 0 : index
      %c0_268 = arith.constant 0 : index
      %230 = vector.load %arg3[%c0_266, %229, %c0_267, %c0_268] : memref<1x4x16x128xf32, #tpu.memory_space<vmem>>, vector<1x1x16x128xf32>
      %231 = vector.shape_cast %230 : vector<1x1x16x128xf32> to vector<16x128xf32>
      %c0_269 = arith.constant 0 : index
      %232 = arith.index_cast %228 : i32 to index
      %c0_270 = arith.constant 0 : index
      %c0_271 = arith.constant 0 : index
      %233 = vector.load %arg4[%c0_269, %232, %c0_270, %c0_271] : memref<1x4x16x256xf32, #tpu.memory_space<vmem>>, vector<1x1x16x256xf32>
      %234 = vector.shape_cast %233 : vector<1x1x16x256xf32> to vector<16x256xf32>
      %c136_i32_272 = arith.constant 136 : i32
      %235 = tpu.dynamic_rotate %234 by %c136_i32_272 dim 1 : vector<16x256xf32>, i32 -> vector<16x256xf32>
      %236 = vector.extract_strided_slice %235 {offsets = [0, 0], sizes = [16, 128], strides = [1, 1]} : vector<16x256xf32> to vector<16x128xf32>
      %c0_273 = arith.constant 0 : index
      %237 = arith.index_cast %228 : i32 to index
      %c0_274 = arith.constant 0 : index
      %c0_275 = arith.constant 0 : index
      %238 = vector.load %arg5[%c0_273, %237, %c0_274, %c0_275] : memref<1x4x16x256xf32, #tpu.memory_space<vmem>>, vector<1x1x16x256xf32>
      %239 = vector.shape_cast %238 : vector<1x1x16x256xf32> to vector<16x256xf32>
      %c136_i32_276 = arith.constant 136 : i32
      %240 = tpu.dynamic_rotate %239 by %c136_i32_276 dim 1 : vector<16x256xf32>, i32 -> vector<16x256xf32>
      %241 = vector.extract_strided_slice %240 {offsets = [0, 0], sizes = [16, 128], strides = [1, 1]} : vector<16x256xf32> to vector<16x128xf32>
      %242 = arith.mulf %231, %236 : vector<16x128xf32>
      %243 = arith.addf %224, %242 : vector<16x128xf32>
      %244 = arith.mulf %231, %241 : vector<16x128xf32>
      %245 = arith.addf %226, %244 : vector<16x128xf32>
      scf.yield %243, %245 : vector<16x128xf32>, vector<16x128xf32>
    }
    %c2_i32_128 = arith.constant 2 : i32
    %cst_129 = arith.constant 2.500000e-01 : f32
    %107 = vector.broadcast %cst_129 : f32 to vector<16x128xf32>
    %108 = arith.mulf %106#0, %107 : vector<16x128xf32>
    %c0_130 = arith.constant 0 : index
    %c0_131 = arith.constant 0 : index
    %c8 = arith.constant 8 : index
    %c0_132 = arith.constant 0 : index
    %c0_133 = arith.constant 0 : index
    %109 = vector.load %arg6[%c0_130, %c0_131, %c8, %c0_132, %c0_133] : memref<1x2x16x16x128xf32, #tpu.memory_space<vmem>>, vector<1x1x1x16x128xf32>
    %110 = vector.shape_cast %109 : vector<1x1x1x16x128xf32> to vector<16x128xf32>
    %111 = vector.shape_cast %108 : vector<16x128xf32> to vector<1x1x1x16x128xf32>
    tpu.vector_store %arg6[%c0_130, %c0_131, %c8, %c0_132, %c0_133], %111 {strides = array<i32>} : memref<1x2x16x16x128xf32, #tpu.memory_space<vmem>>, vector<1x1x1x16x128xf32>,
    %cst_134 = arith.constant 2.500000e-01 : f32
    %112 = vector.broadcast %cst_134 : f32 to vector<16x128xf32>
    %113 = arith.mulf %106#1, %112 : vector<16x128xf32>
    %c0_135 = arith.constant 0 : index
    %c1_136 = arith.constant 1 : index
    %c8_137 = arith.constant 8 : index
    %c0_138 = arith.constant 0 : index
    %c0_139 = arith.constant 0 : index
    %114 = vector.load %arg6[%c0_135, %c1_136, %c8_137, %c0_138, %c0_139] : memref<1x2x16x16x128xf32, #tpu.memory_space<vmem>>, vector<1x1x1x16x128xf32>
    %115 = vector.shape_cast %114 : vector<1x1x1x16x128xf32> to vector<16x128xf32>
    %116 = vector.shape_cast %113 : vector<16x128xf32> to vector<1x1x1x16x128xf32>
    tpu.vector_store %arg6[%c0_135, %c1_136, %c8_137, %c0_138, %c0_139], %116 {strides = array<i32>} : memref<1x2x16x16x128xf32, #tpu.memory_space<vmem>>, vector<1x1x1x16x128xf32>,
    %cst_140 = arith.constant 0.000000e+00 : f32
    %117 = vector.broadcast %cst_140 : f32 to vector<16x128xf32>
    %c0_i32_141 = arith.constant 0 : i32
    %c2_i32_142 = arith.constant 2 : i32
    %118 = arith.addi %c0_i32_141, %c2_i32_142 : i32
    %c1_i32_143 = arith.constant 1 : i32
    %119:2 = scf.for %arg7 = %c0_i32_141 to %118 step %c1_i32_143 iter_args(%arg8 = %117, %arg9 = %117) -> (vector<16x128xf32>, vector<16x128xf32>)  : i32 {
      %c2_i32_252 = arith.constant 2 : i32
      %208 = arith.muli %arg7, %c2_i32_252 : i32
      %c0_i32_253 = arith.constant 0 : i32
      %209 = arith.addi %208, %c0_i32_253 : i32
      %c0_254 = arith.constant 0 : index
      %210 = arith.index_cast %209 : i32 to index
      %c0_255 = arith.constant 0 : index
      %c0_256 = arith.constant 0 : index
      %211 = vector.load %arg3[%c0_254, %210, %c0_255, %c0_256] : memref<1x4x16x128xf32, #tpu.memory_space<vmem>>, vector<1x1x16x128xf32>
      %212 = vector.shape_cast %211 : vector<1x1x16x128xf32> to vector<16x128xf32>
      %c0_257 = arith.constant 0 : index
      %213 = arith.index_cast %209 : i32 to index
      %c0_258 = arith.constant 0 : index
      %c0_259 = arith.constant 0 : index
      %214 = vector.load %arg4[%c0_257, %213, %c0_258, %c0_259] : memref<1x4x16x256xf32, #tpu.memory_space<vmem>>, vector<1x1x16x256xf32>
      %215 = vector.shape_cast %214 : vector<1x1x16x256xf32> to vector<16x256xf32>
      %c137_i32 = arith.constant 137 : i32
      %216 = tpu.dynamic_rotate %215 by %c137_i32 dim 1 : vector<16x256xf32>, i32 -> vector<16x256xf32>
      %217 = vector.extract_strided_slice %216 {offsets = [0, 0], sizes = [16, 128], strides = [1, 1]} : vector<16x256xf32> to vector<16x128xf32>
      %c0_260 = arith.constant 0 : index
      %218 = arith.index_cast %209 : i32 to index
      %c0_261 = arith.constant 0 : index
      %c0_262 = arith.constant 0 : index
      %219 = vector.load %arg5[%c0_260, %218, %c0_261, %c0_262] : memref<1x4x16x256xf32, #tpu.memory_space<vmem>>, vector<1x1x16x256xf32>
      %220 = vector.shape_cast %219 : vector<1x1x16x256xf32> to vector<16x256xf32>
      %c137_i32_263 = arith.constant 137 : i32
      %221 = tpu.dynamic_rotate %220 by %c137_i32_263 dim 1 : vector<16x256xf32>, i32 -> vector<16x256xf32>
      %222 = vector.extract_strided_slice %221 {offsets = [0, 0], sizes = [16, 128], strides = [1, 1]} : vector<16x256xf32> to vector<16x128xf32>
      %223 = arith.mulf %212, %217 : vector<16x128xf32>
      %224 = arith.addf %arg8, %223 : vector<16x128xf32>
      %225 = arith.mulf %212, %222 : vector<16x128xf32>
      %226 = arith.addf %arg9, %225 : vector<16x128xf32>
      %c2_i32_264 = arith.constant 2 : i32
      %227 = arith.muli %arg7, %c2_i32_264 : i32
      %c1_i32_265 = arith.constant 1 : i32
      %228 = arith.addi %227, %c1_i32_265 : i32
      %c0_266 = arith.constant 0 : index
      %229 = arith.index_cast %228 : i32 to index
      %c0_267 = arith.constant 0 : index
      %c0_268 = arith.constant 0 : index
      %230 = vector.load %arg3[%c0_266, %229, %c0_267, %c0_268] : memref<1x4x16x128xf32, #tpu.memory_space<vmem>>, vector<1x1x16x128xf32>
      %231 = vector.shape_cast %230 : vector<1x1x16x128xf32> to vector<16x128xf32>
      %c0_269 = arith.constant 0 : index
      %232 = arith.index_cast %228 : i32 to index
      %c0_270 = arith.constant 0 : index
      %c0_271 = arith.constant 0 : index
      %233 = vector.load %arg4[%c0_269, %232, %c0_270, %c0_271] : memref<1x4x16x256xf32, #tpu.memory_space<vmem>>, vector<1x1x16x256xf32>
      %234 = vector.shape_cast %233 : vector<1x1x16x256xf32> to vector<16x256xf32>
      %c137_i32_272 = arith.constant 137 : i32
      %235 = tpu.dynamic_rotate %234 by %c137_i32_272 dim 1 : vector<16x256xf32>, i32 -> vector<16x256xf32>
      %236 = vector.extract_strided_slice %235 {offsets = [0, 0], sizes = [16, 128], strides = [1, 1]} : vector<16x256xf32> to vector<16x128xf32>
      %c0_273 = arith.constant 0 : index
      %237 = arith.index_cast %228 : i32 to index
      %c0_274 = arith.constant 0 : index
      %c0_275 = arith.constant 0 : index
      %238 = vector.load %arg5[%c0_273, %237, %c0_274, %c0_275] : memref<1x4x16x256xf32, #tpu.memory_space<vmem>>, vector<1x1x16x256xf32>
      %239 = vector.shape_cast %238 : vector<1x1x16x256xf32> to vector<16x256xf32>
      %c137_i32_276 = arith.constant 137 : i32
      %240 = tpu.dynamic_rotate %239 by %c137_i32_276 dim 1 : vector<16x256xf32>, i32 -> vector<16x256xf32>
      %241 = vector.extract_strided_slice %240 {offsets = [0, 0], sizes = [16, 128], strides = [1, 1]} : vector<16x256xf32> to vector<16x128xf32>
      %242 = arith.mulf %231, %236 : vector<16x128xf32>
      %243 = arith.addf %224, %242 : vector<16x128xf32>
      %244 = arith.mulf %231, %241 : vector<16x128xf32>
      %245 = arith.addf %226, %244 : vector<16x128xf32>
      scf.yield %243, %245 : vector<16x128xf32>, vector<16x128xf32>
    }
    %c2_i32_144 = arith.constant 2 : i32
    %cst_145 = arith.constant 2.500000e-01 : f32
    %120 = vector.broadcast %cst_145 : f32 to vector<16x128xf32>
    %121 = arith.mulf %119#0, %120 : vector<16x128xf32>
    %c0_146 = arith.constant 0 : index
    %c0_147 = arith.constant 0 : index
    %c9 = arith.constant 9 : index
    %c0_148 = arith.constant 0 : index
    %c0_149 = arith.constant 0 : index
    %122 = vector.load %arg6[%c0_146, %c0_147, %c9, %c0_148, %c0_149] : memref<1x2x16x16x128xf32, #tpu.memory_space<vmem>>, vector<1x1x1x16x128xf32>
    %123 = vector.shape_cast %122 : vector<1x1x1x16x128xf32> to vector<16x128xf32>
    %124 = vector.shape_cast %121 : vector<16x128xf32> to vector<1x1x1x16x128xf32>
    tpu.vector_store %arg6[%c0_146, %c0_147, %c9, %c0_148, %c0_149], %124 {strides = array<i32>} : memref<1x2x16x16x128xf32, #tpu.memory_space<vmem>>, vector<1x1x1x16x128xf32>,
    %cst_150 = arith.constant 2.500000e-01 : f32
    %125 = vector.broadcast %cst_150 : f32 to vector<16x128xf32>
    %126 = arith.mulf %119#1, %125 : vector<16x128xf32>
    %c0_151 = arith.constant 0 : index
    %c1_152 = arith.constant 1 : index
    %c9_153 = arith.constant 9 : index
    %c0_154 = arith.constant 0 : index
    %c0_155 = arith.constant 0 : index
    %127 = vector.load %arg6[%c0_151, %c1_152, %c9_153, %c0_154, %c0_155] : memref<1x2x16x16x128xf32, #tpu.memory_space<vmem>>, vector<1x1x1x16x128xf32>
    %128 = vector.shape_cast %127 : vector<1x1x1x16x128xf32> to vector<16x128xf32>
    %129 = vector.shape_cast %126 : vector<16x128xf32> to vector<1x1x1x16x128xf32>
    tpu.vector_store %arg6[%c0_151, %c1_152, %c9_153, %c0_154, %c0_155], %129 {strides = array<i32>} : memref<1x2x16x16x128xf32, #tpu.memory_space<vmem>>, vector<1x1x1x16x128xf32>,
    %cst_156 = arith.constant 0.000000e+00 : f32
    %130 = vector.broadcast %cst_156 : f32 to vector<16x128xf32>
    %c0_i32_157 = arith.constant 0 : i32
    %c2_i32_158 = arith.constant 2 : i32
    %131 = arith.addi %c0_i32_157, %c2_i32_158 : i32
    %c1_i32_159 = arith.constant 1 : i32
    %132:2 = scf.for %arg7 = %c0_i32_157 to %131 step %c1_i32_159 iter_args(%arg8 = %130, %arg9 = %130) -> (vector<16x128xf32>, vector<16x128xf32>)  : i32 {
      %c2_i32_252 = arith.constant 2 : i32
      %208 = arith.muli %arg7, %c2_i32_252 : i32
      %c0_i32_253 = arith.constant 0 : i32
      %209 = arith.addi %208, %c0_i32_253 : i32
      %c0_254 = arith.constant 0 : index
      %210 = arith.index_cast %209 : i32 to index
      %c0_255 = arith.constant 0 : index
      %c0_256 = arith.constant 0 : index
      %211 = vector.load %arg3[%c0_254, %210, %c0_255, %c0_256] : memref<1x4x16x128xf32, #tpu.memory_space<vmem>>, vector<1x1x16x128xf32>
      %212 = vector.shape_cast %211 : vector<1x1x16x128xf32> to vector<16x128xf32>
      %c0_257 = arith.constant 0 : index
      %213 = arith.index_cast %209 : i32 to index
      %c0_258 = arith.constant 0 : index
      %c0_259 = arith.constant 0 : index
      %214 = vector.load %arg4[%c0_257, %213, %c0_258, %c0_259] : memref<1x4x16x256xf32, #tpu.memory_space<vmem>>, vector<1x1x16x256xf32>
      %215 = vector.shape_cast %214 : vector<1x1x16x256xf32> to vector<16x256xf32>
      %c138_i32 = arith.constant 138 : i32
      %216 = tpu.dynamic_rotate %215 by %c138_i32 dim 1 : vector<16x256xf32>, i32 -> vector<16x256xf32>
      %217 = vector.extract_strided_slice %216 {offsets = [0, 0], sizes = [16, 128], strides = [1, 1]} : vector<16x256xf32> to vector<16x128xf32>
      %c0_260 = arith.constant 0 : index
      %218 = arith.index_cast %209 : i32 to index
      %c0_261 = arith.constant 0 : index
      %c0_262 = arith.constant 0 : index
      %219 = vector.load %arg5[%c0_260, %218, %c0_261, %c0_262] : memref<1x4x16x256xf32, #tpu.memory_space<vmem>>, vector<1x1x16x256xf32>
      %220 = vector.shape_cast %219 : vector<1x1x16x256xf32> to vector<16x256xf32>
      %c138_i32_263 = arith.constant 138 : i32
      %221 = tpu.dynamic_rotate %220 by %c138_i32_263 dim 1 : vector<16x256xf32>, i32 -> vector<16x256xf32>
      %222 = vector.extract_strided_slice %221 {offsets = [0, 0], sizes = [16, 128], strides = [1, 1]} : vector<16x256xf32> to vector<16x128xf32>
      %223 = arith.mulf %212, %217 : vector<16x128xf32>
      %224 = arith.addf %arg8, %223 : vector<16x128xf32>
      %225 = arith.mulf %212, %222 : vector<16x128xf32>
      %226 = arith.addf %arg9, %225 : vector<16x128xf32>
      %c2_i32_264 = arith.constant 2 : i32
      %227 = arith.muli %arg7, %c2_i32_264 : i32
      %c1_i32_265 = arith.constant 1 : i32
      %228 = arith.addi %227, %c1_i32_265 : i32
      %c0_266 = arith.constant 0 : index
      %229 = arith.index_cast %228 : i32 to index
      %c0_267 = arith.constant 0 : index
      %c0_268 = arith.constant 0 : index
      %230 = vector.load %arg3[%c0_266, %229, %c0_267, %c0_268] : memref<1x4x16x128xf32, #tpu.memory_space<vmem>>, vector<1x1x16x128xf32>
      %231 = vector.shape_cast %230 : vector<1x1x16x128xf32> to vector<16x128xf32>
      %c0_269 = arith.constant 0 : index
      %232 = arith.index_cast %228 : i32 to index
      %c0_270 = arith.constant 0 : index
      %c0_271 = arith.constant 0 : index
      %233 = vector.load %arg4[%c0_269, %232, %c0_270, %c0_271] : memref<1x4x16x256xf32, #tpu.memory_space<vmem>>, vector<1x1x16x256xf32>
      %234 = vector.shape_cast %233 : vector<1x1x16x256xf32> to vector<16x256xf32>
      %c138_i32_272 = arith.constant 138 : i32
      %235 = tpu.dynamic_rotate %234 by %c138_i32_272 dim 1 : vector<16x256xf32>, i32 -> vector<16x256xf32>
      %236 = vector.extract_strided_slice %235 {offsets = [0, 0], sizes = [16, 128], strides = [1, 1]} : vector<16x256xf32> to vector<16x128xf32>
      %c0_273 = arith.constant 0 : index
      %237 = arith.index_cast %228 : i32 to index
      %c0_274 = arith.constant 0 : index
      %c0_275 = arith.constant 0 : index
      %238 = vector.load %arg5[%c0_273, %237, %c0_274, %c0_275] : memref<1x4x16x256xf32, #tpu.memory_space<vmem>>, vector<1x1x16x256xf32>
      %239 = vector.shape_cast %238 : vector<1x1x16x256xf32> to vector<16x256xf32>
      %c138_i32_276 = arith.constant 138 : i32
      %240 = tpu.dynamic_rotate %239 by %c138_i32_276 dim 1 : vector<16x256xf32>, i32 -> vector<16x256xf32>
      %241 = vector.extract_strided_slice %240 {offsets = [0, 0], sizes = [16, 128], strides = [1, 1]} : vector<16x256xf32> to vector<16x128xf32>
      %242 = arith.mulf %231, %236 : vector<16x128xf32>
      %243 = arith.addf %224, %242 : vector<16x128xf32>
      %244 = arith.mulf %231, %241 : vector<16x128xf32>
      %245 = arith.addf %226, %244 : vector<16x128xf32>
      scf.yield %243, %245 : vector<16x128xf32>, vector<16x128xf32>
    }
    %c2_i32_160 = arith.constant 2 : i32
    %cst_161 = arith.constant 2.500000e-01 : f32
    %133 = vector.broadcast %cst_161 : f32 to vector<16x128xf32>
    %134 = arith.mulf %132#0, %133 : vector<16x128xf32>
    %c0_162 = arith.constant 0 : index
    %c0_163 = arith.constant 0 : index
    %c10 = arith.constant 10 : index
    %c0_164 = arith.constant 0 : index
    %c0_165 = arith.constant 0 : index
    %135 = vector.load %arg6[%c0_162, %c0_163, %c10, %c0_164, %c0_165] : memref<1x2x16x16x128xf32, #tpu.memory_space<vmem>>, vector<1x1x1x16x128xf32>
    %136 = vector.shape_cast %135 : vector<1x1x1x16x128xf32> to vector<16x128xf32>
    %137 = vector.shape_cast %134 : vector<16x128xf32> to vector<1x1x1x16x128xf32>
    tpu.vector_store %arg6[%c0_162, %c0_163, %c10, %c0_164, %c0_165], %137 {strides = array<i32>} : memref<1x2x16x16x128xf32, #tpu.memory_space<vmem>>, vector<1x1x1x16x128xf32>,
    %cst_166 = arith.constant 2.500000e-01 : f32
    %138 = vector.broadcast %cst_166 : f32 to vector<16x128xf32>
    %139 = arith.mulf %132#1, %138 : vector<16x128xf32>
    %c0_167 = arith.constant 0 : index
    %c1_168 = arith.constant 1 : index
    %c10_169 = arith.constant 10 : index
    %c0_170 = arith.constant 0 : index
    %c0_171 = arith.constant 0 : index
    %140 = vector.load %arg6[%c0_167, %c1_168, %c10_169, %c0_170, %c0_171] : memref<1x2x16x16x128xf32, #tpu.memory_space<vmem>>, vector<1x1x1x16x128xf32>
    %141 = vector.shape_cast %140 : vector<1x1x1x16x128xf32> to vector<16x128xf32>
    %142 = vector.shape_cast %139 : vector<16x128xf32> to vector<1x1x1x16x128xf32>
    tpu.vector_store %arg6[%c0_167, %c1_168, %c10_169, %c0_170, %c0_171], %142 {strides = array<i32>} : memref<1x2x16x16x128xf32, #tpu.memory_space<vmem>>, vector<1x1x1x16x128xf32>,
    %cst_172 = arith.constant 0.000000e+00 : f32
    %143 = vector.broadcast %cst_172 : f32 to vector<16x128xf32>
    %c0_i32_173 = arith.constant 0 : i32
    %c2_i32_174 = arith.constant 2 : i32
    %144 = arith.addi %c0_i32_173, %c2_i32_174 : i32
    %c1_i32_175 = arith.constant 1 : i32
    %145:2 = scf.for %arg7 = %c0_i32_173 to %144 step %c1_i32_175 iter_args(%arg8 = %143, %arg9 = %143) -> (vector<16x128xf32>, vector<16x128xf32>)  : i32 {
      %c2_i32_252 = arith.constant 2 : i32
      %208 = arith.muli %arg7, %c2_i32_252 : i32
      %c0_i32_253 = arith.constant 0 : i32
      %209 = arith.addi %208, %c0_i32_253 : i32
      %c0_254 = arith.constant 0 : index
      %210 = arith.index_cast %209 : i32 to index
      %c0_255 = arith.constant 0 : index
      %c0_256 = arith.constant 0 : index
      %211 = vector.load %arg3[%c0_254, %210, %c0_255, %c0_256] : memref<1x4x16x128xf32, #tpu.memory_space<vmem>>, vector<1x1x16x128xf32>
      %212 = vector.shape_cast %211 : vector<1x1x16x128xf32> to vector<16x128xf32>
      %c0_257 = arith.constant 0 : index
      %213 = arith.index_cast %209 : i32 to index
      %c0_258 = arith.constant 0 : index
      %c0_259 = arith.constant 0 : index
      %214 = vector.load %arg4[%c0_257, %213, %c0_258, %c0_259] : memref<1x4x16x256xf32, #tpu.memory_space<vmem>>, vector<1x1x16x256xf32>
      %215 = vector.shape_cast %214 : vector<1x1x16x256xf32> to vector<16x256xf32>
      %c139_i32 = arith.constant 139 : i32
      %216 = tpu.dynamic_rotate %215 by %c139_i32 dim 1 : vector<16x256xf32>, i32 -> vector<16x256xf32>
      %217 = vector.extract_strided_slice %216 {offsets = [0, 0], sizes = [16, 128], strides = [1, 1]} : vector<16x256xf32> to vector<16x128xf32>
      %c0_260 = arith.constant 0 : index
      %218 = arith.index_cast %209 : i32 to index
      %c0_261 = arith.constant 0 : index
      %c0_262 = arith.constant 0 : index
      %219 = vector.load %arg5[%c0_260, %218, %c0_261, %c0_262] : memref<1x4x16x256xf32, #tpu.memory_space<vmem>>, vector<1x1x16x256xf32>
      %220 = vector.shape_cast %219 : vector<1x1x16x256xf32> to vector<16x256xf32>
      %c139_i32_263 = arith.constant 139 : i32
      %221 = tpu.dynamic_rotate %220 by %c139_i32_263 dim 1 : vector<16x256xf32>, i32 -> vector<16x256xf32>
      %222 = vector.extract_strided_slice %221 {offsets = [0, 0], sizes = [16, 128], strides = [1, 1]} : vector<16x256xf32> to vector<16x128xf32>
      %223 = arith.mulf %212, %217 : vector<16x128xf32>
      %224 = arith.addf %arg8, %223 : vector<16x128xf32>
      %225 = arith.mulf %212, %222 : vector<16x128xf32>
      %226 = arith.addf %arg9, %225 : vector<16x128xf32>
      %c2_i32_264 = arith.constant 2 : i32
      %227 = arith.muli %arg7, %c2_i32_264 : i32
      %c1_i32_265 = arith.constant 1 : i32
      %228 = arith.addi %227, %c1_i32_265 : i32
      %c0_266 = arith.constant 0 : index
      %229 = arith.index_cast %228 : i32 to index
      %c0_267 = arith.constant 0 : index
      %c0_268 = arith.constant 0 : index
      %230 = vector.load %arg3[%c0_266, %229, %c0_267, %c0_268] : memref<1x4x16x128xf32, #tpu.memory_space<vmem>>, vector<1x1x16x128xf32>
      %231 = vector.shape_cast %230 : vector<1x1x16x128xf32> to vector<16x128xf32>
      %c0_269 = arith.constant 0 : index
      %232 = arith.index_cast %228 : i32 to index
      %c0_270 = arith.constant 0 : index
      %c0_271 = arith.constant 0 : index
      %233 = vector.load %arg4[%c0_269, %232, %c0_270, %c0_271] : memref<1x4x16x256xf32, #tpu.memory_space<vmem>>, vector<1x1x16x256xf32>
      %234 = vector.shape_cast %233 : vector<1x1x16x256xf32> to vector<16x256xf32>
      %c139_i32_272 = arith.constant 139 : i32
      %235 = tpu.dynamic_rotate %234 by %c139_i32_272 dim 1 : vector<16x256xf32>, i32 -> vector<16x256xf32>
      %236 = vector.extract_strided_slice %235 {offsets = [0, 0], sizes = [16, 128], strides = [1, 1]} : vector<16x256xf32> to vector<16x128xf32>
      %c0_273 = arith.constant 0 : index
      %237 = arith.index_cast %228 : i32 to index
      %c0_274 = arith.constant 0 : index
      %c0_275 = arith.constant 0 : index
      %238 = vector.load %arg5[%c0_273, %237, %c0_274, %c0_275] : memref<1x4x16x256xf32, #tpu.memory_space<vmem>>, vector<1x1x16x256xf32>
      %239 = vector.shape_cast %238 : vector<1x1x16x256xf32> to vector<16x256xf32>
      %c139_i32_276 = arith.constant 139 : i32
      %240 = tpu.dynamic_rotate %239 by %c139_i32_276 dim 1 : vector<16x256xf32>, i32 -> vector<16x256xf32>
      %241 = vector.extract_strided_slice %240 {offsets = [0, 0], sizes = [16, 128], strides = [1, 1]} : vector<16x256xf32> to vector<16x128xf32>
      %242 = arith.mulf %231, %236 : vector<16x128xf32>
      %243 = arith.addf %224, %242 : vector<16x128xf32>
      %244 = arith.mulf %231, %241 : vector<16x128xf32>
      %245 = arith.addf %226, %244 : vector<16x128xf32>
      scf.yield %243, %245 : vector<16x128xf32>, vector<16x128xf32>
    }
    %c2_i32_176 = arith.constant 2 : i32
    %cst_177 = arith.constant 2.500000e-01 : f32
    %146 = vector.broadcast %cst_177 : f32 to vector<16x128xf32>
    %147 = arith.mulf %145#0, %146 : vector<16x128xf32>
    %c0_178 = arith.constant 0 : index
    %c0_179 = arith.constant 0 : index
    %c11 = arith.constant 11 : index
    %c0_180 = arith.constant 0 : index
    %c0_181 = arith.constant 0 : index
    %148 = vector.load %arg6[%c0_178, %c0_179, %c11, %c0_180, %c0_181] : memref<1x2x16x16x128xf32, #tpu.memory_space<vmem>>, vector<1x1x1x16x128xf32>
    %149 = vector.shape_cast %148 : vector<1x1x1x16x128xf32> to vector<16x128xf32>
    %150 = vector.shape_cast %147 : vector<16x128xf32> to vector<1x1x1x16x128xf32>
    tpu.vector_store %arg6[%c0_178, %c0_179, %c11, %c0_180, %c0_181], %150 {strides = array<i32>} : memref<1x2x16x16x128xf32, #tpu.memory_space<vmem>>, vector<1x1x1x16x128xf32>,
    %cst_182 = arith.constant 2.500000e-01 : f32
    %151 = vector.broadcast %cst_182 : f32 to vector<16x128xf32>
    %152 = arith.mulf %145#1, %151 : vector<16x128xf32>
    %c0_183 = arith.constant 0 : index
    %c1_184 = arith.constant 1 : index
    %c11_185 = arith.constant 11 : index
    %c0_186 = arith.constant 0 : index
    %c0_187 = arith.constant 0 : index
    %153 = vector.load %arg6[%c0_183, %c1_184, %c11_185, %c0_186, %c0_187] : memref<1x2x16x16x128xf32, #tpu.memory_space<vmem>>, vector<1x1x1x16x128xf32>
    %154 = vector.shape_cast %153 : vector<1x1x1x16x128xf32> to vector<16x128xf32>
    %155 = vector.shape_cast %152 : vector<16x128xf32> to vector<1x1x1x16x128xf32>
    tpu.vector_store %arg6[%c0_183, %c1_184, %c11_185, %c0_186, %c0_187], %155 {strides = array<i32>} : memref<1x2x16x16x128xf32, #tpu.memory_space<vmem>>, vector<1x1x1x16x128xf32>,
    %cst_188 = arith.constant 0.000000e+00 : f32
    %156 = vector.broadcast %cst_188 : f32 to vector<16x128xf32>
    %c0_i32_189 = arith.constant 0 : i32
    %c2_i32_190 = arith.constant 2 : i32
    %157 = arith.addi %c0_i32_189, %c2_i32_190 : i32
    %c1_i32_191 = arith.constant 1 : i32
    %158:2 = scf.for %arg7 = %c0_i32_189 to %157 step %c1_i32_191 iter_args(%arg8 = %156, %arg9 = %156) -> (vector<16x128xf32>, vector<16x128xf32>)  : i32 {
      %c2_i32_252 = arith.constant 2 : i32
      %208 = arith.muli %arg7, %c2_i32_252 : i32
      %c0_i32_253 = arith.constant 0 : i32
      %209 = arith.addi %208, %c0_i32_253 : i32
      %c0_254 = arith.constant 0 : index
      %210 = arith.index_cast %209 : i32 to index
      %c0_255 = arith.constant 0 : index
      %c0_256 = arith.constant 0 : index
      %211 = vector.load %arg3[%c0_254, %210, %c0_255, %c0_256] : memref<1x4x16x128xf32, #tpu.memory_space<vmem>>, vector<1x1x16x128xf32>
      %212 = vector.shape_cast %211 : vector<1x1x16x128xf32> to vector<16x128xf32>
      %c0_257 = arith.constant 0 : index
      %213 = arith.index_cast %209 : i32 to index
      %c0_258 = arith.constant 0 : index
      %c0_259 = arith.constant 0 : index
      %214 = vector.load %arg4[%c0_257, %213, %c0_258, %c0_259] : memref<1x4x16x256xf32, #tpu.memory_space<vmem>>, vector<1x1x16x256xf32>
      %215 = vector.shape_cast %214 : vector<1x1x16x256xf32> to vector<16x256xf32>
      %c140_i32 = arith.constant 140 : i32
      %216 = tpu.dynamic_rotate %215 by %c140_i32 dim 1 : vector<16x256xf32>, i32 -> vector<16x256xf32>
      %217 = vector.extract_strided_slice %216 {offsets = [0, 0], sizes = [16, 128], strides = [1, 1]} : vector<16x256xf32> to vector<16x128xf32>
      %c0_260 = arith.constant 0 : index
      %218 = arith.index_cast %209 : i32 to index
      %c0_261 = arith.constant 0 : index
      %c0_262 = arith.constant 0 : index
      %219 = vector.load %arg5[%c0_260, %218, %c0_261, %c0_262] : memref<1x4x16x256xf32, #tpu.memory_space<vmem>>, vector<1x1x16x256xf32>
      %220 = vector.shape_cast %219 : vector<1x1x16x256xf32> to vector<16x256xf32>
      %c140_i32_263 = arith.constant 140 : i32
      %221 = tpu.dynamic_rotate %220 by %c140_i32_263 dim 1 : vector<16x256xf32>, i32 -> vector<16x256xf32>
      %222 = vector.extract_strided_slice %221 {offsets = [0, 0], sizes = [16, 128], strides = [1, 1]} : vector<16x256xf32> to vector<16x128xf32>
      %223 = arith.mulf %212, %217 : vector<16x128xf32>
      %224 = arith.addf %arg8, %223 : vector<16x128xf32>
      %225 = arith.mulf %212, %222 : vector<16x128xf32>
      %226 = arith.addf %arg9, %225 : vector<16x128xf32>
      %c2_i32_264 = arith.constant 2 : i32
      %227 = arith.muli %arg7, %c2_i32_264 : i32
      %c1_i32_265 = arith.constant 1 : i32
      %228 = arith.addi %227, %c1_i32_265 : i32
      %c0_266 = arith.constant 0 : index
      %229 = arith.index_cast %228 : i32 to index
      %c0_267 = arith.constant 0 : index
      %c0_268 = arith.constant 0 : index
      %230 = vector.load %arg3[%c0_266, %229, %c0_267, %c0_268] : memref<1x4x16x128xf32, #tpu.memory_space<vmem>>, vector<1x1x16x128xf32>
      %231 = vector.shape_cast %230 : vector<1x1x16x128xf32> to vector<16x128xf32>
      %c0_269 = arith.constant 0 : index
      %232 = arith.index_cast %228 : i32 to index
      %c0_270 = arith.constant 0 : index
      %c0_271 = arith.constant 0 : index
      %233 = vector.load %arg4[%c0_269, %232, %c0_270, %c0_271] : memref<1x4x16x256xf32, #tpu.memory_space<vmem>>, vector<1x1x16x256xf32>
      %234 = vector.shape_cast %233 : vector<1x1x16x256xf32> to vector<16x256xf32>
      %c140_i32_272 = arith.constant 140 : i32
      %235 = tpu.dynamic_rotate %234 by %c140_i32_272 dim 1 : vector<16x256xf32>, i32 -> vector<16x256xf32>
      %236 = vector.extract_strided_slice %235 {offsets = [0, 0], sizes = [16, 128], strides = [1, 1]} : vector<16x256xf32> to vector<16x128xf32>
      %c0_273 = arith.constant 0 : index
      %237 = arith.index_cast %228 : i32 to index
      %c0_274 = arith.constant 0 : index
      %c0_275 = arith.constant 0 : index
      %238 = vector.load %arg5[%c0_273, %237, %c0_274, %c0_275] : memref<1x4x16x256xf32, #tpu.memory_space<vmem>>, vector<1x1x16x256xf32>
      %239 = vector.shape_cast %238 : vector<1x1x16x256xf32> to vector<16x256xf32>
      %c140_i32_276 = arith.constant 140 : i32
      %240 = tpu.dynamic_rotate %239 by %c140_i32_276 dim 1 : vector<16x256xf32>, i32 -> vector<16x256xf32>
      %241 = vector.extract_strided_slice %240 {offsets = [0, 0], sizes = [16, 128], strides = [1, 1]} : vector<16x256xf32> to vector<16x128xf32>
      %242 = arith.mulf %231, %236 : vector<16x128xf32>
      %243 = arith.addf %224, %242 : vector<16x128xf32>
      %244 = arith.mulf %231, %241 : vector<16x128xf32>
      %245 = arith.addf %226, %244 : vector<16x128xf32>
      scf.yield %243, %245 : vector<16x128xf32>, vector<16x128xf32>
    }
    %c2_i32_192 = arith.constant 2 : i32
    %cst_193 = arith.constant 2.500000e-01 : f32
    %159 = vector.broadcast %cst_193 : f32 to vector<16x128xf32>
    %160 = arith.mulf %158#0, %159 : vector<16x128xf32>
    %c0_194 = arith.constant 0 : index
    %c0_195 = arith.constant 0 : index
    %c12 = arith.constant 12 : index
    %c0_196 = arith.constant 0 : index
    %c0_197 = arith.constant 0 : index
    %161 = vector.load %arg6[%c0_194, %c0_195, %c12, %c0_196, %c0_197] : memref<1x2x16x16x128xf32, #tpu.memory_space<vmem>>, vector<1x1x1x16x128xf32>
    %162 = vector.shape_cast %161 : vector<1x1x1x16x128xf32> to vector<16x128xf32>
    %163 = vector.shape_cast %160 : vector<16x128xf32> to vector<1x1x1x16x128xf32>
    tpu.vector_store %arg6[%c0_194, %c0_195, %c12, %c0_196, %c0_197], %163 {strides = array<i32>} : memref<1x2x16x16x128xf32, #tpu.memory_space<vmem>>, vector<1x1x1x16x128xf32>,
    %cst_198 = arith.constant 2.500000e-01 : f32
    %164 = vector.broadcast %cst_198 : f32 to vector<16x128xf32>
    %165 = arith.mulf %158#1, %164 : vector<16x128xf32>
    %c0_199 = arith.constant 0 : index
    %c1_200 = arith.constant 1 : index
    %c12_201 = arith.constant 12 : index
    %c0_202 = arith.constant 0 : index
    %c0_203 = arith.constant 0 : index
    %166 = vector.load %arg6[%c0_199, %c1_200, %c12_201, %c0_202, %c0_203] : memref<1x2x16x16x128xf32, #tpu.memory_space<vmem>>, vector<1x1x1x16x128xf32>
    %167 = vector.shape_cast %166 : vector<1x1x1x16x128xf32> to vector<16x128xf32>
    %168 = vector.shape_cast %165 : vector<16x128xf32> to vector<1x1x1x16x128xf32>
    tpu.vector_store %arg6[%c0_199, %c1_200, %c12_201, %c0_202, %c0_203], %168 {strides = array<i32>} : memref<1x2x16x16x128xf32, #tpu.memory_space<vmem>>, vector<1x1x1x16x128xf32>,
    %cst_204 = arith.constant 0.000000e+00 : f32
    %169 = vector.broadcast %cst_204 : f32 to vector<16x128xf32>
    %c0_i32_205 = arith.constant 0 : i32
    %c2_i32_206 = arith.constant 2 : i32
    %170 = arith.addi %c0_i32_205, %c2_i32_206 : i32
    %c1_i32_207 = arith.constant 1 : i32
    %171:2 = scf.for %arg7 = %c0_i32_205 to %170 step %c1_i32_207 iter_args(%arg8 = %169, %arg9 = %169) -> (vector<16x128xf32>, vector<16x128xf32>)  : i32 {
      %c2_i32_252 = arith.constant 2 : i32
      %208 = arith.muli %arg7, %c2_i32_252 : i32
      %c0_i32_253 = arith.constant 0 : i32
      %209 = arith.addi %208, %c0_i32_253 : i32
      %c0_254 = arith.constant 0 : index
      %210 = arith.index_cast %209 : i32 to index
      %c0_255 = arith.constant 0 : index
      %c0_256 = arith.constant 0 : index
      %211 = vector.load %arg3[%c0_254, %210, %c0_255, %c0_256] : memref<1x4x16x128xf32, #tpu.memory_space<vmem>>, vector<1x1x16x128xf32>
      %212 = vector.shape_cast %211 : vector<1x1x16x128xf32> to vector<16x128xf32>
      %c0_257 = arith.constant 0 : index
      %213 = arith.index_cast %209 : i32 to index
      %c0_258 = arith.constant 0 : index
      %c0_259 = arith.constant 0 : index
      %214 = vector.load %arg4[%c0_257, %213, %c0_258, %c0_259] : memref<1x4x16x256xf32, #tpu.memory_space<vmem>>, vector<1x1x16x256xf32>
      %215 = vector.shape_cast %214 : vector<1x1x16x256xf32> to vector<16x256xf32>
      %c141_i32 = arith.constant 141 : i32
      %216 = tpu.dynamic_rotate %215 by %c141_i32 dim 1 : vector<16x256xf32>, i32 -> vector<16x256xf32>
      %217 = vector.extract_strided_slice %216 {offsets = [0, 0], sizes = [16, 128], strides = [1, 1]} : vector<16x256xf32> to vector<16x128xf32>
      %c0_260 = arith.constant 0 : index
      %218 = arith.index_cast %209 : i32 to index
      %c0_261 = arith.constant 0 : index
      %c0_262 = arith.constant 0 : index
      %219 = vector.load %arg5[%c0_260, %218, %c0_261, %c0_262] : memref<1x4x16x256xf32, #tpu.memory_space<vmem>>, vector<1x1x16x256xf32>
      %220 = vector.shape_cast %219 : vector<1x1x16x256xf32> to vector<16x256xf32>
      %c141_i32_263 = arith.constant 141 : i32
      %221 = tpu.dynamic_rotate %220 by %c141_i32_263 dim 1 : vector<16x256xf32>, i32 -> vector<16x256xf32>
      %222 = vector.extract_strided_slice %221 {offsets = [0, 0], sizes = [16, 128], strides = [1, 1]} : vector<16x256xf32> to vector<16x128xf32>
      %223 = arith.mulf %212, %217 : vector<16x128xf32>
      %224 = arith.addf %arg8, %223 : vector<16x128xf32>
      %225 = arith.mulf %212, %222 : vector<16x128xf32>
      %226 = arith.addf %arg9, %225 : vector<16x128xf32>
      %c2_i32_264 = arith.constant 2 : i32
      %227 = arith.muli %arg7, %c2_i32_264 : i32
      %c1_i32_265 = arith.constant 1 : i32
      %228 = arith.addi %227, %c1_i32_265 : i32
      %c0_266 = arith.constant 0 : index
      %229 = arith.index_cast %228 : i32 to index
      %c0_267 = arith.constant 0 : index
      %c0_268 = arith.constant 0 : index
      %230 = vector.load %arg3[%c0_266, %229, %c0_267, %c0_268] : memref<1x4x16x128xf32, #tpu.memory_space<vmem>>, vector<1x1x16x128xf32>
      %231 = vector.shape_cast %230 : vector<1x1x16x128xf32> to vector<16x128xf32>
      %c0_269 = arith.constant 0 : index
      %232 = arith.index_cast %228 : i32 to index
      %c0_270 = arith.constant 0 : index
      %c0_271 = arith.constant 0 : index
      %233 = vector.load %arg4[%c0_269, %232, %c0_270, %c0_271] : memref<1x4x16x256xf32, #tpu.memory_space<vmem>>, vector<1x1x16x256xf32>
      %234 = vector.shape_cast %233 : vector<1x1x16x256xf32> to vector<16x256xf32>
      %c141_i32_272 = arith.constant 141 : i32
      %235 = tpu.dynamic_rotate %234 by %c141_i32_272 dim 1 : vector<16x256xf32>, i32 -> vector<16x256xf32>
      %236 = vector.extract_strided_slice %235 {offsets = [0, 0], sizes = [16, 128], strides = [1, 1]} : vector<16x256xf32> to vector<16x128xf32>
      %c0_273 = arith.constant 0 : index
      %237 = arith.index_cast %228 : i32 to index
      %c0_274 = arith.constant 0 : index
      %c0_275 = arith.constant 0 : index
      %238 = vector.load %arg5[%c0_273, %237, %c0_274, %c0_275] : memref<1x4x16x256xf32, #tpu.memory_space<vmem>>, vector<1x1x16x256xf32>
      %239 = vector.shape_cast %238 : vector<1x1x16x256xf32> to vector<16x256xf32>
      %c141_i32_276 = arith.constant 141 : i32
      %240 = tpu.dynamic_rotate %239 by %c141_i32_276 dim 1 : vector<16x256xf32>, i32 -> vector<16x256xf32>
      %241 = vector.extract_strided_slice %240 {offsets = [0, 0], sizes = [16, 128], strides = [1, 1]} : vector<16x256xf32> to vector<16x128xf32>
      %242 = arith.mulf %231, %236 : vector<16x128xf32>
      %243 = arith.addf %224, %242 : vector<16x128xf32>
      %244 = arith.mulf %231, %241 : vector<16x128xf32>
      %245 = arith.addf %226, %244 : vector<16x128xf32>
      scf.yield %243, %245 : vector<16x128xf32>, vector<16x128xf32>
    }
    %c2_i32_208 = arith.constant 2 : i32
    %cst_209 = arith.constant 2.500000e-01 : f32
    %172 = vector.broadcast %cst_209 : f32 to vector<16x128xf32>
    %173 = arith.mulf %171#0, %172 : vector<16x128xf32>
    %c0_210 = arith.constant 0 : index
    %c0_211 = arith.constant 0 : index
    %c13 = arith.constant 13 : index
    %c0_212 = arith.constant 0 : index
    %c0_213 = arith.constant 0 : index
    %174 = vector.load %arg6[%c0_210, %c0_211, %c13, %c0_212, %c0_213] : memref<1x2x16x16x128xf32, #tpu.memory_space<vmem>>, vector<1x1x1x16x128xf32>
    %175 = vector.shape_cast %174 : vector<1x1x1x16x128xf32> to vector<16x128xf32>
    %176 = vector.shape_cast %173 : vector<16x128xf32> to vector<1x1x1x16x128xf32>
    tpu.vector_store %arg6[%c0_210, %c0_211, %c13, %c0_212, %c0_213], %176 {strides = array<i32>} : memref<1x2x16x16x128xf32, #tpu.memory_space<vmem>>, vector<1x1x1x16x128xf32>,
    %cst_214 = arith.constant 2.500000e-01 : f32
    %177 = vector.broadcast %cst_214 : f32 to vector<16x128xf32>
    %178 = arith.mulf %171#1, %177 : vector<16x128xf32>
    %c0_215 = arith.constant 0 : index
    %c1_216 = arith.constant 1 : index
    %c13_217 = arith.constant 13 : index
    %c0_218 = arith.constant 0 : index
    %c0_219 = arith.constant 0 : index
    %179 = vector.load %arg6[%c0_215, %c1_216, %c13_217, %c0_218, %c0_219] : memref<1x2x16x16x128xf32, #tpu.memory_space<vmem>>, vector<1x1x1x16x128xf32>
    %180 = vector.shape_cast %179 : vector<1x1x1x16x128xf32> to vector<16x128xf32>
    %181 = vector.shape_cast %178 : vector<16x128xf32> to vector<1x1x1x16x128xf32>
    tpu.vector_store %arg6[%c0_215, %c1_216, %c13_217, %c0_218, %c0_219], %181 {strides = array<i32>} : memref<1x2x16x16x128xf32, #tpu.memory_space<vmem>>, vector<1x1x1x16x128xf32>,
    %cst_220 = arith.constant 0.000000e+00 : f32
    %182 = vector.broadcast %cst_220 : f32 to vector<16x128xf32>
    %c0_i32_221 = arith.constant 0 : i32
    %c2_i32_222 = arith.constant 2 : i32
    %183 = arith.addi %c0_i32_221, %c2_i32_222 : i32
    %c1_i32_223 = arith.constant 1 : i32
    %184:2 = scf.for %arg7 = %c0_i32_221 to %183 step %c1_i32_223 iter_args(%arg8 = %182, %arg9 = %182) -> (vector<16x128xf32>, vector<16x128xf32>)  : i32 {
      %c2_i32_252 = arith.constant 2 : i32
      %208 = arith.muli %arg7, %c2_i32_252 : i32
      %c0_i32_253 = arith.constant 0 : i32
      %209 = arith.addi %208, %c0_i32_253 : i32
      %c0_254 = arith.constant 0 : index
      %210 = arith.index_cast %209 : i32 to index
      %c0_255 = arith.constant 0 : index
      %c0_256 = arith.constant 0 : index
      %211 = vector.load %arg3[%c0_254, %210, %c0_255, %c0_256] : memref<1x4x16x128xf32, #tpu.memory_space<vmem>>, vector<1x1x16x128xf32>
      %212 = vector.shape_cast %211 : vector<1x1x16x128xf32> to vector<16x128xf32>
      %c0_257 = arith.constant 0 : index
      %213 = arith.index_cast %209 : i32 to index
      %c0_258 = arith.constant 0 : index
      %c0_259 = arith.constant 0 : index
      %214 = vector.load %arg4[%c0_257, %213, %c0_258, %c0_259] : memref<1x4x16x256xf32, #tpu.memory_space<vmem>>, vector<1x1x16x256xf32>
      %215 = vector.shape_cast %214 : vector<1x1x16x256xf32> to vector<16x256xf32>
      %c142_i32 = arith.constant 142 : i32
      %216 = tpu.dynamic_rotate %215 by %c142_i32 dim 1 : vector<16x256xf32>, i32 -> vector<16x256xf32>
      %217 = vector.extract_strided_slice %216 {offsets = [0, 0], sizes = [16, 128], strides = [1, 1]} : vector<16x256xf32> to vector<16x128xf32>
      %c0_260 = arith.constant 0 : index
      %218 = arith.index_cast %209 : i32 to index
      %c0_261 = arith.constant 0 : index
      %c0_262 = arith.constant 0 : index
      %219 = vector.load %arg5[%c0_260, %218, %c0_261, %c0_262] : memref<1x4x16x256xf32, #tpu.memory_space<vmem>>, vector<1x1x16x256xf32>
      %220 = vector.shape_cast %219 : vector<1x1x16x256xf32> to vector<16x256xf32>
      %c142_i32_263 = arith.constant 142 : i32
      %221 = tpu.dynamic_rotate %220 by %c142_i32_263 dim 1 : vector<16x256xf32>, i32 -> vector<16x256xf32>
      %222 = vector.extract_strided_slice %221 {offsets = [0, 0], sizes = [16, 128], strides = [1, 1]} : vector<16x256xf32> to vector<16x128xf32>
      %223 = arith.mulf %212, %217 : vector<16x128xf32>
      %224 = arith.addf %arg8, %223 : vector<16x128xf32>
      %225 = arith.mulf %212, %222 : vector<16x128xf32>
      %226 = arith.addf %arg9, %225 : vector<16x128xf32>
      %c2_i32_264 = arith.constant 2 : i32
      %227 = arith.muli %arg7, %c2_i32_264 : i32
      %c1_i32_265 = arith.constant 1 : i32
      %228 = arith.addi %227, %c1_i32_265 : i32
      %c0_266 = arith.constant 0 : index
      %229 = arith.index_cast %228 : i32 to index
      %c0_267 = arith.constant 0 : index
      %c0_268 = arith.constant 0 : index
      %230 = vector.load %arg3[%c0_266, %229, %c0_267, %c0_268] : memref<1x4x16x128xf32, #tpu.memory_space<vmem>>, vector<1x1x16x128xf32>
      %231 = vector.shape_cast %230 : vector<1x1x16x128xf32> to vector<16x128xf32>
      %c0_269 = arith.constant 0 : index
      %232 = arith.index_cast %228 : i32 to index
      %c0_270 = arith.constant 0 : index
      %c0_271 = arith.constant 0 : index
      %233 = vector.load %arg4[%c0_269, %232, %c0_270, %c0_271] : memref<1x4x16x256xf32, #tpu.memory_space<vmem>>, vector<1x1x16x256xf32>
      %234 = vector.shape_cast %233 : vector<1x1x16x256xf32> to vector<16x256xf32>
      %c142_i32_272 = arith.constant 142 : i32
      %235 = tpu.dynamic_rotate %234 by %c142_i32_272 dim 1 : vector<16x256xf32>, i32 -> vector<16x256xf32>
      %236 = vector.extract_strided_slice %235 {offsets = [0, 0], sizes = [16, 128], strides = [1, 1]} : vector<16x256xf32> to vector<16x128xf32>
      %c0_273 = arith.constant 0 : index
      %237 = arith.index_cast %228 : i32 to index
      %c0_274 = arith.constant 0 : index
      %c0_275 = arith.constant 0 : index
      %238 = vector.load %arg5[%c0_273, %237, %c0_274, %c0_275] : memref<1x4x16x256xf32, #tpu.memory_space<vmem>>, vector<1x1x16x256xf32>
      %239 = vector.shape_cast %238 : vector<1x1x16x256xf32> to vector<16x256xf32>
      %c142_i32_276 = arith.constant 142 : i32
      %240 = tpu.dynamic_rotate %239 by %c142_i32_276 dim 1 : vector<16x256xf32>, i32 -> vector<16x256xf32>
      %241 = vector.extract_strided_slice %240 {offsets = [0, 0], sizes = [16, 128], strides = [1, 1]} : vector<16x256xf32> to vector<16x128xf32>
      %242 = arith.mulf %231, %236 : vector<16x128xf32>
      %243 = arith.addf %224, %242 : vector<16x128xf32>
      %244 = arith.mulf %231, %241 : vector<16x128xf32>
      %245 = arith.addf %226, %244 : vector<16x128xf32>
      scf.yield %243, %245 : vector<16x128xf32>, vector<16x128xf32>
    }
    %c2_i32_224 = arith.constant 2 : i32
    %cst_225 = arith.constant 2.500000e-01 : f32
    %185 = vector.broadcast %cst_225 : f32 to vector<16x128xf32>
    %186 = arith.mulf %184#0, %185 : vector<16x128xf32>
    %c0_226 = arith.constant 0 : index
    %c0_227 = arith.constant 0 : index
    %c14 = arith.constant 14 : index
    %c0_228 = arith.constant 0 : index
    %c0_229 = arith.constant 0 : index
    %187 = vector.load %arg6[%c0_226, %c0_227, %c14, %c0_228, %c0_229] : memref<1x2x16x16x128xf32, #tpu.memory_space<vmem>>, vector<1x1x1x16x128xf32>
    %188 = vector.shape_cast %187 : vector<1x1x1x16x128xf32> to vector<16x128xf32>
    %189 = vector.shape_cast %186 : vector<16x128xf32> to vector<1x1x1x16x128xf32>
    tpu.vector_store %arg6[%c0_226, %c0_227, %c14, %c0_228, %c0_229], %189 {strides = array<i32>} : memref<1x2x16x16x128xf32, #tpu.memory_space<vmem>>, vector<1x1x1x16x128xf32>,
    %cst_230 = arith.constant 2.500000e-01 : f32
    %190 = vector.broadcast %cst_230 : f32 to vector<16x128xf32>
    %191 = arith.mulf %184#1, %190 : vector<16x128xf32>
    %c0_231 = arith.constant 0 : index
    %c1_232 = arith.constant 1 : index
    %c14_233 = arith.constant 14 : index
    %c0_234 = arith.constant 0 : index
    %c0_235 = arith.constant 0 : index
    %192 = vector.load %arg6[%c0_231, %c1_232, %c14_233, %c0_234, %c0_235] : memref<1x2x16x16x128xf32, #tpu.memory_space<vmem>>, vector<1x1x1x16x128xf32>
    %193 = vector.shape_cast %192 : vector<1x1x1x16x128xf32> to vector<16x128xf32>
    %194 = vector.shape_cast %191 : vector<16x128xf32> to vector<1x1x1x16x128xf32>
    tpu.vector_store %arg6[%c0_231, %c1_232, %c14_233, %c0_234, %c0_235], %194 {strides = array<i32>} : memref<1x2x16x16x128xf32, #tpu.memory_space<vmem>>, vector<1x1x1x16x128xf32>,
    %cst_236 = arith.constant 0.000000e+00 : f32
    %195 = vector.broadcast %cst_236 : f32 to vector<16x128xf32>
    %c0_i32_237 = arith.constant 0 : i32
    %c2_i32_238 = arith.constant 2 : i32
    %196 = arith.addi %c0_i32_237, %c2_i32_238 : i32
    %c1_i32_239 = arith.constant 1 : i32
    %197:2 = scf.for %arg7 = %c0_i32_237 to %196 step %c1_i32_239 iter_args(%arg8 = %195, %arg9 = %195) -> (vector<16x128xf32>, vector<16x128xf32>)  : i32 {
      %c2_i32_252 = arith.constant 2 : i32
      %208 = arith.muli %arg7, %c2_i32_252 : i32
      %c0_i32_253 = arith.constant 0 : i32
      %209 = arith.addi %208, %c0_i32_253 : i32
      %c0_254 = arith.constant 0 : index
      %210 = arith.index_cast %209 : i32 to index
      %c0_255 = arith.constant 0 : index
      %c0_256 = arith.constant 0 : index
      %211 = vector.load %arg3[%c0_254, %210, %c0_255, %c0_256] : memref<1x4x16x128xf32, #tpu.memory_space<vmem>>, vector<1x1x16x128xf32>
      %212 = vector.shape_cast %211 : vector<1x1x16x128xf32> to vector<16x128xf32>
      %c0_257 = arith.constant 0 : index
      %213 = arith.index_cast %209 : i32 to index
      %c0_258 = arith.constant 0 : index
      %c0_259 = arith.constant 0 : index
      %214 = vector.load %arg4[%c0_257, %213, %c0_258, %c0_259] : memref<1x4x16x256xf32, #tpu.memory_space<vmem>>, vector<1x1x16x256xf32>
      %215 = vector.shape_cast %214 : vector<1x1x16x256xf32> to vector<16x256xf32>
      %c143_i32 = arith.constant 143 : i32
      %216 = tpu.dynamic_rotate %215 by %c143_i32 dim 1 : vector<16x256xf32>, i32 -> vector<16x256xf32>
      %217 = vector.extract_strided_slice %216 {offsets = [0, 0], sizes = [16, 128], strides = [1, 1]} : vector<16x256xf32> to vector<16x128xf32>
      %c0_260 = arith.constant 0 : index
      %218 = arith.index_cast %209 : i32 to index
      %c0_261 = arith.constant 0 : index
      %c0_262 = arith.constant 0 : index
      %219 = vector.load %arg5[%c0_260, %218, %c0_261, %c0_262] : memref<1x4x16x256xf32, #tpu.memory_space<vmem>>, vector<1x1x16x256xf32>
      %220 = vector.shape_cast %219 : vector<1x1x16x256xf32> to vector<16x256xf32>
      %c143_i32_263 = arith.constant 143 : i32
      %221 = tpu.dynamic_rotate %220 by %c143_i32_263 dim 1 : vector<16x256xf32>, i32 -> vector<16x256xf32>
      %222 = vector.extract_strided_slice %221 {offsets = [0, 0], sizes = [16, 128], strides = [1, 1]} : vector<16x256xf32> to vector<16x128xf32>
      %223 = arith.mulf %212, %217 : vector<16x128xf32>
      %224 = arith.addf %arg8, %223 : vector<16x128xf32>
      %225 = arith.mulf %212, %222 : vector<16x128xf32>
      %226 = arith.addf %arg9, %225 : vector<16x128xf32>
      %c2_i32_264 = arith.constant 2 : i32
      %227 = arith.muli %arg7, %c2_i32_264 : i32
      %c1_i32_265 = arith.constant 1 : i32
      %228 = arith.addi %227, %c1_i32_265 : i32
      %c0_266 = arith.constant 0 : index
      %229 = arith.index_cast %228 : i32 to index
      %c0_267 = arith.constant 0 : index
      %c0_268 = arith.constant 0 : index
      %230 = vector.load %arg3[%c0_266, %229, %c0_267, %c0_268] : memref<1x4x16x128xf32, #tpu.memory_space<vmem>>, vector<1x1x16x128xf32>
      %231 = vector.shape_cast %230 : vector<1x1x16x128xf32> to vector<16x128xf32>
      %c0_269 = arith.constant 0 : index
      %232 = arith.index_cast %228 : i32 to index
      %c0_270 = arith.constant 0 : index
      %c0_271 = arith.constant 0 : index
      %233 = vector.load %arg4[%c0_269, %232, %c0_270, %c0_271] : memref<1x4x16x256xf32, #tpu.memory_space<vmem>>, vector<1x1x16x256xf32>
      %234 = vector.shape_cast %233 : vector<1x1x16x256xf32> to vector<16x256xf32>
      %c143_i32_272 = arith.constant 143 : i32
      %235 = tpu.dynamic_rotate %234 by %c143_i32_272 dim 1 : vector<16x256xf32>, i32 -> vector<16x256xf32>
      %236 = vector.extract_strided_slice %235 {offsets = [0, 0], sizes = [16, 128], strides = [1, 1]} : vector<16x256xf32> to vector<16x128xf32>
      %c0_273 = arith.constant 0 : index
      %237 = arith.index_cast %228 : i32 to index
      %c0_274 = arith.constant 0 : index
      %c0_275 = arith.constant 0 : index
      %238 = vector.load %arg5[%c0_273, %237, %c0_274, %c0_275] : memref<1x4x16x256xf32, #tpu.memory_space<vmem>>, vector<1x1x16x256xf32>
      %239 = vector.shape_cast %238 : vector<1x1x16x256xf32> to vector<16x256xf32>
      %c143_i32_276 = arith.constant 143 : i32
      %240 = tpu.dynamic_rotate %239 by %c143_i32_276 dim 1 : vector<16x256xf32>, i32 -> vector<16x256xf32>
      %241 = vector.extract_strided_slice %240 {offsets = [0, 0], sizes = [16, 128], strides = [1, 1]} : vector<16x256xf32> to vector<16x128xf32>
      %242 = arith.mulf %231, %236 : vector<16x128xf32>
      %243 = arith.addf %224, %242 : vector<16x128xf32>
      %244 = arith.mulf %231, %241 : vector<16x128xf32>
      %245 = arith.addf %226, %244 : vector<16x128xf32>
      scf.yield %243, %245 : vector<16x128xf32>, vector<16x128xf32>
    }
    %c2_i32_240 = arith.constant 2 : i32
    %cst_241 = arith.constant 2.500000e-01 : f32
    %198 = vector.broadcast %cst_241 : f32 to vector<16x128xf32>
    %199 = arith.mulf %197#0, %198 : vector<16x128xf32>
    %c0_242 = arith.constant 0 : index
    %c0_243 = arith.constant 0 : index
    %c15 = arith.constant 15 : index
    %c0_244 = arith.constant 0 : index
    %c0_245 = arith.constant 0 : index
    %200 = vector.load %arg6[%c0_242, %c0_243, %c15, %c0_244, %c0_245] : memref<1x2x16x16x128xf32, #tpu.memory_space<vmem>>, vector<1x1x1x16x128xf32>
    %201 = vector.shape_cast %200 : vector<1x1x1x16x128xf32> to vector<16x128xf32>
    %202 = vector.shape_cast %199 : vector<16x128xf32> to vector<1x1x1x16x128xf32>
    tpu.vector_store %arg6[%c0_242, %c0_243, %c15, %c0_244, %c0_245], %202 {strides = array<i32>} : memref<1x2x16x16x128xf32, #tpu.memory_space<vmem>>, vector<1x1x1x16x128xf32>,
    %cst_246 = arith.constant 2.500000e-01 : f32
    %203 = vector.broadcast %cst_246 : f32 to vector<16x128xf32>
    %204 = arith.mulf %197#1, %203 : vector<16x128xf32>
    %c0_247 = arith.constant 0 : index
    %c1_248 = arith.constant 1 : index
    %c15_249 = arith.constant 15 : index
    %c0_250 = arith.constant 0 : index
    %c0_251 = arith.constant 0 : index
    %205 = vector.load %arg6[%c0_247, %c1_248, %c15_249, %c0_250, %c0_251] : memref<1x2x16x16x128xf32, #tpu.memory_space<vmem>>, vector<1x1x1x16x128xf32>
    %206 = vector.shape_cast %205 : vector<1x1x1x16x128xf32> to vector<16x128xf32>
    %207 = vector.shape_cast %204 : vector<16x128xf32> to vector<1x1x1x16x128xf32>
    tpu.vector_store %arg6[%c0_247, %c1_248, %c15_249, %c0_250, %c0_251], %207 {strides = array<i32>} : memref<1x2x16x16x128xf32, #tpu.memory_space<vmem>>, vector<1x1x1x16x128xf32>,
    return
  }
  func.func @transform_0(%arg0: i32, %arg1: i32, %arg2: i32) -> (i32, i32, i32, i32) {
    %c0_i32 = arith.constant 0 : i32
    %c0_i32_0 = arith.constant 0 : i32
    %c0_i32_1 = arith.constant 0 : i32
    return %arg0, %c0_i32, %arg1, %c0_i32_0 : i32, i32, i32, i32
  }
  func.func @transform_1(%arg0: i32, %arg1: i32, %arg2: i32) -> (i32, i32, i32, i32) {
    %c0_i32 = arith.constant 0 : i32
    %c0_i32_0 = arith.constant 0 : i32
    %c0_i32_1 = arith.constant 0 : i32
    return %arg0, %c0_i32, %arg1, %c0_i32_0 : i32, i32, i32, i32
  }
  func.func @transform_2(%arg0: i32, %arg1: i32, %arg2: i32) -> (i32, i32, i32, i32) {
    %c0_i32 = arith.constant 0 : i32
    %c0_i32_0 = arith.constant 0 : i32
    %c0_i32_1 = arith.constant 0 : i32
    return %arg0, %c0_i32, %arg1, %c0_i32_0 : i32, i32, i32, i32
  }
  func.func @transform_3(%arg0: i32, %arg1: i32, %arg2: i32) -> (i32, i32, i32, i32, i32) {
    %c0_i32 = arith.constant 0 : i32
    %c0_i32_0 = arith.constant 0 : i32
    %c0_i32_1 = arith.constant 0 : i32
    return %arg0, %c0_i32, %arg2, %arg1, %c0_i32_0 : i32, i32, i32, i32, i32
  }
}

</mosaic_0001>

<llo_original>
// kernel: tpu_custom_call.1
$region0: #{tpu_custom_call.1}
  #allocation0 [shape = 'u32[]', space=smem, size = 0x4, offset = 0x4, fixed_abs, tag = 'smem constant byte address 0x4 - core index']
  #allocation1 [shape = 'u32[144,128]{1,0:T(1,128)}', space=vmem, size = 0x12000, scoped, tag = 'internal scratch']
  %s0 = inlined_call_operand.hbm [shape: f32[8,128], index: 0, kind: input, shape index: {}]
  %s1 = inlined_call_operand.hbm [shape: f32[8,128], index: 1, kind: output, shape index: {}]
  %s2 = sld [smem:[#allocation0]]
  $region18: #{tpu_custom_call.1} parent=0
    _
  %s4 = ssub.s32 1, %s2
  %s5 = scalar_select 0, %s4, %s2
  $region1: #{tpu_custom_call.1} parent=0
    #allocation2 [shape = 'u8[4096]{0}', space=vmem, size = 0x1000, scoped, tag = 'input window, operand 0, single buffered']
    #allocation3 [shape = 's32[1]{0}', space=sflag, size = 0x4, scoped, tag = 'scoped memory for tpu_custom_call.1']
    #allocation4 [shape = 's32[1]{0}', space=sflag, size = 0x4, scoped, tag = 'scoped memory for tpu_custom_call.1']
    #allocation5 [shape = 'u8[4096]{0}', space=vmem, size = 0x1000, scoped, tag = 'output window, operand 0, single buffered']
    %6 = vsyncpa [#allocation3], 0
    %7 = vsyncpa [#allocation4], 0
    // Predicated region
    $region2: #{tpu_custom_call.1} parent=1 // pred_check
      _
    $region3: #{tpu_custom_call.1} parent=1 // pred_check_branch
      %9 = sbr.rel (0) target = $region5
    $region4: #{tpu_custom_call.1} parent=1 // pred_region
      %s11 = ssub.s32 128, 128
      %12 = vsyncadd [#allocation3], %s11
      %s14 = sshll.u32 [#allocation2], 4
      %s15 = int_to_ptr.vmem [resolvable:$true] %s14
      %17 = dma.hbm_to_vmem [thread:$0]  %s0, 128, %s15, [#allocation3]
    $region5: #{tpu_custom_call.1} parent=1 // pred_fallthru
      _
    // Predicated region
    $region6: #{tpu_custom_call.1} parent=1 // pred_check
      _
    $region7: #{tpu_custom_call.1} parent=1 // pred_check_branch
      %19 = sbr.rel (0) target = $region9
    $region8: #{tpu_custom_call.1} parent=1 // pred_region
      %20 = dma.done [#allocation3], 128
    $region9: #{tpu_custom_call.1} parent=1 // pred_fallthru
      _
    %v21 = vld [vmem:[#allocation2] sm:$0xff]
    %22 = vrot.lane.b32.xlu0 %v21, 1
    %v23 = vpop.permute.xlu0 %22
    %24 = vst [vmem:[#allocation5] sm:$0xff] %v23
    // Predicated region
    $region10: #{tpu_custom_call.1} parent=1 // pred_check
      _
    $region11: #{tpu_custom_call.1} parent=1 // pred_check_branch
      %26 = sbr.rel (0) target = $region13
    $region12: #{tpu_custom_call.1} parent=1 // pred_region
      %s28 = ssub.s32 128, 128
      %29 = vsyncadd [#allocation4], %s28
      %s31 = sshll.u32 [#allocation5], 4
      %s32 = int_to_ptr.vmem [resolvable:$true] %s31
      %34 = dma.vmem_to_hbm [thread:$0]  %s32, 128, %s1, [#allocation4]
    $region13: #{tpu_custom_call.1} parent=1 // pred_fallthru
      _
    // Predicated region
    $region14: #{tpu_custom_call.1} parent=1 // pred_check
      _
    $region15: #{tpu_custom_call.1} parent=1 // pred_check_branch
      %36 = sbr.rel (0) target = $region17
    $region16: #{tpu_custom_call.1} parent=1 // pred_region
      %37 = dma.done [#allocation4], 128
    $region17: #{tpu_custom_call.1} parent=1 // pred_fallthru
      _
    %38 = vsyncpa [#allocation3], 1
    %39 = vsyncpa [#allocation4], 1

// kernel: tpu_custom_call.1
$region0: #{tpu_custom_call.1}
  #allocation0 [shape = 'u32[]', space=smem, size = 0x4, offset = 0x4, fixed_abs, tag = 'smem constant byte address 0x4 - core index']
  #allocation1 [shape = 'u32[144,128]{1,0:T(1,128)}', space=vmem, size = 0x12000, scoped, tag = 'internal scratch']
  #allocation2 [shape = 's32[1]{0:T(128)S(6)}', space=smem, size = 0x200, scoped, tag = 'scoped memory for tpu_custom_call.1']
  %s0 = inlined_call_operand.<no memory space> [shape: s32[1], index: 0, kind: input, shape index: {}]
  %s1 = inlined_call_operand.hbm [shape: f32[8,128], index: 1, kind: input, shape index: {}]
  %s2 = inlined_call_operand.hbm [shape: f32[8,128], index: 2, kind: output, shape index: {}]
  %s3 = sld [smem:[#allocation0]]
  $region22: #{tpu_custom_call.1} parent=0
    _
  %s5 = ssub.s32 1, %s3
  %s6 = scalar_select 0, %s5, %s3
  %7 = sst [smem:[#allocation2]] %s0
  $region1: #{tpu_custom_call.1} parent=0
    #allocation3 [shape = 'u8[4096]{0}', space=vmem, size = 0x1000, scoped, tag = 'input window, operand 1, single buffered']
    #allocation4 [shape = 's32[1]{0}', space=sflag, size = 0x4, scoped, tag = 'scoped memory for tpu_custom_call.1']
    #allocation5 [shape = 's32[1]{0}', space=sflag, size = 0x4, scoped, tag = 'scoped memory for tpu_custom_call.1']
    #allocation6 [shape = 'u8[4096]{0}', space=vmem, size = 0x1000, scoped, tag = 'output window, operand 0, single buffered']
    %8 = vsyncpa [#allocation4], 0
    %9 = vsyncpa [#allocation5], 0
    // Predicated region
    $region2: #{tpu_custom_call.1} parent=1 // pred_check
      _
    $region3: #{tpu_custom_call.1} parent=1 // pred_check_branch
      %11 = sbr.rel (0) target = $region5
    $region4: #{tpu_custom_call.1} parent=1 // pred_region
      _
    $region5: #{tpu_custom_call.1} parent=1 // pred_fallthru
      _
    // Predicated region
    $region6: #{tpu_custom_call.1} parent=1 // pred_check
      _
    $region7: #{tpu_custom_call.1} parent=1 // pred_check_branch
      %13 = sbr.rel (0) target = $region9
    $region8: #{tpu_custom_call.1} parent=1 // pred_region
      %s15 = ssub.s32 128, 128
      %16 = vsyncadd [#allocation4], %s15
      %s18 = sshll.u32 [#allocation3], 4
      %s19 = int_to_ptr.vmem [resolvable:$true] %s18
      %21 = dma.hbm_to_vmem [thread:$0]  %s1, 128, %s19, [#allocation4]
    $region9: #{tpu_custom_call.1} parent=1 // pred_fallthru
      _
    // Predicated region
    $region10: #{tpu_custom_call.1} parent=1 // pred_check
      _
    $region11: #{tpu_custom_call.1} parent=1 // pred_check_branch
      %23 = sbr.rel (0) target = $region13
    $region12: #{tpu_custom_call.1} parent=1 // pred_region
      %24 = dma.done [#allocation4], 128
    $region13: #{tpu_custom_call.1} parent=1 // pred_fallthru
      _
    %v25 = vld [vmem:[#allocation3] sm:$0xff]
    %s26 = sld [smem:[#allocation2]]
    %s27 = sand.u32 %s26, 127
    %s28 = sand.u32 %s27, 127
    %29 = vrot.lane.b32.xlu0 %v25, %s28
    %v30 = vpop.permute.xlu0 %29
    %31 = vst [vmem:[#allocation6] sm:$0xff] %v30
    // Predicated region
    $region14: #{tpu_custom_call.1} parent=1 // pred_check
      _
    $region15: #{tpu_custom_call.1} parent=1 // pred_check_branch
      %33 = sbr.rel (0) target = $region17
    $region16: #{tpu_custom_call.1} parent=1 // pred_region
      %s35 = ssub.s32 128, 128
      %36 = vsyncadd [#allocation5], %s35
      %s38 = sshll.u32 [#allocation6], 4
      %s39 = int_to_ptr.vmem [resolvable:$true] %s38
      %41 = dma.vmem_to_hbm [thread:$0]  %s39, 128, %s2, [#allocation5]
    $region17: #{tpu_custom_call.1} parent=1 // pred_fallthru
      _
    // Predicated region
    $region18: #{tpu_custom_call.1} parent=1 // pred_check
      _
    $region19: #{tpu_custom_call.1} parent=1 // pred_check_branch
      %43 = sbr.rel (0) target = $region21
    $region20: #{tpu_custom_call.1} parent=1 // pred_region
      %44 = dma.done [#allocation5], 128
    $region21: #{tpu_custom_call.1} parent=1 // pred_fallthru
      _
    %45 = vsyncpa [#allocation4], 1
    %46 = vsyncpa [#allocation5], 1

// kernel: tpu_custom_call.1
$region0: #{tpu_custom_call.1}
  #allocation0 [shape = 'u32[]', space=smem, size = 0x4, offset = 0x4, fixed_abs, tag = 'smem constant byte address 0x4 - core index']
  #allocation1 [shape = 'u32[144,128]{1,0:T(1,128)}', space=vmem, size = 0x12000, scoped, tag = 'internal scratch']
  #allocation9 [shape = 's32[]', space=sflag, size = 0x4, offset = 0, fixed_abs, tag = 'sflag constant byte address 0x0 - dummy sync flag']
  #allocation11 [shape = 's32[]', space=sflag, size = 0x4, offset = 0, fixed_abs, tag = 'sflag constant byte address 0x0 - dummy sync flag']
  #allocation13 [shape = 's32[]', space=sflag, size = 0x4, offset = 0, fixed_abs, tag = 'sflag constant byte address 0x0 - dummy sync flag']
  #allocation15 [shape = 's32[]', space=sflag, size = 0x4, offset = 0, fixed_abs, tag = 'sflag constant byte address 0x0 - dummy sync flag']
  %s0 = inlined_call_operand.hbm [shape: f32[2,4,32,128], index: 0, kind: input, shape index: {}]
  %s1 = inlined_call_operand.hbm [shape: f32[2,4,32,256], index: 1, kind: input, shape index: {}]
  %s2 = inlined_call_operand.hbm [shape: f32[2,4,32,256], index: 2, kind: input, shape index: {}]
  %s3 = inlined_call_operand.hbm [shape: f32[2,2,16,32,128], index: 3, kind: output, shape index: {}]
  %s4 = sld [smem:[#allocation0]]
  $region169: #{tpu_custom_call.1} parent=0
    _
  %s6 = ssub.s32 1, %s4
  %s7 = scalar_select 0, %s6, %s4
  $region1: #{tpu_custom_call.1} parent=0
    #allocation2 [shape = 'u8[65536]{0}', space=vmem, size = 0x10000, scoped, tag = 'input window, operand 0']
    #allocation3 [shape = 's32[2]{0}', space=sflag, size = 0x8, scoped, tag = 'scoped memory for tpu_custom_call.1']
    #allocation4 [shape = 's32[2]{0}', space=sflag, size = 0x8, scoped, tag = 'scoped memory for tpu_custom_call.1']
    #allocation5 [shape = 'u8[131072]{0}', space=vmem, size = 0x20000, scoped, tag = 'input window, operand 1']
    #allocation6 [shape = 's32[2]{0}', space=sflag, size = 0x8, scoped, tag = 'scoped memory for tpu_custom_call.1']
    #allocation7 [shape = 'u8[131072]{0}', space=vmem, size = 0x20000, scoped, tag = 'input window, operand 2']
    #allocation8 [shape = 'u8[524288]{0}', space=vmem, size = 0x80000, scoped, tag = 'output window, operand 0']
    %8 = vsyncpa [#allocation3], 0
    %s9 = scalar_lea.sflag [#allocation3], 1
    %10 = vsyncpa %s9, 0
    %11 = vsyncpa [#allocation6], 0
    %s12 = scalar_lea.sflag [#allocation6], 1
    %13 = vsyncpa %s12, 0
    %14 = vsyncpa [#allocation4], 0
    %s15 = scalar_lea.sflag [#allocation4], 1
    %16 = vsyncpa %s15, 0
    loop: start=0, step=1, limit=6
    $region2: #{tpu_custom_call.1} parent=1 // loop_pre_header
      _
    $region3: #{tpu_custom_call.1} parent=1 // loop_header
      %s18 = sphi 0, %s22
      %p19 = scmp.ge.s32.totalorder %s18, 6
      %s25 = sphi 0, %s44
      %s26 = sphi 0, %s40
      %s27 = sphi 0, %s36
      %s28 = sphi 0, %s25
      %s29 = sphi 0, %s26
      %s30 = sphi 0, %s27
      %s31 = sphi 0, %s28
      %s32 = sphi 0, %s29
      %s33 = sphi 0, %s30
      %s49 = sphi 0, %s51
      %s52 = sphi 0, %s49
      %s53 = sphi 0, %s52
      %s69 = sphi 0, %s53
      %s77 = sphi 0, %s79
      %s80 = sphi 0, %s77
      %s81 = sphi 0, %s80
      %s97 = sphi 0, %s81
      %s105 = sphi 0, %s107
      %s108 = sphi 0, %s105
      %s109 = sphi 0, %s108
      %s125 = sphi 0, %s109
      %s135 = sphi 0, %s137
      %s138 = sphi 0, %s135
      %s139 = sphi 0, %s138
      %s155 = sphi 0, %s139
    $region4: #{tpu_custom_call.1} parent=1 // loop_header_branch
      %21 = sbr.rel (%p19) target = $region8
    $region5: #{tpu_custom_call.1} parent=1 // loop_body
      %s23 = ssub.s32 %s18, 1
      %s24 = ssub.s32 %s18, 2
      %s34 = sadd.s32 1, %s27
      %p35 = scmp.ge.s32.totalorder %s34, 1
      %s36 = scalar_select %p35, 0, %s34
      %s37 = sadd.s32 1, %s26
      %s38 = scalar_select %p35, %s37, %s26
      %p39 = scmp.ge.s32.totalorder %s38, 2
      %s40 = scalar_select %p39, 0, %s38
      %s41 = sadd.s32 1, %s25
      %s42 = scalar_select %p39, %s41, %s25
      %p43 = scmp.ge.s32.totalorder %s42, 2
      %s44 = scalar_select %p43, 0, %s42
      %s45 = ssub.s32 %s25, %s44
      %s46 = ssub.s32 %s26, %s40
      %s47 = sor.u32 %s45, %s46
      %p48 = scmp.eq.s32.totalorder %s47, 0
      %s50 = sadd.s32 %s49, 1
      %s51 = scalar_select %p48, %s49, %s50
      %p54 = pneg %p48
      %p55 = scmp.eq.s32.totalorder %s18, 3
      %p56 = por %p54, %p55
      %p57 = scmp.ne.s32.totalorder %s49, %s52
      %p58 = scmp.eq.s32.totalorder %s18, 0
      %p59 = por %p57, %p58
      %p60 = scmp.ne.s32.totalorder %s49, %s52
      %p61 = scmp.eq.s32.totalorder %s23, 3
      %p62 = por %p60, %p61
      %p63 = scmp.ne.s32.totalorder %s52, %s53
      %p64 = scmp.eq.s32.totalorder %s23, 0
      %p65 = por %p63, %p64
      %p66 = scmp.ne.s32.totalorder %s52, %s53
      %p67 = scmp.eq.s32.totalorder %s24, 3
      %p68 = por %p66, %p67
      %p70 = scmp.ne.s32.totalorder %s53, %s69
      %p71 = scmp.eq.s32.totalorder %s24, 0
      %p72 = por %p70, %p71
      %s73 = ssub.s32 %s25, %s44
      %s74 = ssub.s32 %s26, %s40
      %s75 = sor.u32 %s73, %s74
      %p76 = scmp.eq.s32.totalorder %s75, 0
      %s78 = sadd.s32 %s77, 1
      %s79 = scalar_select %p76, %s77, %s78
      %p82 = pneg %p76
      %p83 = scmp.eq.s32.totalorder %s18, 3
      %p84 = por %p82, %p83
      %p85 = scmp.ne.s32.totalorder %s77, %s80
      %p86 = scmp.eq.s32.totalorder %s18, 0
      %p87 = por %p85, %p86
      %p88 = scmp.ne.s32.totalorder %s77, %s80
      %p89 = scmp.eq.s32.totalorder %s23, 3
      %p90 = por %p88, %p89
      %p91 = scmp.ne.s32.totalorder %s80, %s81
      %p92 = scmp.eq.s32.totalorder %s23, 0
      %p93 = por %p91, %p92
      %p94 = scmp.ne.s32.totalorder %s80, %s81
      %p95 = scmp.eq.s32.totalorder %s24, 3
      %p96 = por %p94, %p95
      %p98 = scmp.ne.s32.totalorder %s81, %s97
      %p99 = scmp.eq.s32.totalorder %s24, 0
      %p100 = por %p98, %p99
      %s101 = ssub.s32 %s25, %s44
      %s102 = ssub.s32 %s26, %s40
      %s103 = sor.u32 %s101, %s102
      %p104 = scmp.eq.s32.totalorder %s103, 0
      %s106 = sadd.s32 %s105, 1
      %s107 = scalar_select %p104, %s105, %s106
      %p110 = pneg %p104
      %p111 = scmp.eq.s32.totalorder %s18, 3
      %p112 = por %p110, %p111
      %p113 = scmp.ne.s32.totalorder %s105, %s108
      %p114 = scmp.eq.s32.totalorder %s18, 0
      %p115 = por %p113, %p114
      %p116 = scmp.ne.s32.totalorder %s105, %s108
      %p117 = scmp.eq.s32.totalorder %s23, 3
      %p118 = por %p116, %p117
      %p119 = scmp.ne.s32.totalorder %s108, %s109
      %p120 = scmp.eq.s32.totalorder %s23, 0
      %p121 = por %p119, %p120
      %p122 = scmp.ne.s32.totalorder %s108, %s109
      %p123 = scmp.eq.s32.totalorder %s24, 3
      %p124 = por %p122, %p123
      %p126 = scmp.ne.s32.totalorder %s109, %s125
      %p127 = scmp.eq.s32.totalorder %s24, 0
      %p128 = por %p126, %p127
      %s129 = ssub.s32 %s25, %s44
      %s130 = ssub.s32 %s27, %s36
      %s131 = sor.u32 %s129, %s130
      %s132 = ssub.s32 %s26, %s40
      %s133 = sor.u32 %s131, %s132
      %p134 = scmp.eq.s32.totalorder %s133, 0
      %s136 = sadd.s32 %s135, 1
      %s137 = scalar_select %p134, %s135, %s136
      %p140 = pneg %p134
      %p141 = scmp.eq.s32.totalorder %s18, 3
      %p142 = por %p140, %p141
      %p143 = scmp.ne.s32.totalorder %s135, %s138
      %p144 = scmp.eq.s32.totalorder %s18, 0
      %p145 = por %p143, %p144
      %p146 = scmp.ne.s32.totalorder %s135, %s138
      %p147 = scmp.eq.s32.totalorder %s23, 3
      %p148 = por %p146, %p147
      %p149 = scmp.ne.s32.totalorder %s138, %s139
      %p150 = scmp.eq.s32.totalorder %s23, 0
      %p151 = por %p149, %p150
      %p152 = scmp.ne.s32.totalorder %s138, %s139
      %p153 = scmp.eq.s32.totalorder %s24, 3
      %p154 = por %p152, %p153
      %p156 = scmp.ne.s32.totalorder %s139, %s155
      %p157 = scmp.eq.s32.totalorder %s24, 0
      %p158 = por %p156, %p157
      %p159 = scmp.le.s32.totalorder 1, %s18
      %p160 = scmp.lt.s32.totalorder %s18, 5
      %p161 = pnand %p159, %p160
      %p162 = pneg %p161
      // Predicated region
      $region9: #{tpu_custom_call.1} parent=5 // pred_check
        _
      $region10: #{tpu_custom_call.1} parent=5 // pred_check_branch
        %164 = sbr.rel (%p161) target = $region12
      $region11: #{tpu_custom_call.1} parent=5 // pred_region
        %s165 = ssub.s32 %s18, 1
      $region12: #{tpu_custom_call.1} parent=5 // pred_fallthru
        _
      %p166 = scmp.lt.s32.totalorder %s18, 4
      // Predicated region
      $region13: #{tpu_custom_call.1} parent=5 // pred_check
        %p167 = pneg %p166
      $region14: #{tpu_custom_call.1} parent=5 // pred_check_branch
        %169 = sbr.rel (%p167) target = $region16
      $region15: #{tpu_custom_call.1} parent=5 // pred_region
        // Predicated region
        $region17: #{tpu_custom_call.1} parent=15 // pred_check
          %p170 = pneg %p59
        $region18: #{tpu_custom_call.1} parent=15 // pred_check_branch
          %172 = sbr.rel (%p170) target = $region20
        $region19: #{tpu_custom_call.1} parent=15 // pred_region
          #allocation10 [shape = 'u32[6]{0}', space=smem, size = 0x18, scoped, tag = 'DMA stride descriptor']
          %s173 = sand.u32 %s49, 1
          %s174 = scalar_lea.sflag [#allocation3], %s173
          %s175 = sand.u32 %s49, 1
          %s176 = smul.addr %s175, 64
          %s177 = scalar_lea.vmem [#allocation2], %s176
          %s178 = smul.u32 2, %s26
          %s180 = ssub.s32 1024, 1024
          %181 = vsyncadd %s174, %s180
          %s182 = smul.addr %s25, 16
          %s183 = sadd.s32 %s178, %s182
          %s184 = smul.addr %s183, 128
          %s185 = scalar_lea.hbm %s0, %s184
          %s187 = sshll.u32 1, 14
          %s188 = sxor.u32 4294967295, %s187
          %s190 = sld [smem:[#allocation0]]
          %s191 = sadd.s32 2, %s190
          %s193 = sshll.u32 7, 26
          %s194 = sxor.u32 4294967295, %s193
          %s195 = sand.u32 0, %s194
          %s196 = sshll.u32 %s191, 26
          %s197 = sor.u32 %s195, %s196
          %s198 = sshll.u32 %s177, 4
          %s199 = int_to_ptr.vmem [resolvable:$true] %s198
          %205 = sst [smem:[#allocation10]] 512
          %s206 = scalar_lea.smem [#allocation10], 1
          %207 = sst [smem:[%s206]] 256
          %s208 = scalar_lea.smem [#allocation10], 2
          %209 = sst [smem:[%s208]] 2
          %s210 = scalar_lea.smem [#allocation10], 3
          %211 = sst [smem:[%s210]] 128
          %s212 = scalar_lea.smem [#allocation10], 4
          %213 = sst [smem:[%s212]] 128
          %s214 = scalar_lea.smem [#allocation10], 5
          %215 = sst [smem:[%s214]] 8
          %217 = dma.general %s185, 1024, %s199, %s174, [#allocation9], [#allocation10], %s197, 0
        $region20: #{tpu_custom_call.1} parent=15 // pred_fallthru
          _
        // Predicated region
        $region21: #{tpu_custom_call.1} parent=15 // pred_check
          %p218 = pneg %p87
        $region22: #{tpu_custom_call.1} parent=15 // pred_check_branch
          %220 = sbr.rel (%p218) target = $region24
        $region23: #{tpu_custom_call.1} parent=15 // pred_region
          #allocation12 [shape = 'u32[6]{0}', space=smem, size = 0x18, scoped, tag = 'DMA stride descriptor']
          %s221 = sand.u32 %s18, 1
          %s222 = scalar_lea.sflag [#allocation6], %s221
          %s223 = sand.u32 %s77, 1
          %s224 = smul.addr %s223, 128
          %s225 = scalar_lea.vmem [#allocation5], %s224
          %s226 = smul.u32 2, %s26
          %s228 = ssub.s32 2048, 2048
          %229 = vsyncadd %s222, %s228
          %s230 = smul.addr %s226, 2
          %s231 = smul.addr %s25, 32
          %s232 = sadd.s32 %s230, %s231
          %s233 = smul.addr %s232, 128
          %s234 = scalar_lea.hbm %s1, %s233
          %s236 = sshll.u32 1, 14
          %s237 = sxor.u32 4294967295, %s236
          %s239 = sld [smem:[#allocation0]]
          %s240 = sadd.s32 2, %s239
          %s242 = sshll.u32 7, 26
          %s243 = sxor.u32 4294967295, %s242
          %s244 = sand.u32 0, %s243
          %s245 = sshll.u32 %s240, 26
          %s246 = sor.u32 %s244, %s245
          %s247 = sshll.u32 %s225, 4
          %s248 = int_to_ptr.vmem [resolvable:$true] %s247
          %254 = sst [smem:[#allocation12]] 1024
          %s255 = scalar_lea.smem [#allocation12], 1
          %256 = sst [smem:[%s255]] 512
          %s257 = scalar_lea.smem [#allocation12], 2
          %258 = sst [smem:[%s257]] 2
          %s259 = scalar_lea.smem [#allocation12], 3
          %260 = sst [smem:[%s259]] 256
          %s261 = scalar_lea.smem [#allocation12], 4
          %262 = sst [smem:[%s261]] 256
          %s263 = scalar_lea.smem [#allocation12], 5
          %264 = sst [smem:[%s263]] 16
          %266 = dma.general %s234, 2048, %s248, %s222, [#allocation11], [#allocation12], %s246, 0
        $region24: #{tpu_custom_call.1} parent=15 // pred_fallthru
          _
        // Predicated region
        $region25: #{tpu_custom_call.1} parent=15 // pred_check
          %p267 = pneg %p115
        $region26: #{tpu_custom_call.1} parent=15 // pred_check_branch
          %269 = sbr.rel (%p267) target = $region28
        $region27: #{tpu_custom_call.1} parent=15 // pred_region
          #allocation14 [shape = 'u32[6]{0}', space=smem, size = 0x18, scoped, tag = 'DMA stride descriptor']
          %s270 = sand.u32 %s18, 1
          %s271 = scalar_lea.sflag [#allocation6], %s270
          %s272 = sand.u32 %s105, 1
          %s273 = smul.addr %s272, 128
          %s274 = scalar_lea.vmem [#allocation7], %s273
          %s275 = smul.u32 2, %s26
          %s277 = ssub.s32 2048, 2048
          %278 = vsyncadd %s271, %s277
          %s279 = smul.addr %s275, 2
          %s280 = smul.addr %s25, 32
          %s281 = sadd.s32 %s279, %s280
          %s282 = smul.addr %s281, 128
          %s283 = scalar_lea.hbm %s2, %s282
          %s285 = sshll.u32 1, 14
          %s286 = sxor.u32 4294967295, %s285
          %s288 = sld [smem:[#allocation0]]
          %s289 = sadd.s32 2, %s288
          %s291 = sshll.u32 7, 26
          %s292 = sxor.u32 4294967295, %s291
          %s293 = sand.u32 0, %s292
          %s294 = sshll.u32 %s289, 26
          %s295 = sor.u32 %s293, %s294
          %s296 = sshll.u32 %s274, 4
          %s297 = int_to_ptr.vmem [resolvable:$true] %s296
          %303 = sst [smem:[#allocation14]] 1024
          %s304 = scalar_lea.smem [#allocation14], 1
          %305 = sst [smem:[%s304]] 512
          %s306 = scalar_lea.smem [#allocation14], 2
          %307 = sst [smem:[%s306]] 2
          %s308 = scalar_lea.smem [#allocation14], 3
          %309 = sst [smem:[%s308]] 256
          %s310 = scalar_lea.smem [#allocation14], 4
          %311 = sst [smem:[%s310]] 256
          %s312 = scalar_lea.smem [#allocation14], 5
          %313 = sst [smem:[%s312]] 16
          %315 = dma.general %s283, 2048, %s297, %s271, [#allocation13], [#allocation14], %s295, 0
        $region28: #{tpu_custom_call.1} parent=15 // pred_fallthru
          _
      $region16: #{tpu_custom_call.1} parent=5 // pred_fallthru
        _
      %p316 = scmp.le.s32.totalorder 1, %s18
      %p317 = scmp.lt.s32.totalorder %s18, 5
      %p318 = pnand %p316, %p317
      %p319 = pneg %p318
      // Predicated region
      $region29: #{tpu_custom_call.1} parent=5 // pred_check
        _
      $region30: #{tpu_custom_call.1} parent=5 // pred_check_branch
        %321 = sbr.rel (%p318) target = $region32
      $region31: #{tpu_custom_call.1} parent=5 // pred_region
        %s322 = ssub.s32 %s18, 1
        %s323 = sand.u32 %s52, 1
        %s324 = scalar_lea.sflag [#allocation3], %s323
        %s325 = sand.u32 %s52, 1
        %s326 = smul.addr %s325, 64
        %s327 = scalar_lea.vmem [#allocation2], %s326
        // Predicated region
        $region33: #{tpu_custom_call.1} parent=31 // pred_check
          %p328 = pneg %p65
        $region34: #{tpu_custom_call.1} parent=31 // pred_check_branch
          %330 = sbr.rel (%p328) target = $region36
        $region35: #{tpu_custom_call.1} parent=31 // pred_region
          %331 = dma.done %s324, 1024
        $region36: #{tpu_custom_call.1} parent=31 // pred_fallthru
          _
        %s332 = sand.u32 %s23, 1
        %s333 = scalar_lea.sflag [#allocation6], %s332
        %s334 = sand.u32 %s80, 1
        %s335 = smul.addr %s334, 128
        %s336 = scalar_lea.vmem [#allocation5], %s335
        // Predicated region
        $region37: #{tpu_custom_call.1} parent=31 // pred_check
          %p337 = pneg %p93
        $region38: #{tpu_custom_call.1} parent=31 // pred_check_branch
          %339 = sbr.rel (%p337) target = $region40
        $region39: #{tpu_custom_call.1} parent=31 // pred_region
          %340 = dma.done %s333, 2048
        $region40: #{tpu_custom_call.1} parent=31 // pred_fallthru
          _
        %s341 = sand.u32 %s23, 1
        %s342 = scalar_lea.sflag [#allocation6], %s341
        %s343 = sand.u32 %s108, 1
        %s344 = smul.addr %s343, 128
        %s345 = scalar_lea.vmem [#allocation7], %s344
        // Predicated region
        $region41: #{tpu_custom_call.1} parent=31 // pred_check
          %p346 = pneg %p121
        $region42: #{tpu_custom_call.1} parent=31 // pred_check_branch
          %348 = sbr.rel (%p346) target = $region44
        $region43: #{tpu_custom_call.1} parent=31 // pred_region
          %349 = dma.done %s342, 2048
        $region44: #{tpu_custom_call.1} parent=31 // pred_fallthru
          _
        %s350 = sand.u32 %s52, 1
        %s351 = scalar_lea.sflag [#allocation3], %s350
        %s352 = sand.u32 %s52, 1
        %s353 = smul.addr %s352, 64
        %s354 = scalar_lea.vmem [#allocation2], %s353
        %p355 = pneg %p65
        %p356 = pneg %p62
        %s357 = sand.u32 %s23, 1
        %s358 = scalar_lea.sflag [#allocation6], %s357
        %s359 = sand.u32 %s80, 1
        %s360 = smul.addr %s359, 128
        %s361 = scalar_lea.vmem [#allocation5], %s360
        %p362 = pneg %p93
        %p363 = pneg %p90
        %s364 = sand.u32 %s23, 1
        %s365 = scalar_lea.sflag [#allocation6], %s364
        %s366 = sand.u32 %s108, 1
        %s367 = smul.addr %s366, 128
        %s368 = scalar_lea.vmem [#allocation7], %s367
        %p369 = pneg %p121
        %p370 = pneg %p118
        %p371 = pneg %p151
        %p372 = pneg %p148
        %s373 = sand.u32 %s138, 1
        %s374 = scalar_lea.sflag [#allocation4], %s373
        %s375 = sand.u32 %s138, 1
        %s376 = smul.addr %s375, 512
        %s377 = scalar_lea.vmem [#allocation8], %s376
        %s378 = smul.u32 2, %s29
        %s379 = smul.u32 2, %s29
        %s380 = smul.u32 2, %s29
        %s381 = smul.u32 16, %s30
        %s382 = smul.u32 2, %s29
        loop: start=0, step=1, limit=2
        $region45: #{tpu_custom_call.1} parent=31 // loop_pre_header
          _
        $region46: #{tpu_custom_call.1} parent=31 // loop_header
          %s384 = sphi 0, %s388
          %p385 = scmp.ge.s32.totalorder %s384, 2
          %v389 = vphi 0.0, %v431
          %v390 = vphi 0.0, %v432
          %v391 = vphi 0.0, %v435
          %v392 = vphi 0.0, %v436
        $region47: #{tpu_custom_call.1} parent=31 // loop_header_branch
          %387 = sbr.rel (%p385) target = $region51
        $region48: #{tpu_custom_call.1} parent=31 // loop_body
          %s393 = smul.u32 %s384, 2
          %s394 = smul.u32 %s393, 16
          %s395 = scalar_lea.vmem %s327, %s394 [#allocation2]
          %v396 = vld [vmem:[%s395] sm:$0xff]
          %v397 = vld [vmem:[%s395 + $0x8] sm:$0xff]
          %s398 = smul.u32 %s393, 4
          %s399 = smul.addr %s398, 8
          %s400 = scalar_lea.vmem %s336, %s399 [#allocation5]
          %v401 = vld [vmem:[%s400 + $0x8] sm:$0xff]
          %v402 = vld [vmem:[%s400 + $0x18] sm:$0xff]
          %s403 = smul.addr %s398, 8
          %s404 = scalar_lea.vmem %s345, %s403 [#allocation7]
          %v405 = vld [vmem:[%s404 + $0x8] sm:$0xff]
          %v406 = vld [vmem:[%s404 + $0x18] sm:$0xff]
          %v407 = vmul.f32 %v396, %v401
          %v408 = vmul.f32 %v397, %v402
          %v409 = vadd.f32 %v389, %v407
          %v410 = vadd.f32 %v390, %v408
          %v411 = vmul.f32 %v396, %v405
          %v412 = vmul.f32 %v397, %v406
          %v413 = vadd.f32 %v391, %v411
          %v414 = vadd.f32 %v392, %v412
          %s415 = sadd.s32 %s393, 1
          %s416 = smul.u32 %s415, 16
          %s417 = scalar_lea.vmem %s327, %s416 [#allocation2]
          %v418 = vld [vmem:[%s417] sm:$0xff]
          %v419 = vld [vmem:[%s417 + $0x8] sm:$0xff]
          %s420 = smul.u32 %s415, 4
          %s421 = smul.addr %s420, 8
          %s422 = scalar_lea.vmem %s336, %s421 [#allocation5]
          %v423 = vld [vmem:[%s422 + $0x8] sm:$0xff]
          %v424 = vld [vmem:[%s422 + $0x18] sm:$0xff]
          %s425 = smul.addr %s420, 8
          %s426 = scalar_lea.vmem %s345, %s425 [#allocation7]
          %v427 = vld [vmem:[%s426 + $0x8] sm:$0xff]
          %v428 = vld [vmem:[%s426 + $0x18] sm:$0xff]
          %v429 = vmul.f32 %v418, %v423
          %v430 = vmul.f32 %v419, %v424
          %v431 = vadd.f32 %v409, %v429
          %v432 = vadd.f32 %v410, %v430
          %v433 = vmul.f32 %v418, %v427
          %v434 = vmul.f32 %v419, %v428
          %v435 = vadd.f32 %v413, %v433
          %v436 = vadd.f32 %v414, %v434
        $region49: #{tpu_custom_call.1} parent=31 // loop_footer
          %s388 = sadd.s32 1, %s384
        $region50: #{tpu_custom_call.1} parent=31 // loop_footer_branch
          %383 = sbr.rel target = $region46
        $region51: #{tpu_custom_call.1} parent=31 // loop_exit
          _
        %v437 = vmul.f32 %v389, 0.25
        %v438 = vmul.f32 %v390, 0.25
        %439 = vst [vmem:[%s377] sm:$0xff] %v437
        %440 = vst [vmem:[%s377 + $0x8] sm:$0xff] %v438
        %v441 = vmul.f32 %v391, 0.25
        %v442 = vmul.f32 %v392, 0.25
        %s443 = scalar_lea.vmem %s377, 256 [#allocation8]
        %444 = vst [vmem:[%s443] sm:$0xff] %v441
        %445 = vst [vmem:[%s443 + $0x8] sm:$0xff] %v442
        loop: start=0, step=1, limit=2
        $region52: #{tpu_custom_call.1} parent=31 // loop_pre_header
          _
        $region53: #{tpu_custom_call.1} parent=31 // loop_header
          %s447 = sphi 0, %s451
          %p448 = scmp.ge.s32.totalorder %s447, 2
          %v452 = vphi 0.0, %v545
          %v453 = vphi 0.0, %v546
          %v454 = vphi 0.0, %v549
          %v455 = vphi 0.0, %v550
        $region54: #{tpu_custom_call.1} parent=31 // loop_header_branch
          %450 = sbr.rel (%p448) target = $region58
        $region55: #{tpu_custom_call.1} parent=31 // loop_body
          %s456 = smul.u32 %s447, 2
          %s457 = smul.u32 %s456, 16
          %s458 = scalar_lea.vmem %s327, %s457 [#allocation2]
          %v459 = vld [vmem:[%s458] sm:$0xff]
          %v460 = vld [vmem:[%s458 + $0x8] sm:$0xff]
          %s461 = smul.u32 %s456, 4
          %s462 = smul.addr %s461, 8
          %s463 = scalar_lea.vmem %s336, %s462 [#allocation5]
          %v464 = vld [vmem:[%s463] sm:$0xff]
          %v465 = vld [vmem:[%s463 + $0x8] sm:$0xff]
          %v466 = vld [vmem:[%s463 + $0x10] sm:$0xff]
          %v467 = vld [vmem:[%s463 + $0x18] sm:$0xff]
          %468 = vrot.lane.b32.xlu0 %v464, 1
          %v469 = vpop.permute.xlu0 %468
          %470 = vrot.lane.b32.xlu0 %v466, 1
          %v471 = vpop.permute.xlu0 %470
          %472 = vrot.lane.b32.xlu0 %v465, 1
          %v473 = vpop.permute.xlu0 %472
          %474 = vrot.lane.b32.xlu0 %v467, 1
          %v475 = vpop.permute.xlu0 %474
          %v476 = vlaneseq
          %v477 = vand.u32 %v476, 127
          %vm478 = vcmp.lt.s32.totalorder %v477, 1
          %v479 = vsel %vm478, %v469, %v473
          %v480 = vsel %vm478, %v471, %v475
          %s481 = smul.addr %s461, 8
          %s482 = scalar_lea.vmem %s345, %s481 [#allocation7]
          %v483 = vld [vmem:[%s482] sm:$0xff]
          %v484 = vld [vmem:[%s482 + $0x8] sm:$0xff]
          %v485 = vld [vmem:[%s482 + $0x10] sm:$0xff]
          %v486 = vld [vmem:[%s482 + $0x18] sm:$0xff]
          %487 = vrot.lane.b32.xlu0 %v483, 1
          %v488 = vpop.permute.xlu0 %487
          %489 = vrot.lane.b32.xlu0 %v485, 1
          %v490 = vpop.permute.xlu0 %489
          %491 = vrot.lane.b32.xlu0 %v484, 1
          %v492 = vpop.permute.xlu0 %491
          %493 = vrot.lane.b32.xlu0 %v486, 1
          %v494 = vpop.permute.xlu0 %493
          %v495 = vsel %vm478, %v488, %v492
          %v496 = vsel %vm478, %v490, %v494
          %v497 = vmul.f32 %v459, %v479
          %v498 = vmul.f32 %v460, %v480
          %v499 = vadd.f32 %v452, %v497
          %v500 = vadd.f32 %v453, %v498
          %v501 = vmul.f32 %v459, %v495
          %v502 = vmul.f32 %v460, %v496
          %v503 = vadd.f32 %v454, %v501
          %v504 = vadd.f32 %v455, %v502
          %s505 = sadd.s32 %s456, 1
          %s506 = smul.u32 %s505, 16
          %s507 = scalar_lea.vmem %s327, %s506 [#allocation2]
          %v508 = vld [vmem:[%s507] sm:$0xff]
          %v509 = vld [vmem:[%s507 + $0x8] sm:$0xff]
          %s510 = smul.u32 %s505, 4
          %s511 = smul.addr %s510, 8
          %s512 = scalar_lea.vmem %s336, %s511 [#allocation5]
          %v513 = vld [vmem:[%s512] sm:$0xff]
          %v514 = vld [vmem:[%s512 + $0x8] sm:$0xff]
          %v515 = vld [vmem:[%s512 + $0x10] sm:$0xff]
          %v516 = vld [vmem:[%s512 + $0x18] sm:$0xff]
          %517 = vrot.lane.b32.xlu0 %v513, 1
          %v518 = vpop.permute.xlu0 %517
          %519 = vrot.lane.b32.xlu0 %v515, 1
          %v520 = vpop.permute.xlu0 %519
          %521 = vrot.lane.b32.xlu0 %v514, 1
          %v522 = vpop.permute.xlu0 %521
          %523 = vrot.lane.b32.xlu0 %v516, 1
          %v524 = vpop.permute.xlu0 %523
          %v525 = vsel %vm478, %v518, %v522
          %v526 = vsel %vm478, %v520, %v524
          %s527 = smul.addr %s510, 8
          %s528 = scalar_lea.vmem %s345, %s527 [#allocation7]
          %v529 = vld [vmem:[%s528] sm:$0xff]
          %v530 = vld [vmem:[%s528 + $0x8] sm:$0xff]
          %v531 = vld [vmem:[%s528 + $0x10] sm:$0xff]
          %v532 = vld [vmem:[%s528 + $0x18] sm:$0xff]
          %533 = vrot.lane.b32.xlu0 %v529, 1
          %v534 = vpop.permute.xlu0 %533
          %535 = vrot.lane.b32.xlu0 %v531, 1
          %v536 = vpop.permute.xlu0 %535
          %537 = vrot.lane.b32.xlu0 %v530, 1
          %v538 = vpop.permute.xlu0 %537
          %539 = vrot.lane.b32.xlu0 %v532, 1
          %v540 = vpop.permute.xlu0 %539
          %v541 = vsel %vm478, %v534, %v538
          %v542 = vsel %vm478, %v536, %v540
          %v543 = vmul.f32 %v508, %v525
          %v544 = vmul.f32 %v509, %v526
          %v545 = vadd.f32 %v499, %v543
          %v546 = vadd.f32 %v500, %v544
          %v547 = vmul.f32 %v508, %v541
          %v548 = vmul.f32 %v509, %v542
          %v549 = vadd.f32 %v503, %v547
          %v550 = vadd.f32 %v504, %v548
        $region56: #{tpu_custom_call.1} parent=31 // loop_footer
          %s451 = sadd.s32 1, %s447
        $region57: #{tpu_custom_call.1} parent=31 // loop_footer_branch
          %446 = sbr.rel target = $region53
        $region58: #{tpu_custom_call.1} parent=31 // loop_exit
          _
        %v551 = vmul.f32 %v452, 0.25
        %v552 = vmul.f32 %v453, 0.25
        %s553 = scalar_lea.vmem %s377, 16 [#allocation8]
        %554 = vst [vmem:[%s553] sm:$0xff] %v551
        %555 = vst [vmem:[%s553 + $0x8] sm:$0xff] %v552
        %v556 = vmul.f32 %v454, 0.25
        %v557 = vmul.f32 %v455, 0.25
        %s558 = scalar_lea.vmem %s377, 272 [#allocation8]
        %559 = vst [vmem:[%s558] sm:$0xff] %v556
        %560 = vst [vmem:[%s558 + $0x8] sm:$0xff] %v557
        loop: start=0, step=1, limit=2
        $region59: #{tpu_custom_call.1} parent=31 // loop_pre_header
          _
        $region60: #{tpu_custom_call.1} parent=31 // loop_header
          %s562 = sphi 0, %s566
          %p563 = scmp.ge.s32.totalorder %s562, 2
          %v567 = vphi 0.0, %v660
          %v568 = vphi 0.0, %v661
          %v569 = vphi 0.0, %v664
          %v570 = vphi 0.0, %v665
        $region61: #{tpu_custom_call.1} parent=31 // loop_header_branch
          %565 = sbr.rel (%p563) target = $region65
        $region62: #{tpu_custom_call.1} parent=31 // loop_body
          %s571 = smul.u32 %s562, 2
          %s572 = smul.u32 %s571, 16
          %s573 = scalar_lea.vmem %s327, %s572 [#allocation2]
          %v574 = vld [vmem:[%s573] sm:$0xff]
          %v575 = vld [vmem:[%s573 + $0x8] sm:$0xff]
          %s576 = smul.u32 %s571, 4
          %s577 = smul.addr %s576, 8
          %s578 = scalar_lea.vmem %s336, %s577 [#allocation5]
          %v579 = vld [vmem:[%s578] sm:$0xff]
          %v580 = vld [vmem:[%s578 + $0x8] sm:$0xff]
          %v581 = vld [vmem:[%s578 + $0x10] sm:$0xff]
          %v582 = vld [vmem:[%s578 + $0x18] sm:$0xff]
          %583 = vrot.lane.b32.xlu0 %v579, 2
          %v584 = vpop.permute.xlu0 %583
          %585 = vrot.lane.b32.xlu0 %v581, 2
          %v586 = vpop.permute.xlu0 %585
          %587 = vrot.lane.b32.xlu0 %v580, 2
          %v588 = vpop.permute.xlu0 %587
          %589 = vrot.lane.b32.xlu0 %v582, 2
          %v590 = vpop.permute.xlu0 %589
          %v591 = vlaneseq
          %v592 = vand.u32 %v591, 127
          %vm593 = vcmp.lt.s32.totalorder %v592, 2
          %v594 = vsel %vm593, %v584, %v588
          %v595 = vsel %vm593, %v586, %v590
          %s596 = smul.addr %s576, 8
          %s597 = scalar_lea.vmem %s345, %s596 [#allocation7]
          %v598 = vld [vmem:[%s597] sm:$0xff]
          %v599 = vld [vmem:[%s597 + $0x8] sm:$0xff]
          %v600 = vld [vmem:[%s597 + $0x10] sm:$0xff]
          %v601 = vld [vmem:[%s597 + $0x18] sm:$0xff]
          %602 = vrot.lane.b32.xlu0 %v598, 2
          %v603 = vpop.permute.xlu0 %602
          %604 = vrot.lane.b32.xlu0 %v600, 2
          %v605 = vpop.permute.xlu0 %604
          %606 = vrot.lane.b32.xlu0 %v599, 2
          %v607 = vpop.permute.xlu0 %606
          %608 = vrot.lane.b32.xlu0 %v601, 2
          %v609 = vpop.permute.xlu0 %608
          %v610 = vsel %vm593, %v603, %v607
          %v611 = vsel %vm593, %v605, %v609
          %v612 = vmul.f32 %v574, %v594
          %v613 = vmul.f32 %v575, %v595
          %v614 = vadd.f32 %v567, %v612
          %v615 = vadd.f32 %v568, %v613
          %v616 = vmul.f32 %v574, %v610
          %v617 = vmul.f32 %v575, %v611
          %v618 = vadd.f32 %v569, %v616
          %v619 = vadd.f32 %v570, %v617
          %s620 = sadd.s32 %s571, 1
          %s621 = smul.u32 %s620, 16
          %s622 = scalar_lea.vmem %s327, %s621 [#allocation2]
          %v623 = vld [vmem:[%s622] sm:$0xff]
          %v624 = vld [vmem:[%s622 + $0x8] sm:$0xff]
          %s625 = smul.u32 %s620, 4
          %s626 = smul.addr %s625, 8
          %s627 = scalar_lea.vmem %s336, %s626 [#allocation5]
          %v628 = vld [vmem:[%s627] sm:$0xff]
          %v629 = vld [vmem:[%s627 + $0x8] sm:$0xff]
          %v630 = vld [vmem:[%s627 + $0x10] sm:$0xff]
          %v631 = vld [vmem:[%s627 + $0x18] sm:$0xff]
          %632 = vrot.lane.b32.xlu0 %v628, 2
          %v633 = vpop.permute.xlu0 %632
          %634 = vrot.lane.b32.xlu0 %v630, 2
          %v635 = vpop.permute.xlu0 %634
          %636 = vrot.lane.b32.xlu0 %v629, 2
          %v637 = vpop.permute.xlu0 %636
          %638 = vrot.lane.b32.xlu0 %v631, 2
          %v639 = vpop.permute.xlu0 %638
          %v640 = vsel %vm593, %v633, %v637
          %v641 = vsel %vm593, %v635, %v639
          %s642 = smul.addr %s625, 8
          %s643 = scalar_lea.vmem %s345, %s642 [#allocation7]
          %v644 = vld [vmem:[%s643] sm:$0xff]
          %v645 = vld [vmem:[%s643 + $0x8] sm:$0xff]
          %v646 = vld [vmem:[%s643 + $0x10] sm:$0xff]
          %v647 = vld [vmem:[%s643 + $0x18] sm:$0xff]
          %648 = vrot.lane.b32.xlu0 %v644, 2
          %v649 = vpop.permute.xlu0 %648
          %650 = vrot.lane.b32.xlu0 %v646, 2
          %v651 = vpop.permute.xlu0 %650
          %652 = vrot.lane.b32.xlu0 %v645, 2
          %v653 = vpop.permute.xlu0 %652
          %654 = vrot.lane.b32.xlu0 %v647, 2
          %v655 = vpop.permute.xlu0 %654
          %v656 = vsel %vm593, %v649, %v653
          %v657 = vsel %vm593, %v651, %v655
          %v658 = vmul.f32 %v623, %v640
          %v659 = vmul.f32 %v624, %v641
          %v660 = vadd.f32 %v614, %v658
          %v661 = vadd.f32 %v615, %v659
          %v662 = vmul.f32 %v623, %v656
          %v663 = vmul.f32 %v624, %v657
          %v664 = vadd.f32 %v618, %v662
          %v665 = vadd.f32 %v619, %v663
        $region63: #{tpu_custom_call.1} parent=31 // loop_footer
          %s566 = sadd.s32 1, %s562
        $region64: #{tpu_custom_call.1} parent=31 // loop_footer_branch
          %561 = sbr.rel target = $region60
        $region65: #{tpu_custom_call.1} parent=31 // loop_exit
          _
        %v666 = vmul.f32 %v567, 0.25
        %v667 = vmul.f32 %v568, 0.25
        %s668 = scalar_lea.vmem %s377, 32 [#allocation8]
        %669 = vst [vmem:[%s668] sm:$0xff] %v666
        %670 = vst [vmem:[%s668 + $0x8] sm:$0xff] %v667
        %v671 = vmul.f32 %v569, 0.25
        %v672 = vmul.f32 %v570, 0.25
        %s673 = scalar_lea.vmem %s377, 288 [#allocation8]
        %674 = vst [vmem:[%s673] sm:$0xff] %v671
        %675 = vst [vmem:[%s673 + $0x8] sm:$0xff] %v672
        loop: start=0, step=1, limit=2
        $region66: #{tpu_custom_call.1} parent=31 // loop_pre_header
          _
        $region67: #{tpu_custom_call.1} parent=31 // loop_header
          %s677 = sphi 0, %s681
          %p678 = scmp.ge.s32.totalorder %s677, 2
          %v682 = vphi 0.0, %v775
          %v683 = vphi 0.0, %v776
          %v684 = vphi 0.0, %v779
          %v685 = vphi 0.0, %v780
        $region68: #{tpu_custom_call.1} parent=31 // loop_header_branch
          %680 = sbr.rel (%p678) target = $region72
        $region69: #{tpu_custom_call.1} parent=31 // loop_body
          %s686 = smul.u32 %s677, 2
          %s687 = smul.u32 %s686, 16
          %s688 = scalar_lea.vmem %s327, %s687 [#allocation2]
          %v689 = vld [vmem:[%s688] sm:$0xff]
          %v690 = vld [vmem:[%s688 + $0x8] sm:$0xff]
          %s691 = smul.u32 %s686, 4
          %s692 = smul.addr %s691, 8
          %s693 = scalar_lea.vmem %s336, %s692 [#allocation5]
          %v694 = vld [vmem:[%s693] sm:$0xff]
          %v695 = vld [vmem:[%s693 + $0x8] sm:$0xff]
          %v696 = vld [vmem:[%s693 + $0x10] sm:$0xff]
          %v697 = vld [vmem:[%s693 + $0x18] sm:$0xff]
          %698 = vrot.lane.b32.xlu0 %v694, 3
          %v699 = vpop.permute.xlu0 %698
          %700 = vrot.lane.b32.xlu0 %v696, 3
          %v701 = vpop.permute.xlu0 %700
          %702 = vrot.lane.b32.xlu0 %v695, 3
          %v703 = vpop.permute.xlu0 %702
          %704 = vrot.lane.b32.xlu0 %v697, 3
          %v705 = vpop.permute.xlu0 %704
          %v706 = vlaneseq
          %v707 = vand.u32 %v706, 127
          %vm708 = vcmp.lt.s32.totalorder %v707, 3
          %v709 = vsel %vm708, %v699, %v703
          %v710 = vsel %vm708, %v701, %v705
          %s711 = smul.addr %s691, 8
          %s712 = scalar_lea.vmem %s345, %s711 [#allocation7]
          %v713 = vld [vmem:[%s712] sm:$0xff]
          %v714 = vld [vmem:[%s712 + $0x8] sm:$0xff]
          %v715 = vld [vmem:[%s712 + $0x10] sm:$0xff]
          %v716 = vld [vmem:[%s712 + $0x18] sm:$0xff]
          %717 = vrot.lane.b32.xlu0 %v713, 3
          %v718 = vpop.permute.xlu0 %717
          %719 = vrot.lane.b32.xlu0 %v715, 3
          %v720 = vpop.permute.xlu0 %719
          %721 = vrot.lane.b32.xlu0 %v714, 3
          %v722 = vpop.permute.xlu0 %721
          %723 = vrot.lane.b32.xlu0 %v716, 3
          %v724 = vpop.permute.xlu0 %723
          %v725 = vsel %vm708, %v718, %v722
          %v726 = vsel %vm708, %v720, %v724
          %v727 = vmul.f32 %v689, %v709
          %v728 = vmul.f32 %v690, %v710
          %v729 = vadd.f32 %v682, %v727
          %v730 = vadd.f32 %v683, %v728
          %v731 = vmul.f32 %v689, %v725
          %v732 = vmul.f32 %v690, %v726
          %v733 = vadd.f32 %v684, %v731
          %v734 = vadd.f32 %v685, %v732
          %s735 = sadd.s32 %s686, 1
          %s736 = smul.u32 %s735, 16
          %s737 = scalar_lea.vmem %s327, %s736 [#allocation2]
          %v738 = vld [vmem:[%s737] sm:$0xff]
          %v739 = vld [vmem:[%s737 + $0x8] sm:$0xff]
          %s740 = smul.u32 %s735, 4
          %s741 = smul.addr %s740, 8
          %s742 = scalar_lea.vmem %s336, %s741 [#allocation5]
          %v743 = vld [vmem:[%s742] sm:$0xff]
          %v744 = vld [vmem:[%s742 + $0x8] sm:$0xff]
          %v745 = vld [vmem:[%s742 + $0x10] sm:$0xff]
          %v746 = vld [vmem:[%s742 + $0x18] sm:$0xff]
          %747 = vrot.lane.b32.xlu0 %v743, 3
          %v748 = vpop.permute.xlu0 %747
          %749 = vrot.lane.b32.xlu0 %v745, 3
          %v750 = vpop.permute.xlu0 %749
          %751 = vrot.lane.b32.xlu0 %v744, 3
          %v752 = vpop.permute.xlu0 %751
          %753 = vrot.lane.b32.xlu0 %v746, 3
          %v754 = vpop.permute.xlu0 %753
          %v755 = vsel %vm708, %v748, %v752
          %v756 = vsel %vm708, %v750, %v754
          %s757 = smul.addr %s740, 8
          %s758 = scalar_lea.vmem %s345, %s757 [#allocation7]
          %v759 = vld [vmem:[%s758] sm:$0xff]
          %v760 = vld [vmem:[%s758 + $0x8] sm:$0xff]
          %v761 = vld [vmem:[%s758 + $0x10] sm:$0xff]
          %v762 = vld [vmem:[%s758 + $0x18] sm:$0xff]
          %763 = vrot.lane.b32.xlu0 %v759, 3
          %v764 = vpop.permute.xlu0 %763
          %765 = vrot.lane.b32.xlu0 %v761, 3
          %v766 = vpop.permute.xlu0 %765
          %767 = vrot.lane.b32.xlu0 %v760, 3
          %v768 = vpop.permute.xlu0 %767
          %769 = vrot.lane.b32.xlu0 %v762, 3
          %v770 = vpop.permute.xlu0 %769
          %v771 = vsel %vm708, %v764, %v768
          %v772 = vsel %vm708, %v766, %v770
          %v773 = vmul.f32 %v738, %v755
          %v774 = vmul.f32 %v739, %v756
          %v775 = vadd.f32 %v729, %v773
          %v776 = vadd.f32 %v730, %v774
          %v777 = vmul.f32 %v738, %v771
          %v778 = vmul.f32 %v739, %v772
          %v779 = vadd.f32 %v733, %v777
          %v780 = vadd.f32 %v734, %v778
        $region70: #{tpu_custom_call.1} parent=31 // loop_footer
          %s681 = sadd.s32 1, %s677
        $region71: #{tpu_custom_call.1} parent=31 // loop_footer_branch
          %676 = sbr.rel target = $region67
        $region72: #{tpu_custom_call.1} parent=31 // loop_exit
          _
        %v781 = vmul.f32 %v682, 0.25
        %v782 = vmul.f32 %v683, 0.25
        %s783 = scalar_lea.vmem %s377, 48 [#allocation8]
        %784 = vst [vmem:[%s783] sm:$0xff] %v781
        %785 = vst [vmem:[%s783 + $0x8] sm:$0xff] %v782
        %v786 = vmul.f32 %v684, 0.25
        %v787 = vmul.f32 %v685, 0.25
        %s788 = scalar_lea.vmem %s377, 304 [#allocation8]
        %789 = vst [vmem:[%s788] sm:$0xff] %v786
        %790 = vst [vmem:[%s788 + $0x8] sm:$0xff] %v787
        loop: start=0, step=1, limit=2
        $region73: #{tpu_custom_call.1} parent=31 // loop_pre_header
          _
        $region74: #{tpu_custom_call.1} parent=31 // loop_header
          %s792 = sphi 0, %s796
          %p793 = scmp.ge.s32.totalorder %s792, 2
          %v797 = vphi 0.0, %v890
          %v798 = vphi 0.0, %v891
          %v799 = vphi 0.0, %v894
          %v800 = vphi 0.0, %v895
        $region75: #{tpu_custom_call.1} parent=31 // loop_header_branch
          %795 = sbr.rel (%p793) target = $region79
        $region76: #{tpu_custom_call.1} parent=31 // loop_body
          %s801 = smul.u32 %s792, 2
          %s802 = smul.u32 %s801, 16
          %s803 = scalar_lea.vmem %s327, %s802 [#allocation2]
          %v804 = vld [vmem:[%s803] sm:$0xff]
          %v805 = vld [vmem:[%s803 + $0x8] sm:$0xff]
          %s806 = smul.u32 %s801, 4
          %s807 = smul.addr %s806, 8
          %s808 = scalar_lea.vmem %s336, %s807 [#allocation5]
          %v809 = vld [vmem:[%s808] sm:$0xff]
          %v810 = vld [vmem:[%s808 + $0x8] sm:$0xff]
          %v811 = vld [vmem:[%s808 + $0x10] sm:$0xff]
          %v812 = vld [vmem:[%s808 + $0x18] sm:$0xff]
          %813 = vrot.lane.b32.xlu0 %v809, 4
          %v814 = vpop.permute.xlu0 %813
          %815 = vrot.lane.b32.xlu0 %v811, 4
          %v816 = vpop.permute.xlu0 %815
          %817 = vrot.lane.b32.xlu0 %v810, 4
          %v818 = vpop.permute.xlu0 %817
          %819 = vrot.lane.b32.xlu0 %v812, 4
          %v820 = vpop.permute.xlu0 %819
          %v821 = vlaneseq
          %v822 = vand.u32 %v821, 127
          %vm823 = vcmp.lt.s32.totalorder %v822, 4
          %v824 = vsel %vm823, %v814, %v818
          %v825 = vsel %vm823, %v816, %v820
          %s826 = smul.addr %s806, 8
          %s827 = scalar_lea.vmem %s345, %s826 [#allocation7]
          %v828 = vld [vmem:[%s827] sm:$0xff]
          %v829 = vld [vmem:[%s827 + $0x8] sm:$0xff]
          %v830 = vld [vmem:[%s827 + $0x10] sm:$0xff]
          %v831 = vld [vmem:[%s827 + $0x18] sm:$0xff]
          %832 = vrot.lane.b32.xlu0 %v828, 4
          %v833 = vpop.permute.xlu0 %832
          %834 = vrot.lane.b32.xlu0 %v830, 4
          %v835 = vpop.permute.xlu0 %834
          %836 = vrot.lane.b32.xlu0 %v829, 4
          %v837 = vpop.permute.xlu0 %836
          %838 = vrot.lane.b32.xlu0 %v831, 4
          %v839 = vpop.permute.xlu0 %838
          %v840 = vsel %vm823, %v833, %v837
          %v841 = vsel %vm823, %v835, %v839
          %v842 = vmul.f32 %v804, %v824
          %v843 = vmul.f32 %v805, %v825
          %v844 = vadd.f32 %v797, %v842
          %v845 = vadd.f32 %v798, %v843
          %v846 = vmul.f32 %v804, %v840
          %v847 = vmul.f32 %v805, %v841
          %v848 = vadd.f32 %v799, %v846
          %v849 = vadd.f32 %v800, %v847
          %s850 = sadd.s32 %s801, 1
          %s851 = smul.u32 %s850, 16
          %s852 = scalar_lea.vmem %s327, %s851 [#allocation2]
          %v853 = vld [vmem:[%s852] sm:$0xff]
          %v854 = vld [vmem:[%s852 + $0x8] sm:$0xff]
          %s855 = smul.u32 %s850, 4
          %s856 = smul.addr %s855, 8
          %s857 = scalar_lea.vmem %s336, %s856 [#allocation5]
          %v858 = vld [vmem:[%s857] sm:$0xff]
          %v859 = vld [vmem:[%s857 + $0x8] sm:$0xff]
          %v860 = vld [vmem:[%s857 + $0x10] sm:$0xff]
          %v861 = vld [vmem:[%s857 + $0x18] sm:$0xff]
          %862 = vrot.lane.b32.xlu0 %v858, 4
          %v863 = vpop.permute.xlu0 %862
          %864 = vrot.lane.b32.xlu0 %v860, 4
          %v865 = vpop.permute.xlu0 %864
          %866 = vrot.lane.b32.xlu0 %v859, 4
          %v867 = vpop.permute.xlu0 %866
          %868 = vrot.lane.b32.xlu0 %v861, 4
          %v869 = vpop.permute.xlu0 %868
          %v870 = vsel %vm823, %v863, %v867
          %v871 = vsel %vm823, %v865, %v869
          %s872 = smul.addr %s855, 8
          %s873 = scalar_lea.vmem %s345, %s872 [#allocation7]
          %v874 = vld [vmem:[%s873] sm:$0xff]
          %v875 = vld [vmem:[%s873 + $0x8] sm:$0xff]
          %v876 = vld [vmem:[%s873 + $0x10] sm:$0xff]
          %v877 = vld [vmem:[%s873 + $0x18] sm:$0xff]
          %878 = vrot.lane.b32.xlu0 %v874, 4
          %v879 = vpop.permute.xlu0 %878
          %880 = vrot.lane.b32.xlu0 %v876, 4
          %v881 = vpop.permute.xlu0 %880
          %882 = vrot.lane.b32.xlu0 %v875, 4
          %v883 = vpop.permute.xlu0 %882
          %884 = vrot.lane.b32.xlu0 %v877, 4
          %v885 = vpop.permute.xlu0 %884
          %v886 = vsel %vm823, %v879, %v883
          %v887 = vsel %vm823, %v881, %v885
          %v888 = vmul.f32 %v853, %v870
          %v889 = vmul.f32 %v854, %v871
          %v890 = vadd.f32 %v844, %v888
          %v891 = vadd.f32 %v845, %v889
          %v892 = vmul.f32 %v853, %v886
          %v893 = vmul.f32 %v854, %v887
          %v894 = vadd.f32 %v848, %v892
          %v895 = vadd.f32 %v849, %v893
        $region77: #{tpu_custom_call.1} parent=31 // loop_footer
          %s796 = sadd.s32 1, %s792
        $region78: #{tpu_custom_call.1} parent=31 // loop_footer_branch
          %791 = sbr.rel target = $region74
        $region79: #{tpu_custom_call.1} parent=31 // loop_exit
          _
        %v896 = vmul.f32 %v797, 0.25
        %v897 = vmul.f32 %v798, 0.25
        %s898 = scalar_lea.vmem %s377, 64 [#allocation8]
        %899 = vst [vmem:[%s898] sm:$0xff] %v896
        %900 = vst [vmem:[%s898 + $0x8] sm:$0xff] %v897
        %v901 = vmul.f32 %v799, 0.25
        %v902 = vmul.f32 %v800, 0.25
        %s903 = scalar_lea.vmem %s377, 320 [#allocation8]
        %904 = vst [vmem:[%s903] sm:$0xff] %v901
        %905 = vst [vmem:[%s903 + $0x8] sm:$0xff] %v902
        loop: start=0, step=1, limit=2
        $region80: #{tpu_custom_call.1} parent=31 // loop_pre_header
          _
        $region81: #{tpu_custom_call.1} parent=31 // loop_header
          %s907 = sphi 0, %s911
          %p908 = scmp.ge.s32.totalorder %s907, 2
          %v912 = vphi 0.0, %v1005
          %v913 = vphi 0.0, %v1006
          %v914 = vphi 0.0, %v1009
          %v915 = vphi 0.0, %v1010
        $region82: #{tpu_custom_call.1} parent=31 // loop_header_branch
          %910 = sbr.rel (%p908) target = $region86
        $region83: #{tpu_custom_call.1} parent=31 // loop_body
          %s916 = smul.u32 %s907, 2
          %s917 = smul.u32 %s916, 16
          %s918 = scalar_lea.vmem %s327, %s917 [#allocation2]
          %v919 = vld [vmem:[%s918] sm:$0xff]
          %v920 = vld [vmem:[%s918 + $0x8] sm:$0xff]
          %s921 = smul.u32 %s916, 4
          %s922 = smul.addr %s921, 8
          %s923 = scalar_lea.vmem %s336, %s922 [#allocation5]
          %v924 = vld [vmem:[%s923] sm:$0xff]
          %v925 = vld [vmem:[%s923 + $0x8] sm:$0xff]
          %v926 = vld [vmem:[%s923 + $0x10] sm:$0xff]
          %v927 = vld [vmem:[%s923 + $0x18] sm:$0xff]
          %928 = vrot.lane.b32.xlu0 %v924, 5
          %v929 = vpop.permute.xlu0 %928
          %930 = vrot.lane.b32.xlu0 %v926, 5
          %v931 = vpop.permute.xlu0 %930
          %932 = vrot.lane.b32.xlu0 %v925, 5
          %v933 = vpop.permute.xlu0 %932
          %934 = vrot.lane.b32.xlu0 %v927, 5
          %v935 = vpop.permute.xlu0 %934
          %v936 = vlaneseq
          %v937 = vand.u32 %v936, 127
          %vm938 = vcmp.lt.s32.totalorder %v937, 5
          %v939 = vsel %vm938, %v929, %v933
          %v940 = vsel %vm938, %v931, %v935
          %s941 = smul.addr %s921, 8
          %s942 = scalar_lea.vmem %s345, %s941 [#allocation7]
          %v943 = vld [vmem:[%s942] sm:$0xff]
          %v944 = vld [vmem:[%s942 + $0x8] sm:$0xff]
          %v945 = vld [vmem:[%s942 + $0x10] sm:$0xff]
          %v946 = vld [vmem:[%s942 + $0x18] sm:$0xff]
          %947 = vrot.lane.b32.xlu0 %v943, 5
          %v948 = vpop.permute.xlu0 %947
          %949 = vrot.lane.b32.xlu0 %v945, 5
          %v950 = vpop.permute.xlu0 %949
          %951 = vrot.lane.b32.xlu0 %v944, 5
          %v952 = vpop.permute.xlu0 %951
          %953 = vrot.lane.b32.xlu0 %v946, 5
          %v954 = vpop.permute.xlu0 %953
          %v955 = vsel %vm938, %v948, %v952
          %v956 = vsel %vm938, %v950, %v954
          %v957 = vmul.f32 %v919, %v939
          %v958 = vmul.f32 %v920, %v940
          %v959 = vadd.f32 %v912, %v957
          %v960 = vadd.f32 %v913, %v958
          %v961 = vmul.f32 %v919, %v955
          %v962 = vmul.f32 %v920, %v956
          %v963 = vadd.f32 %v914, %v961
          %v964 = vadd.f32 %v915, %v962
          %s965 = sadd.s32 %s916, 1
          %s966 = smul.u32 %s965, 16
          %s967 = scalar_lea.vmem %s327, %s966 [#allocation2]
          %v968 = vld [vmem:[%s967] sm:$0xff]
          %v969 = vld [vmem:[%s967 + $0x8] sm:$0xff]
          %s970 = smul.u32 %s965, 4
          %s971 = smul.addr %s970, 8
          %s972 = scalar_lea.vmem %s336, %s971 [#allocation5]
          %v973 = vld [vmem:[%s972] sm:$0xff]
          %v974 = vld [vmem:[%s972 + $0x8] sm:$0xff]
          %v975 = vld [vmem:[%s972 + $0x10] sm:$0xff]
          %v976 = vld [vmem:[%s972 + $0x18] sm:$0xff]
          %977 = vrot.lane.b32.xlu0 %v973, 5
          %v978 = vpop.permute.xlu0 %977
          %979 = vrot.lane.b32.xlu0 %v975, 5
          %v980 = vpop.permute.xlu0 %979
          %981 = vrot.lane.b32.xlu0 %v974, 5
          %v982 = vpop.permute.xlu0 %981
          %983 = vrot.lane.b32.xlu0 %v976, 5
          %v984 = vpop.permute.xlu0 %983
          %v985 = vsel %vm938, %v978, %v982
          %v986 = vsel %vm938, %v980, %v984
          %s987 = smul.addr %s970, 8
          %s988 = scalar_lea.vmem %s345, %s987 [#allocation7]
          %v989 = vld [vmem:[%s988] sm:$0xff]
          %v990 = vld [vmem:[%s988 + $0x8] sm:$0xff]
          %v991 = vld [vmem:[%s988 + $0x10] sm:$0xff]
          %v992 = vld [vmem:[%s988 + $0x18] sm:$0xff]
          %993 = vrot.lane.b32.xlu0 %v989, 5
          %v994 = vpop.permute.xlu0 %993
          %995 = vrot.lane.b32.xlu0 %v991, 5
          %v996 = vpop.permute.xlu0 %995
          %997 = vrot.lane.b32.xlu0 %v990, 5
          %v998 = vpop.permute.xlu0 %997
          %999 = vrot.lane.b32.xlu0 %v992, 5
          %v1000 = vpop.permute.xlu0 %999
          %v1001 = vsel %vm938, %v994, %v998
          %v1002 = vsel %vm938, %v996, %v1000
          %v1003 = vmul.f32 %v968, %v985
          %v1004 = vmul.f32 %v969, %v986
          %v1005 = vadd.f32 %v959, %v1003
          %v1006 = vadd.f32 %v960, %v1004
          %v1007 = vmul.f32 %v968, %v1001
          %v1008 = vmul.f32 %v969, %v1002
          %v1009 = vadd.f32 %v963, %v1007
          %v1010 = vadd.f32 %v964, %v1008
        $region84: #{tpu_custom_call.1} parent=31 // loop_footer
          %s911 = sadd.s32 1, %s907
        $region85: #{tpu_custom_call.1} parent=31 // loop_footer_branch
          %906 = sbr.rel target = $region81
        $region86: #{tpu_custom_call.1} parent=31 // loop_exit
          _
        %v1011 = vmul.f32 %v912, 0.25
        %v1012 = vmul.f32 %v913, 0.25
        %s1013 = scalar_lea.vmem %s377, 80 [#allocation8]
        %1014 = vst [vmem:[%s1013] sm:$0xff] %v1011
        %1015 = vst [vmem:[%s1013 + $0x8] sm:$0xff] %v1012
        %v1016 = vmul.f32 %v914, 0.25
        %v1017 = vmul.f32 %v915, 0.25
        %s1018 = scalar_lea.vmem %s377, 336 [#allocation8]
        %1019 = vst [vmem:[%s1018] sm:$0xff] %v1016
        %1020 = vst [vmem:[%s1018 + $0x8] sm:$0xff] %v1017
        loop: start=0, step=1, limit=2
        $region87: #{tpu_custom_call.1} parent=31 // loop_pre_header
          _
        $region88: #{tpu_custom_call.1} parent=31 // loop_header
          %s1022 = sphi 0, %s1026
          %p1023 = scmp.ge.s32.totalorder %s1022, 2
          %v1027 = vphi 0.0, %v1120
          %v1028 = vphi 0.0, %v1121
          %v1029 = vphi 0.0, %v1124
          %v1030 = vphi 0.0, %v1125
        $region89: #{tpu_custom_call.1} parent=31 // loop_header_branch
          %1025 = sbr.rel (%p1023) target = $region93
        $region90: #{tpu_custom_call.1} parent=31 // loop_body
          %s1031 = smul.u32 %s1022, 2
          %s1032 = smul.u32 %s1031, 16
          %s1033 = scalar_lea.vmem %s327, %s1032 [#allocation2]
          %v1034 = vld [vmem:[%s1033] sm:$0xff]
          %v1035 = vld [vmem:[%s1033 + $0x8] sm:$0xff]
          %s1036 = smul.u32 %s1031, 4
          %s1037 = smul.addr %s1036, 8
          %s1038 = scalar_lea.vmem %s336, %s1037 [#allocation5]
          %v1039 = vld [vmem:[%s1038] sm:$0xff]
          %v1040 = vld [vmem:[%s1038 + $0x8] sm:$0xff]
          %v1041 = vld [vmem:[%s1038 + $0x10] sm:$0xff]
          %v1042 = vld [vmem:[%s1038 + $0x18] sm:$0xff]
          %1043 = vrot.lane.b32.xlu0 %v1039, 6
          %v1044 = vpop.permute.xlu0 %1043
          %1045 = vrot.lane.b32.xlu0 %v1041, 6
          %v1046 = vpop.permute.xlu0 %1045
          %1047 = vrot.lane.b32.xlu0 %v1040, 6
          %v1048 = vpop.permute.xlu0 %1047
          %1049 = vrot.lane.b32.xlu0 %v1042, 6
          %v1050 = vpop.permute.xlu0 %1049
          %v1051 = vlaneseq
          %v1052 = vand.u32 %v1051, 127
          %vm1053 = vcmp.lt.s32.totalorder %v1052, 6
          %v1054 = vsel %vm1053, %v1044, %v1048
          %v1055 = vsel %vm1053, %v1046, %v1050
          %s1056 = smul.addr %s1036, 8
          %s1057 = scalar_lea.vmem %s345, %s1056 [#allocation7]
          %v1058 = vld [vmem:[%s1057] sm:$0xff]
          %v1059 = vld [vmem:[%s1057 + $0x8] sm:$0xff]
          %v1060 = vld [vmem:[%s1057 + $0x10] sm:$0xff]
          %v1061 = vld [vmem:[%s1057 + $0x18] sm:$0xff]
          %1062 = vrot.lane.b32.xlu0 %v1058, 6
          %v1063 = vpop.permute.xlu0 %1062
          %1064 = vrot.lane.b32.xlu0 %v1060, 6
          %v1065 = vpop.permute.xlu0 %1064
          %1066 = vrot.lane.b32.xlu0 %v1059, 6
          %v1067 = vpop.permute.xlu0 %1066
          %1068 = vrot.lane.b32.xlu0 %v1061, 6
          %v1069 = vpop.permute.xlu0 %1068
          %v1070 = vsel %vm1053, %v1063, %v1067
          %v1071 = vsel %vm1053, %v1065, %v1069
          %v1072 = vmul.f32 %v1034, %v1054
          %v1073 = vmul.f32 %v1035, %v1055
          %v1074 = vadd.f32 %v1027, %v1072
          %v1075 = vadd.f32 %v1028, %v1073
          %v1076 = vmul.f32 %v1034, %v1070
          %v1077 = vmul.f32 %v1035, %v1071
          %v1078 = vadd.f32 %v1029, %v1076
          %v1079 = vadd.f32 %v1030, %v1077
          %s1080 = sadd.s32 %s1031, 1
          %s1081 = smul.u32 %s1080, 16
          %s1082 = scalar_lea.vmem %s327, %s1081 [#allocation2]
          %v1083 = vld [vmem:[%s1082] sm:$0xff]
          %v1084 = vld [vmem:[%s1082 + $0x8] sm:$0xff]
          %s1085 = smul.u32 %s1080, 4
          %s1086 = smul.addr %s1085, 8
          %s1087 = scalar_lea.vmem %s336, %s1086 [#allocation5]
          %v1088 = vld [vmem:[%s1087] sm:$0xff]
          %v1089 = vld [vmem:[%s1087 + $0x8] sm:$0xff]
          %v1090 = vld [vmem:[%s1087 + $0x10] sm:$0xff]
          %v1091 = vld [vmem:[%s1087 + $0x18] sm:$0xff]
          %1092 = vrot.lane.b32.xlu0 %v1088, 6
          %v1093 = vpop.permute.xlu0 %1092
          %1094 = vrot.lane.b32.xlu0 %v1090, 6
          %v1095 = vpop.permute.xlu0 %1094
          %1096 = vrot.lane.b32.xlu0 %v1089, 6
          %v1097 = vpop.permute.xlu0 %1096
          %1098 = vrot.lane.b32.xlu0 %v1091, 6
          %v1099 = vpop.permute.xlu0 %1098
          %v1100 = vsel %vm1053, %v1093, %v1097
          %v1101 = vsel %vm1053, %v1095, %v1099
          %s1102 = smul.addr %s1085, 8
          %s1103 = scalar_lea.vmem %s345, %s1102 [#allocation7]
          %v1104 = vld [vmem:[%s1103] sm:$0xff]
          %v1105 = vld [vmem:[%s1103 + $0x8] sm:$0xff]
          %v1106 = vld [vmem:[%s1103 + $0x10] sm:$0xff]
          %v1107 = vld [vmem:[%s1103 + $0x18] sm:$0xff]
          %1108 = vrot.lane.b32.xlu0 %v1104, 6
          %v1109 = vpop.permute.xlu0 %1108
          %1110 = vrot.lane.b32.xlu0 %v1106, 6
          %v1111 = vpop.permute.xlu0 %1110
          %1112 = vrot.lane.b32.xlu0 %v1105, 6
          %v1113 = vpop.permute.xlu0 %1112
          %1114 = vrot.lane.b32.xlu0 %v1107, 6
          %v1115 = vpop.permute.xlu0 %1114
          %v1116 = vsel %vm1053, %v1109, %v1113
          %v1117 = vsel %vm1053, %v1111, %v1115
          %v1118 = vmul.f32 %v1083, %v1100
          %v1119 = vmul.f32 %v1084, %v1101
          %v1120 = vadd.f32 %v1074, %v1118
          %v1121 = vadd.f32 %v1075, %v1119
          %v1122 = vmul.f32 %v1083, %v1116
          %v1123 = vmul.f32 %v1084, %v1117
          %v1124 = vadd.f32 %v1078, %v1122
          %v1125 = vadd.f32 %v1079, %v1123
        $region91: #{tpu_custom_call.1} parent=31 // loop_footer
          %s1026 = sadd.s32 1, %s1022
        $region92: #{tpu_custom_call.1} parent=31 // loop_footer_branch
          %1021 = sbr.rel target = $region88
        $region93: #{tpu_custom_call.1} parent=31 // loop_exit
          _
        %v1126 = vmul.f32 %v1027, 0.25
        %v1127 = vmul.f32 %v1028, 0.25
        %s1128 = scalar_lea.vmem %s377, 96 [#allocation8]
        %1129 = vst [vmem:[%s1128] sm:$0xff] %v1126
        %1130 = vst [vmem:[%s1128 + $0x8] sm:$0xff] %v1127
        %v1131 = vmul.f32 %v1029, 0.25
        %v1132 = vmul.f32 %v1030, 0.25
        %s1133 = scalar_lea.vmem %s377, 352 [#allocation8]
        %1134 = vst [vmem:[%s1133] sm:$0xff] %v1131
        %1135 = vst [vmem:[%s1133 + $0x8] sm:$0xff] %v1132
        loop: start=0, step=1, limit=2
        $region94: #{tpu_custom_call.1} parent=31 // loop_pre_header
          _
        $region95: #{tpu_custom_call.1} parent=31 // loop_header
          %s1137 = sphi 0, %s1141
          %p1138 = scmp.ge.s32.totalorder %s1137, 2
          %v1142 = vphi 0.0, %v1235
          %v1143 = vphi 0.0, %v1236
          %v1144 = vphi 0.0, %v1239
          %v1145 = vphi 0.0, %v1240
        $region96: #{tpu_custom_call.1} parent=31 // loop_header_branch
          %1140 = sbr.rel (%p1138) target = $region100
        $region97: #{tpu_custom_call.1} parent=31 // loop_body
          %s1146 = smul.u32 %s1137, 2
          %s1147 = smul.u32 %s1146, 16
          %s1148 = scalar_lea.vmem %s327, %s1147 [#allocation2]
          %v1149 = vld [vmem:[%s1148] sm:$0xff]
          %v1150 = vld [vmem:[%s1148 + $0x8] sm:$0xff]
          %s1151 = smul.u32 %s1146, 4
          %s1152 = smul.addr %s1151, 8
          %s1153 = scalar_lea.vmem %s336, %s1152 [#allocation5]
          %v1154 = vld [vmem:[%s1153] sm:$0xff]
          %v1155 = vld [vmem:[%s1153 + $0x8] sm:$0xff]
          %v1156 = vld [vmem:[%s1153 + $0x10] sm:$0xff]
          %v1157 = vld [vmem:[%s1153 + $0x18] sm:$0xff]
          %1158 = vrot.lane.b32.xlu0 %v1154, 7
          %v1159 = vpop.permute.xlu0 %1158
          %1160 = vrot.lane.b32.xlu0 %v1156, 7
          %v1161 = vpop.permute.xlu0 %1160
          %1162 = vrot.lane.b32.xlu0 %v1155, 7
          %v1163 = vpop.permute.xlu0 %1162
          %1164 = vrot.lane.b32.xlu0 %v1157, 7
          %v1165 = vpop.permute.xlu0 %1164
          %v1166 = vlaneseq
          %v1167 = vand.u32 %v1166, 127
          %vm1168 = vcmp.lt.s32.totalorder %v1167, 7
          %v1169 = vsel %vm1168, %v1159, %v1163
          %v1170 = vsel %vm1168, %v1161, %v1165
          %s1171 = smul.addr %s1151, 8
          %s1172 = scalar_lea.vmem %s345, %s1171 [#allocation7]
          %v1173 = vld [vmem:[%s1172] sm:$0xff]
          %v1174 = vld [vmem:[%s1172 + $0x8] sm:$0xff]
          %v1175 = vld [vmem:[%s1172 + $0x10] sm:$0xff]
          %v1176 = vld [vmem:[%s1172 + $0x18] sm:$0xff]
          %1177 = vrot.lane.b32.xlu0 %v1173, 7
          %v1178 = vpop.permute.xlu0 %1177
          %1179 = vrot.lane.b32.xlu0 %v1175, 7
          %v1180 = vpop.permute.xlu0 %1179
          %1181 = vrot.lane.b32.xlu0 %v1174, 7
          %v1182 = vpop.permute.xlu0 %1181
          %1183 = vrot.lane.b32.xlu0 %v1176, 7
          %v1184 = vpop.permute.xlu0 %1183
          %v1185 = vsel %vm1168, %v1178, %v1182
          %v1186 = vsel %vm1168, %v1180, %v1184
          %v1187 = vmul.f32 %v1149, %v1169
          %v1188 = vmul.f32 %v1150, %v1170
          %v1189 = vadd.f32 %v1142, %v1187
          %v1190 = vadd.f32 %v1143, %v1188
          %v1191 = vmul.f32 %v1149, %v1185
          %v1192 = vmul.f32 %v1150, %v1186
          %v1193 = vadd.f32 %v1144, %v1191
          %v1194 = vadd.f32 %v1145, %v1192
          %s1195 = sadd.s32 %s1146, 1
          %s1196 = smul.u32 %s1195, 16
          %s1197 = scalar_lea.vmem %s327, %s1196 [#allocation2]
          %v1198 = vld [vmem:[%s1197] sm:$0xff]
          %v1199 = vld [vmem:[%s1197 + $0x8] sm:$0xff]
          %s1200 = smul.u32 %s1195, 4
          %s1201 = smul.addr %s1200, 8
          %s1202 = scalar_lea.vmem %s336, %s1201 [#allocation5]
          %v1203 = vld [vmem:[%s1202] sm:$0xff]
          %v1204 = vld [vmem:[%s1202 + $0x8] sm:$0xff]
          %v1205 = vld [vmem:[%s1202 + $0x10] sm:$0xff]
          %v1206 = vld [vmem:[%s1202 + $0x18] sm:$0xff]
          %1207 = vrot.lane.b32.xlu0 %v1203, 7
          %v1208 = vpop.permute.xlu0 %1207
          %1209 = vrot.lane.b32.xlu0 %v1205, 7
          %v1210 = vpop.permute.xlu0 %1209
          %1211 = vrot.lane.b32.xlu0 %v1204, 7
          %v1212 = vpop.permute.xlu0 %1211
          %1213 = vrot.lane.b32.xlu0 %v1206, 7
          %v1214 = vpop.permute.xlu0 %1213
          %v1215 = vsel %vm1168, %v1208, %v1212
          %v1216 = vsel %vm1168, %v1210, %v1214
          %s1217 = smul.addr %s1200, 8
          %s1218 = scalar_lea.vmem %s345, %s1217 [#allocation7]
          %v1219 = vld [vmem:[%s1218] sm:$0xff]
          %v1220 = vld [vmem:[%s1218 + $0x8] sm:$0xff]
          %v1221 = vld [vmem:[%s1218 + $0x10] sm:$0xff]
          %v1222 = vld [vmem:[%s1218 + $0x18] sm:$0xff]
          %1223 = vrot.lane.b32.xlu0 %v1219, 7
          %v1224 = vpop.permute.xlu0 %1223
          %1225 = vrot.lane.b32.xlu0 %v1221, 7
          %v1226 = vpop.permute.xlu0 %1225
          %1227 = vrot.lane.b32.xlu0 %v1220, 7
          %v1228 = vpop.permute.xlu0 %1227
          %1229 = vrot.lane.b32.xlu0 %v1222, 7
          %v1230 = vpop.permute.xlu0 %1229
          %v1231 = vsel %vm1168, %v1224, %v1228
          %v1232 = vsel %vm1168, %v1226, %v1230
          %v1233 = vmul.f32 %v1198, %v1215
          %v1234 = vmul.f32 %v1199, %v1216
          %v1235 = vadd.f32 %v1189, %v1233
          %v1236 = vadd.f32 %v1190, %v1234
          %v1237 = vmul.f32 %v1198, %v1231
          %v1238 = vmul.f32 %v1199, %v1232
          %v1239 = vadd.f32 %v1193, %v1237
          %v1240 = vadd.f32 %v1194, %v1238
        $region98: #{tpu_custom_call.1} parent=31 // loop_footer
          %s1141 = sadd.s32 1, %s1137
        $region99: #{tpu_custom_call.1} parent=31 // loop_footer_branch
          %1136 = sbr.rel target = $region95
        $region100: #{tpu_custom_call.1} parent=31 // loop_exit
          _
        %v1241 = vmul.f32 %v1142, 0.25
        %v1242 = vmul.f32 %v1143, 0.25
        %s1243 = scalar_lea.vmem %s377, 112 [#allocation8]
        %1244 = vst [vmem:[%s1243] sm:$0xff] %v1241
        %1245 = vst [vmem:[%s1243 + $0x8] sm:$0xff] %v1242
        %v1246 = vmul.f32 %v1144, 0.25
        %v1247 = vmul.f32 %v1145, 0.25
        %s1248 = scalar_lea.vmem %s377, 368 [#allocation8]
        %1249 = vst [vmem:[%s1248] sm:$0xff] %v1246
        %1250 = vst [vmem:[%s1248 + $0x8] sm:$0xff] %v1247
        loop: start=0, step=1, limit=2
        $region101: #{tpu_custom_call.1} parent=31 // loop_pre_header
          _
        $region102: #{tpu_custom_call.1} parent=31 // loop_header
          %s1252 = sphi 0, %s1256
          %p1253 = scmp.ge.s32.totalorder %s1252, 2
          %v1257 = vphi 0.0, %v1350
          %v1258 = vphi 0.0, %v1351
          %v1259 = vphi 0.0, %v1354
          %v1260 = vphi 0.0, %v1355
        $region103: #{tpu_custom_call.1} parent=31 // loop_header_branch
          %1255 = sbr.rel (%p1253) target = $region107
        $region104: #{tpu_custom_call.1} parent=31 // loop_body
          %s1261 = smul.u32 %s1252, 2
          %s1262 = smul.u32 %s1261, 16
          %s1263 = scalar_lea.vmem %s327, %s1262 [#allocation2]
          %v1264 = vld [vmem:[%s1263] sm:$0xff]
          %v1265 = vld [vmem:[%s1263 + $0x8] sm:$0xff]
          %s1266 = smul.u32 %s1261, 4
          %s1267 = smul.addr %s1266, 8
          %s1268 = scalar_lea.vmem %s336, %s1267 [#allocation5]
          %v1269 = vld [vmem:[%s1268] sm:$0xff]
          %v1270 = vld [vmem:[%s1268 + $0x8] sm:$0xff]
          %v1271 = vld [vmem:[%s1268 + $0x10] sm:$0xff]
          %v1272 = vld [vmem:[%s1268 + $0x18] sm:$0xff]
          %1273 = vrot.lane.b32.xlu0 %v1269, 8
          %v1274 = vpop.permute.xlu0 %1273
          %1275 = vrot.lane.b32.xlu0 %v1271, 8
          %v1276 = vpop.permute.xlu0 %1275
          %1277 = vrot.lane.b32.xlu0 %v1270, 8
          %v1278 = vpop.permute.xlu0 %1277
          %1279 = vrot.lane.b32.xlu0 %v1272, 8
          %v1280 = vpop.permute.xlu0 %1279
          %v1281 = vlaneseq
          %v1282 = vand.u32 %v1281, 127
          %vm1283 = vcmp.lt.s32.totalorder %v1282, 8
          %v1284 = vsel %vm1283, %v1274, %v1278
          %v1285 = vsel %vm1283, %v1276, %v1280
          %s1286 = smul.addr %s1266, 8
          %s1287 = scalar_lea.vmem %s345, %s1286 [#allocation7]
          %v1288 = vld [vmem:[%s1287] sm:$0xff]
          %v1289 = vld [vmem:[%s1287 + $0x8] sm:$0xff]
          %v1290 = vld [vmem:[%s1287 + $0x10] sm:$0xff]
          %v1291 = vld [vmem:[%s1287 + $0x18] sm:$0xff]
          %1292 = vrot.lane.b32.xlu0 %v1288, 8
          %v1293 = vpop.permute.xlu0 %1292
          %1294 = vrot.lane.b32.xlu0 %v1290, 8
          %v1295 = vpop.permute.xlu0 %1294
          %1296 = vrot.lane.b32.xlu0 %v1289, 8
          %v1297 = vpop.permute.xlu0 %1296
          %1298 = vrot.lane.b32.xlu0 %v1291, 8
          %v1299 = vpop.permute.xlu0 %1298
          %v1300 = vsel %vm1283, %v1293, %v1297
          %v1301 = vsel %vm1283, %v1295, %v1299
          %v1302 = vmul.f32 %v1264, %v1284
          %v1303 = vmul.f32 %v1265, %v1285
          %v1304 = vadd.f32 %v1257, %v1302
          %v1305 = vadd.f32 %v1258, %v1303
          %v1306 = vmul.f32 %v1264, %v1300
          %v1307 = vmul.f32 %v1265, %v1301
          %v1308 = vadd.f32 %v1259, %v1306
          %v1309 = vadd.f32 %v1260, %v1307
          %s1310 = sadd.s32 %s1261, 1
          %s1311 = smul.u32 %s1310, 16
          %s1312 = scalar_lea.vmem %s327, %s1311 [#allocation2]
          %v1313 = vld [vmem:[%s1312] sm:$0xff]
          %v1314 = vld [vmem:[%s1312 + $0x8] sm:$0xff]
          %s1315 = smul.u32 %s1310, 4
          %s1316 = smul.addr %s1315, 8
          %s1317 = scalar_lea.vmem %s336, %s1316 [#allocation5]
          %v1318 = vld [vmem:[%s1317] sm:$0xff]
          %v1319 = vld [vmem:[%s1317 + $0x8] sm:$0xff]
          %v1320 = vld [vmem:[%s1317 + $0x10] sm:$0xff]
          %v1321 = vld [vmem:[%s1317 + $0x18] sm:$0xff]
          %1322 = vrot.lane.b32.xlu0 %v1318, 8
          %v1323 = vpop.permute.xlu0 %1322
          %1324 = vrot.lane.b32.xlu0 %v1320, 8
          %v1325 = vpop.permute.xlu0 %1324
          %1326 = vrot.lane.b32.xlu0 %v1319, 8
          %v1327 = vpop.permute.xlu0 %1326
          %1328 = vrot.lane.b32.xlu0 %v1321, 8
          %v1329 = vpop.permute.xlu0 %1328
          %v1330 = vsel %vm1283, %v1323, %v1327
          %v1331 = vsel %vm1283, %v1325, %v1329
          %s1332 = smul.addr %s1315, 8
          %s1333 = scalar_lea.vmem %s345, %s1332 [#allocation7]
          %v1334 = vld [vmem:[%s1333] sm:$0xff]
          %v1335 = vld [vmem:[%s1333 + $0x8] sm:$0xff]
          %v1336 = vld [vmem:[%s1333 + $0x10] sm:$0xff]
          %v1337 = vld [vmem:[%s1333 + $0x18] sm:$0xff]
          %1338 = vrot.lane.b32.xlu0 %v1334, 8
          %v1339 = vpop.permute.xlu0 %1338
          %1340 = vrot.lane.b32.xlu0 %v1336, 8
          %v1341 = vpop.permute.xlu0 %1340
          %1342 = vrot.lane.b32.xlu0 %v1335, 8
          %v1343 = vpop.permute.xlu0 %1342
          %1344 = vrot.lane.b32.xlu0 %v1337, 8
          %v1345 = vpop.permute.xlu0 %1344
          %v1346 = vsel %vm1283, %v1339, %v1343
          %v1347 = vsel %vm1283, %v1341, %v1345
          %v1348 = vmul.f32 %v1313, %v1330
          %v1349 = vmul.f32 %v1314, %v1331
          %v1350 = vadd.f32 %v1304, %v1348
          %v1351 = vadd.f32 %v1305, %v1349
          %v1352 = vmul.f32 %v1313, %v1346
          %v1353 = vmul.f32 %v1314, %v1347
          %v1354 = vadd.f32 %v1308, %v1352
          %v1355 = vadd.f32 %v1309, %v1353
        $region105: #{tpu_custom_call.1} parent=31 // loop_footer
          %s1256 = sadd.s32 1, %s1252
        $region106: #{tpu_custom_call.1} parent=31 // loop_footer_branch
          %1251 = sbr.rel target = $region102
        $region107: #{tpu_custom_call.1} parent=31 // loop_exit
          _
        %v1356 = vmul.f32 %v1257, 0.25
        %v1357 = vmul.f32 %v1258, 0.25
        %s1358 = scalar_lea.vmem %s377, 128 [#allocation8]
        %1359 = vst [vmem:[%s1358] sm:$0xff] %v1356
        %1360 = vst [vmem:[%s1358 + $0x8] sm:$0xff] %v1357
        %v1361 = vmul.f32 %v1259, 0.25
        %v1362 = vmul.f32 %v1260, 0.25
        %s1363 = scalar_lea.vmem %s377, 384 [#allocation8]
        %1364 = vst [vmem:[%s1363] sm:$0xff] %v1361
        %1365 = vst [vmem:[%s1363 + $0x8] sm:$0xff] %v1362
        loop: start=0, step=1, limit=2
        $region108: #{tpu_custom_call.1} parent=31 // loop_pre_header
          _
        $region109: #{tpu_custom_call.1} parent=31 // loop_header
          %s1367 = sphi 0, %s1371
          %p1368 = scmp.ge.s32.totalorder %s1367, 2
          %v1372 = vphi 0.0, %v1465
          %v1373 = vphi 0.0, %v1466
          %v1374 = vphi 0.0, %v1469
          %v1375 = vphi 0.0, %v1470
        $region110: #{tpu_custom_call.1} parent=31 // loop_header_branch
          %1370 = sbr.rel (%p1368) target = $region114
        $region111: #{tpu_custom_call.1} parent=31 // loop_body
          %s1376 = smul.u32 %s1367, 2
          %s1377 = smul.u32 %s1376, 16
          %s1378 = scalar_lea.vmem %s327, %s1377 [#allocation2]
          %v1379 = vld [vmem:[%s1378] sm:$0xff]
          %v1380 = vld [vmem:[%s1378 + $0x8] sm:$0xff]
          %s1381 = smul.u32 %s1376, 4
          %s1382 = smul.addr %s1381, 8
          %s1383 = scalar_lea.vmem %s336, %s1382 [#allocation5]
          %v1384 = vld [vmem:[%s1383] sm:$0xff]
          %v1385 = vld [vmem:[%s1383 + $0x8] sm:$0xff]
          %v1386 = vld [vmem:[%s1383 + $0x10] sm:$0xff]
          %v1387 = vld [vmem:[%s1383 + $0x18] sm:$0xff]
          %1388 = vrot.lane.b32.xlu0 %v1384, 9
          %v1389 = vpop.permute.xlu0 %1388
          %1390 = vrot.lane.b32.xlu0 %v1386, 9
          %v1391 = vpop.permute.xlu0 %1390
          %1392 = vrot.lane.b32.xlu0 %v1385, 9
          %v1393 = vpop.permute.xlu0 %1392
          %1394 = vrot.lane.b32.xlu0 %v1387, 9
          %v1395 = vpop.permute.xlu0 %1394
          %v1396 = vlaneseq
          %v1397 = vand.u32 %v1396, 127
          %vm1398 = vcmp.lt.s32.totalorder %v1397, 9
          %v1399 = vsel %vm1398, %v1389, %v1393
          %v1400 = vsel %vm1398, %v1391, %v1395
          %s1401 = smul.addr %s1381, 8
          %s1402 = scalar_lea.vmem %s345, %s1401 [#allocation7]
          %v1403 = vld [vmem:[%s1402] sm:$0xff]
          %v1404 = vld [vmem:[%s1402 + $0x8] sm:$0xff]
          %v1405 = vld [vmem:[%s1402 + $0x10] sm:$0xff]
          %v1406 = vld [vmem:[%s1402 + $0x18] sm:$0xff]
          %1407 = vrot.lane.b32.xlu0 %v1403, 9
          %v1408 = vpop.permute.xlu0 %1407
          %1409 = vrot.lane.b32.xlu0 %v1405, 9
          %v1410 = vpop.permute.xlu0 %1409
          %1411 = vrot.lane.b32.xlu0 %v1404, 9
          %v1412 = vpop.permute.xlu0 %1411
          %1413 = vrot.lane.b32.xlu0 %v1406, 9
          %v1414 = vpop.permute.xlu0 %1413
          %v1415 = vsel %vm1398, %v1408, %v1412
          %v1416 = vsel %vm1398, %v1410, %v1414
          %v1417 = vmul.f32 %v1379, %v1399
          %v1418 = vmul.f32 %v1380, %v1400
          %v1419 = vadd.f32 %v1372, %v1417
          %v1420 = vadd.f32 %v1373, %v1418
          %v1421 = vmul.f32 %v1379, %v1415
          %v1422 = vmul.f32 %v1380, %v1416
          %v1423 = vadd.f32 %v1374, %v1421
          %v1424 = vadd.f32 %v1375, %v1422
          %s1425 = sadd.s32 %s1376, 1
          %s1426 = smul.u32 %s1425, 16
          %s1427 = scalar_lea.vmem %s327, %s1426 [#allocation2]
          %v1428 = vld [vmem:[%s1427] sm:$0xff]
          %v1429 = vld [vmem:[%s1427 + $0x8] sm:$0xff]
          %s1430 = smul.u32 %s1425, 4
          %s1431 = smul.addr %s1430, 8
          %s1432 = scalar_lea.vmem %s336, %s1431 [#allocation5]
          %v1433 = vld [vmem:[%s1432] sm:$0xff]
          %v1434 = vld [vmem:[%s1432 + $0x8] sm:$0xff]
          %v1435 = vld [vmem:[%s1432 + $0x10] sm:$0xff]
          %v1436 = vld [vmem:[%s1432 + $0x18] sm:$0xff]
          %1437 = vrot.lane.b32.xlu0 %v1433, 9
          %v1438 = vpop.permute.xlu0 %1437
          %1439 = vrot.lane.b32.xlu0 %v1435, 9
          %v1440 = vpop.permute.xlu0 %1439
          %1441 = vrot.lane.b32.xlu0 %v1434, 9
          %v1442 = vpop.permute.xlu0 %1441
          %1443 = vrot.lane.b32.xlu0 %v1436, 9
          %v1444 = vpop.permute.xlu0 %1443
          %v1445 = vsel %vm1398, %v1438, %v1442
          %v1446 = vsel %vm1398, %v1440, %v1444
          %s1447 = smul.addr %s1430, 8
          %s1448 = scalar_lea.vmem %s345, %s1447 [#allocation7]
          %v1449 = vld [vmem:[%s1448] sm:$0xff]
          %v1450 = vld [vmem:[%s1448 + $0x8] sm:$0xff]
          %v1451 = vld [vmem:[%s1448 + $0x10] sm:$0xff]
          %v1452 = vld [vmem:[%s1448 + $0x18] sm:$0xff]
          %1453 = vrot.lane.b32.xlu0 %v1449, 9
          %v1454 = vpop.permute.xlu0 %1453
          %1455 = vrot.lane.b32.xlu0 %v1451, 9
          %v1456 = vpop.permute.xlu0 %1455
          %1457 = vrot.lane.b32.xlu0 %v1450, 9
          %v1458 = vpop.permute.xlu0 %1457
          %1459 = vrot.lane.b32.xlu0 %v1452, 9
          %v1460 = vpop.permute.xlu0 %1459
          %v1461 = vsel %vm1398, %v1454, %v1458
          %v1462 = vsel %vm1398, %v1456, %v1460
          %v1463 = vmul.f32 %v1428, %v1445
          %v1464 = vmul.f32 %v1429, %v1446
          %v1465 = vadd.f32 %v1419, %v1463
          %v1466 = vadd.f32 %v1420, %v1464
          %v1467 = vmul.f32 %v1428, %v1461
          %v1468 = vmul.f32 %v1429, %v1462
          %v1469 = vadd.f32 %v1423, %v1467
          %v1470 = vadd.f32 %v1424, %v1468
        $region112: #{tpu_custom_call.1} parent=31 // loop_footer
          %s1371 = sadd.s32 1, %s1367
        $region113: #{tpu_custom_call.1} parent=31 // loop_footer_branch
          %1366 = sbr.rel target = $region109
        $region114: #{tpu_custom_call.1} parent=31 // loop_exit
          _
        %v1471 = vmul.f32 %v1372, 0.25
        %v1472 = vmul.f32 %v1373, 0.25
        %s1473 = scalar_lea.vmem %s377, 144 [#allocation8]
        %1474 = vst [vmem:[%s1473] sm:$0xff] %v1471
        %1475 = vst [vmem:[%s1473 + $0x8] sm:$0xff] %v1472
        %v1476 = vmul.f32 %v1374, 0.25
        %v1477 = vmul.f32 %v1375, 0.25
        %s1478 = scalar_lea.vmem %s377, 400 [#allocation8]
        %1479 = vst [vmem:[%s1478] sm:$0xff] %v1476
        %1480 = vst [vmem:[%s1478 + $0x8] sm:$0xff] %v1477
        loop: start=0, step=1, limit=2
        $region115: #{tpu_custom_call.1} parent=31 // loop_pre_header
          _
        $region116: #{tpu_custom_call.1} parent=31 // loop_header
          %s1482 = sphi 0, %s1486
          %p1483 = scmp.ge.s32.totalorder %s1482, 2
          %v1487 = vphi 0.0, %v1580
          %v1488 = vphi 0.0, %v1581
          %v1489 = vphi 0.0, %v1584
          %v1490 = vphi 0.0, %v1585
        $region117: #{tpu_custom_call.1} parent=31 // loop_header_branch
          %1485 = sbr.rel (%p1483) target = $region121
        $region118: #{tpu_custom_call.1} parent=31 // loop_body
          %s1491 = smul.u32 %s1482, 2
          %s1492 = smul.u32 %s1491, 16
          %s1493 = scalar_lea.vmem %s327, %s1492 [#allocation2]
          %v1494 = vld [vmem:[%s1493] sm:$0xff]
          %v1495 = vld [vmem:[%s1493 + $0x8] sm:$0xff]
          %s1496 = smul.u32 %s1491, 4
          %s1497 = smul.addr %s1496, 8
          %s1498 = scalar_lea.vmem %s336, %s1497 [#allocation5]
          %v1499 = vld [vmem:[%s1498] sm:$0xff]
          %v1500 = vld [vmem:[%s1498 + $0x8] sm:$0xff]
          %v1501 = vld [vmem:[%s1498 + $0x10] sm:$0xff]
          %v1502 = vld [vmem:[%s1498 + $0x18] sm:$0xff]
          %1503 = vrot.lane.b32.xlu0 %v1499, 10
          %v1504 = vpop.permute.xlu0 %1503
          %1505 = vrot.lane.b32.xlu0 %v1501, 10
          %v1506 = vpop.permute.xlu0 %1505
          %1507 = vrot.lane.b32.xlu0 %v1500, 10
          %v1508 = vpop.permute.xlu0 %1507
          %1509 = vrot.lane.b32.xlu0 %v1502, 10
          %v1510 = vpop.permute.xlu0 %1509
          %v1511 = vlaneseq
          %v1512 = vand.u32 %v1511, 127
          %vm1513 = vcmp.lt.s32.totalorder %v1512, 10
          %v1514 = vsel %vm1513, %v1504, %v1508
          %v1515 = vsel %vm1513, %v1506, %v1510
          %s1516 = smul.addr %s1496, 8
          %s1517 = scalar_lea.vmem %s345, %s1516 [#allocation7]
          %v1518 = vld [vmem:[%s1517] sm:$0xff]
          %v1519 = vld [vmem:[%s1517 + $0x8] sm:$0xff]
          %v1520 = vld [vmem:[%s1517 + $0x10] sm:$0xff]
          %v1521 = vld [vmem:[%s1517 + $0x18] sm:$0xff]
          %1522 = vrot.lane.b32.xlu0 %v1518, 10
          %v1523 = vpop.permute.xlu0 %1522
          %1524 = vrot.lane.b32.xlu0 %v1520, 10
          %v1525 = vpop.permute.xlu0 %1524
          %1526 = vrot.lane.b32.xlu0 %v1519, 10
          %v1527 = vpop.permute.xlu0 %1526
          %1528 = vrot.lane.b32.xlu0 %v1521, 10
          %v1529 = vpop.permute.xlu0 %1528
          %v1530 = vsel %vm1513, %v1523, %v1527
          %v1531 = vsel %vm1513, %v1525, %v1529
          %v1532 = vmul.f32 %v1494, %v1514
          %v1533 = vmul.f32 %v1495, %v1515
          %v1534 = vadd.f32 %v1487, %v1532
          %v1535 = vadd.f32 %v1488, %v1533
          %v1536 = vmul.f32 %v1494, %v1530
          %v1537 = vmul.f32 %v1495, %v1531
          %v1538 = vadd.f32 %v1489, %v1536
          %v1539 = vadd.f32 %v1490, %v1537
          %s1540 = sadd.s32 %s1491, 1
          %s1541 = smul.u32 %s1540, 16
          %s1542 = scalar_lea.vmem %s327, %s1541 [#allocation2]
          %v1543 = vld [vmem:[%s1542] sm:$0xff]
          %v1544 = vld [vmem:[%s1542 + $0x8] sm:$0xff]
          %s1545 = smul.u32 %s1540, 4
          %s1546 = smul.addr %s1545, 8
          %s1547 = scalar_lea.vmem %s336, %s1546 [#allocation5]
          %v1548 = vld [vmem:[%s1547] sm:$0xff]
          %v1549 = vld [vmem:[%s1547 + $0x8] sm:$0xff]
          %v1550 = vld [vmem:[%s1547 + $0x10] sm:$0xff]
          %v1551 = vld [vmem:[%s1547 + $0x18] sm:$0xff]
          %1552 = vrot.lane.b32.xlu0 %v1548, 10
          %v1553 = vpop.permute.xlu0 %1552
          %1554 = vrot.lane.b32.xlu0 %v1550, 10
          %v1555 = vpop.permute.xlu0 %1554
          %1556 = vrot.lane.b32.xlu0 %v1549, 10
          %v1557 = vpop.permute.xlu0 %1556
          %1558 = vrot.lane.b32.xlu0 %v1551, 10
          %v1559 = vpop.permute.xlu0 %1558
          %v1560 = vsel %vm1513, %v1553, %v1557
          %v1561 = vsel %vm1513, %v1555, %v1559
          %s1562 = smul.addr %s1545, 8
          %s1563 = scalar_lea.vmem %s345, %s1562 [#allocation7]
          %v1564 = vld [vmem:[%s1563] sm:$0xff]
          %v1565 = vld [vmem:[%s1563 + $0x8] sm:$0xff]
          %v1566 = vld [vmem:[%s1563 + $0x10] sm:$0xff]
          %v1567 = vld [vmem:[%s1563 + $0x18] sm:$0xff]
          %1568 = vrot.lane.b32.xlu0 %v1564, 10
          %v1569 = vpop.permute.xlu0 %1568
          %1570 = vrot.lane.b32.xlu0 %v1566, 10
          %v1571 = vpop.permute.xlu0 %1570
          %1572 = vrot.lane.b32.xlu0 %v1565, 10
          %v1573 = vpop.permute.xlu0 %1572
          %1574 = vrot.lane.b32.xlu0 %v1567, 10
          %v1575 = vpop.permute.xlu0 %1574
          %v1576 = vsel %vm1513, %v1569, %v1573
          %v1577 = vsel %vm1513, %v1571, %v1575
          %v1578 = vmul.f32 %v1543, %v1560
          %v1579 = vmul.f32 %v1544, %v1561
          %v1580 = vadd.f32 %v1534, %v1578
          %v1581 = vadd.f32 %v1535, %v1579
          %v1582 = vmul.f32 %v1543, %v1576
          %v1583 = vmul.f32 %v1544, %v1577
          %v1584 = vadd.f32 %v1538, %v1582
          %v1585 = vadd.f32 %v1539, %v1583
        $region119: #{tpu_custom_call.1} parent=31 // loop_footer
          %s1486 = sadd.s32 1, %s1482
        $region120: #{tpu_custom_call.1} parent=31 // loop_footer_branch
          %1481 = sbr.rel target = $region116
        $region121: #{tpu_custom_call.1} parent=31 // loop_exit
          _
        %v1586 = vmul.f32 %v1487, 0.25
        %v1587 = vmul.f32 %v1488, 0.25
        %s1588 = scalar_lea.vmem %s377, 160 [#allocation8]
        %1589 = vst [vmem:[%s1588] sm:$0xff] %v1586
        %1590 = vst [vmem:[%s1588 + $0x8] sm:$0xff] %v1587
        %v1591 = vmul.f32 %v1489, 0.25
        %v1592 = vmul.f32 %v1490, 0.25
        %s1593 = scalar_lea.vmem %s377, 416 [#allocation8]
        %1594 = vst [vmem:[%s1593] sm:$0xff] %v1591
        %1595 = vst [vmem:[%s1593 + $0x8] sm:$0xff] %v1592
        loop: start=0, step=1, limit=2
        $region122: #{tpu_custom_call.1} parent=31 // loop_pre_header
          _
        $region123: #{tpu_custom_call.1} parent=31 // loop_header
          %s1597 = sphi 0, %s1601
          %p1598 = scmp.ge.s32.totalorder %s1597, 2
          %v1602 = vphi 0.0, %v1695
          %v1603 = vphi 0.0, %v1696
          %v1604 = vphi 0.0, %v1699
          %v1605 = vphi 0.0, %v1700
        $region124: #{tpu_custom_call.1} parent=31 // loop_header_branch
          %1600 = sbr.rel (%p1598) target = $region128
        $region125: #{tpu_custom_call.1} parent=31 // loop_body
          %s1606 = smul.u32 %s1597, 2
          %s1607 = smul.u32 %s1606, 16
          %s1608 = scalar_lea.vmem %s327, %s1607 [#allocation2]
          %v1609 = vld [vmem:[%s1608] sm:$0xff]
          %v1610 = vld [vmem:[%s1608 + $0x8] sm:$0xff]
          %s1611 = smul.u32 %s1606, 4
          %s1612 = smul.addr %s1611, 8
          %s1613 = scalar_lea.vmem %s336, %s1612 [#allocation5]
          %v1614 = vld [vmem:[%s1613] sm:$0xff]
          %v1615 = vld [vmem:[%s1613 + $0x8] sm:$0xff]
          %v1616 = vld [vmem:[%s1613 + $0x10] sm:$0xff]
          %v1617 = vld [vmem:[%s1613 + $0x18] sm:$0xff]
          %1618 = vrot.lane.b32.xlu0 %v1614, 11
          %v1619 = vpop.permute.xlu0 %1618
          %1620 = vrot.lane.b32.xlu0 %v1616, 11
          %v1621 = vpop.permute.xlu0 %1620
          %1622 = vrot.lane.b32.xlu0 %v1615, 11
          %v1623 = vpop.permute.xlu0 %1622
          %1624 = vrot.lane.b32.xlu0 %v1617, 11
          %v1625 = vpop.permute.xlu0 %1624
          %v1626 = vlaneseq
          %v1627 = vand.u32 %v1626, 127
          %vm1628 = vcmp.lt.s32.totalorder %v1627, 11
          %v1629 = vsel %vm1628, %v1619, %v1623
          %v1630 = vsel %vm1628, %v1621, %v1625
          %s1631 = smul.addr %s1611, 8
          %s1632 = scalar_lea.vmem %s345, %s1631 [#allocation7]
          %v1633 = vld [vmem:[%s1632] sm:$0xff]
          %v1634 = vld [vmem:[%s1632 + $0x8] sm:$0xff]
          %v1635 = vld [vmem:[%s1632 + $0x10] sm:$0xff]
          %v1636 = vld [vmem:[%s1632 + $0x18] sm:$0xff]
          %1637 = vrot.lane.b32.xlu0 %v1633, 11
          %v1638 = vpop.permute.xlu0 %1637
          %1639 = vrot.lane.b32.xlu0 %v1635, 11
          %v1640 = vpop.permute.xlu0 %1639
          %1641 = vrot.lane.b32.xlu0 %v1634, 11
          %v1642 = vpop.permute.xlu0 %1641
          %1643 = vrot.lane.b32.xlu0 %v1636, 11
          %v1644 = vpop.permute.xlu0 %1643
          %v1645 = vsel %vm1628, %v1638, %v1642
          %v1646 = vsel %vm1628, %v1640, %v1644
          %v1647 = vmul.f32 %v1609, %v1629
          %v1648 = vmul.f32 %v1610, %v1630
          %v1649 = vadd.f32 %v1602, %v1647
          %v1650 = vadd.f32 %v1603, %v1648
          %v1651 = vmul.f32 %v1609, %v1645
          %v1652 = vmul.f32 %v1610, %v1646
          %v1653 = vadd.f32 %v1604, %v1651
          %v1654 = vadd.f32 %v1605, %v1652
          %s1655 = sadd.s32 %s1606, 1
          %s1656 = smul.u32 %s1655, 16
          %s1657 = scalar_lea.vmem %s327, %s1656 [#allocation2]
          %v1658 = vld [vmem:[%s1657] sm:$0xff]
          %v1659 = vld [vmem:[%s1657 + $0x8] sm:$0xff]
          %s1660 = smul.u32 %s1655, 4
          %s1661 = smul.addr %s1660, 8
          %s1662 = scalar_lea.vmem %s336, %s1661 [#allocation5]
          %v1663 = vld [vmem:[%s1662] sm:$0xff]
          %v1664 = vld [vmem:[%s1662 + $0x8] sm:$0xff]
          %v1665 = vld [vmem:[%s1662 + $0x10] sm:$0xff]
          %v1666 = vld [vmem:[%s1662 + $0x18] sm:$0xff]
          %1667 = vrot.lane.b32.xlu0 %v1663, 11
          %v1668 = vpop.permute.xlu0 %1667
          %1669 = vrot.lane.b32.xlu0 %v1665, 11
          %v1670 = vpop.permute.xlu0 %1669
          %1671 = vrot.lane.b32.xlu0 %v1664, 11
          %v1672 = vpop.permute.xlu0 %1671
          %1673 = vrot.lane.b32.xlu0 %v1666, 11
          %v1674 = vpop.permute.xlu0 %1673
          %v1675 = vsel %vm1628, %v1668, %v1672
          %v1676 = vsel %vm1628, %v1670, %v1674
          %s1677 = smul.addr %s1660, 8
          %s1678 = scalar_lea.vmem %s345, %s1677 [#allocation7]
          %v1679 = vld [vmem:[%s1678] sm:$0xff]
          %v1680 = vld [vmem:[%s1678 + $0x8] sm:$0xff]
          %v1681 = vld [vmem:[%s1678 + $0x10] sm:$0xff]
          %v1682 = vld [vmem:[%s1678 + $0x18] sm:$0xff]
          %1683 = vrot.lane.b32.xlu0 %v1679, 11
          %v1684 = vpop.permute.xlu0 %1683
          %1685 = vrot.lane.b32.xlu0 %v1681, 11
          %v1686 = vpop.permute.xlu0 %1685
          %1687 = vrot.lane.b32.xlu0 %v1680, 11
          %v1688 = vpop.permute.xlu0 %1687
          %1689 = vrot.lane.b32.xlu0 %v1682, 11
          %v1690 = vpop.permute.xlu0 %1689
          %v1691 = vsel %vm1628, %v1684, %v1688
          %v1692 = vsel %vm1628, %v1686, %v1690
          %v1693 = vmul.f32 %v1658, %v1675
          %v1694 = vmul.f32 %v1659, %v1676
          %v1695 = vadd.f32 %v1649, %v1693
          %v1696 = vadd.f32 %v1650, %v1694
          %v1697 = vmul.f32 %v1658, %v1691
          %v1698 = vmul.f32 %v1659, %v1692
          %v1699 = vadd.f32 %v1653, %v1697
          %v1700 = vadd.f32 %v1654, %v1698
        $region126: #{tpu_custom_call.1} parent=31 // loop_footer
          %s1601 = sadd.s32 1, %s1597
        $region127: #{tpu_custom_call.1} parent=31 // loop_footer_branch
          %1596 = sbr.rel target = $region123
        $region128: #{tpu_custom_call.1} parent=31 // loop_exit
          _
        %v1701 = vmul.f32 %v1602, 0.25
        %v1702 = vmul.f32 %v1603, 0.25
        %s1703 = scalar_lea.vmem %s377, 176 [#allocation8]
        %1704 = vst [vmem:[%s1703] sm:$0xff] %v1701
        %1705 = vst [vmem:[%s1703 + $0x8] sm:$0xff] %v1702
        %v1706 = vmul.f32 %v1604, 0.25
        %v1707 = vmul.f32 %v1605, 0.25
        %s1708 = scalar_lea.vmem %s377, 432 [#allocation8]
        %1709 = vst [vmem:[%s1708] sm:$0xff] %v1706
        %1710 = vst [vmem:[%s1708 + $0x8] sm:$0xff] %v1707
        loop: start=0, step=1, limit=2
        $region129: #{tpu_custom_call.1} parent=31 // loop_pre_header
          _
        $region130: #{tpu_custom_call.1} parent=31 // loop_header
          %s1712 = sphi 0, %s1716
          %p1713 = scmp.ge.s32.totalorder %s1712, 2
          %v1717 = vphi 0.0, %v1810
          %v1718 = vphi 0.0, %v1811
          %v1719 = vphi 0.0, %v1814
          %v1720 = vphi 0.0, %v1815
        $region131: #{tpu_custom_call.1} parent=31 // loop_header_branch
          %1715 = sbr.rel (%p1713) target = $region135
        $region132: #{tpu_custom_call.1} parent=31 // loop_body
          %s1721 = smul.u32 %s1712, 2
          %s1722 = smul.u32 %s1721, 16
          %s1723 = scalar_lea.vmem %s327, %s1722 [#allocation2]
          %v1724 = vld [vmem:[%s1723] sm:$0xff]
          %v1725 = vld [vmem:[%s1723 + $0x8] sm:$0xff]
          %s1726 = smul.u32 %s1721, 4
          %s1727 = smul.addr %s1726, 8
          %s1728 = scalar_lea.vmem %s336, %s1727 [#allocation5]
          %v1729 = vld [vmem:[%s1728] sm:$0xff]
          %v1730 = vld [vmem:[%s1728 + $0x8] sm:$0xff]
          %v1731 = vld [vmem:[%s1728 + $0x10] sm:$0xff]
          %v1732 = vld [vmem:[%s1728 + $0x18] sm:$0xff]
          %1733 = vrot.lane.b32.xlu0 %v1729, 12
          %v1734 = vpop.permute.xlu0 %1733
          %1735 = vrot.lane.b32.xlu0 %v1731, 12
          %v1736 = vpop.permute.xlu0 %1735
          %1737 = vrot.lane.b32.xlu0 %v1730, 12
          %v1738 = vpop.permute.xlu0 %1737
          %1739 = vrot.lane.b32.xlu0 %v1732, 12
          %v1740 = vpop.permute.xlu0 %1739
          %v1741 = vlaneseq
          %v1742 = vand.u32 %v1741, 127
          %vm1743 = vcmp.lt.s32.totalorder %v1742, 12
          %v1744 = vsel %vm1743, %v1734, %v1738
          %v1745 = vsel %vm1743, %v1736, %v1740
          %s1746 = smul.addr %s1726, 8
          %s1747 = scalar_lea.vmem %s345, %s1746 [#allocation7]
          %v1748 = vld [vmem:[%s1747] sm:$0xff]
          %v1749 = vld [vmem:[%s1747 + $0x8] sm:$0xff]
          %v1750 = vld [vmem:[%s1747 + $0x10] sm:$0xff]
          %v1751 = vld [vmem:[%s1747 + $0x18] sm:$0xff]
          %1752 = vrot.lane.b32.xlu0 %v1748, 12
          %v1753 = vpop.permute.xlu0 %1752
          %1754 = vrot.lane.b32.xlu0 %v1750, 12
          %v1755 = vpop.permute.xlu0 %1754
          %1756 = vrot.lane.b32.xlu0 %v1749, 12
          %v1757 = vpop.permute.xlu0 %1756
          %1758 = vrot.lane.b32.xlu0 %v1751, 12
          %v1759 = vpop.permute.xlu0 %1758
          %v1760 = vsel %vm1743, %v1753, %v1757
          %v1761 = vsel %vm1743, %v1755, %v1759
          %v1762 = vmul.f32 %v1724, %v1744
          %v1763 = vmul.f32 %v1725, %v1745
          %v1764 = vadd.f32 %v1717, %v1762
          %v1765 = vadd.f32 %v1718, %v1763
          %v1766 = vmul.f32 %v1724, %v1760
          %v1767 = vmul.f32 %v1725, %v1761
          %v1768 = vadd.f32 %v1719, %v1766
          %v1769 = vadd.f32 %v1720, %v1767
          %s1770 = sadd.s32 %s1721, 1
          %s1771 = smul.u32 %s1770, 16
          %s1772 = scalar_lea.vmem %s327, %s1771 [#allocation2]
          %v1773 = vld [vmem:[%s1772] sm:$0xff]
          %v1774 = vld [vmem:[%s1772 + $0x8] sm:$0xff]
          %s1775 = smul.u32 %s1770, 4
          %s1776 = smul.addr %s1775, 8
          %s1777 = scalar_lea.vmem %s336, %s1776 [#allocation5]
          %v1778 = vld [vmem:[%s1777] sm:$0xff]
          %v1779 = vld [vmem:[%s1777 + $0x8] sm:$0xff]
          %v1780 = vld [vmem:[%s1777 + $0x10] sm:$0xff]
          %v1781 = vld [vmem:[%s1777 + $0x18] sm:$0xff]
          %1782 = vrot.lane.b32.xlu0 %v1778, 12
          %v1783 = vpop.permute.xlu0 %1782
          %1784 = vrot.lane.b32.xlu0 %v1780, 12
          %v1785 = vpop.permute.xlu0 %1784
          %1786 = vrot.lane.b32.xlu0 %v1779, 12
          %v1787 = vpop.permute.xlu0 %1786
          %1788 = vrot.lane.b32.xlu0 %v1781, 12
          %v1789 = vpop.permute.xlu0 %1788
          %v1790 = vsel %vm1743, %v1783, %v1787
          %v1791 = vsel %vm1743, %v1785, %v1789
          %s1792 = smul.addr %s1775, 8
          %s1793 = scalar_lea.vmem %s345, %s1792 [#allocation7]
          %v1794 = vld [vmem:[%s1793] sm:$0xff]
          %v1795 = vld [vmem:[%s1793 + $0x8] sm:$0xff]
          %v1796 = vld [vmem:[%s1793 + $0x10] sm:$0xff]
          %v1797 = vld [vmem:[%s1793 + $0x18] sm:$0xff]
          %1798 = vrot.lane.b32.xlu0 %v1794, 12
          %v1799 = vpop.permute.xlu0 %1798
          %1800 = vrot.lane.b32.xlu0 %v1796, 12
          %v1801 = vpop.permute.xlu0 %1800
          %1802 = vrot.lane.b32.xlu0 %v1795, 12
          %v1803 = vpop.permute.xlu0 %1802
          %1804 = vrot.lane.b32.xlu0 %v1797, 12
          %v1805 = vpop.permute.xlu0 %1804
          %v1806 = vsel %vm1743, %v1799, %v1803
          %v1807 = vsel %vm1743, %v1801, %v1805
          %v1808 = vmul.f32 %v1773, %v1790
          %v1809 = vmul.f32 %v1774, %v1791
          %v1810 = vadd.f32 %v1764, %v1808
          %v1811 = vadd.f32 %v1765, %v1809
          %v1812 = vmul.f32 %v1773, %v1806
          %v1813 = vmul.f32 %v1774, %v1807
          %v1814 = vadd.f32 %v1768, %v1812
          %v1815 = vadd.f32 %v1769, %v1813
        $region133: #{tpu_custom_call.1} parent=31 // loop_footer
          %s1716 = sadd.s32 1, %s1712
        $region134: #{tpu_custom_call.1} parent=31 // loop_footer_branch
          %1711 = sbr.rel target = $region130
        $region135: #{tpu_custom_call.1} parent=31 // loop_exit
          _
        %v1816 = vmul.f32 %v1717, 0.25
        %v1817 = vmul.f32 %v1718, 0.25
        %s1818 = scalar_lea.vmem %s377, 192 [#allocation8]
        %1819 = vst [vmem:[%s1818] sm:$0xff] %v1816
        %1820 = vst [vmem:[%s1818 + $0x8] sm:$0xff] %v1817
        %v1821 = vmul.f32 %v1719, 0.25
        %v1822 = vmul.f32 %v1720, 0.25
        %s1823 = scalar_lea.vmem %s377, 448 [#allocation8]
        %1824 = vst [vmem:[%s1823] sm:$0xff] %v1821
        %1825 = vst [vmem:[%s1823 + $0x8] sm:$0xff] %v1822
        loop: start=0, step=1, limit=2
        $region136: #{tpu_custom_call.1} parent=31 // loop_pre_header
          _
        $region137: #{tpu_custom_call.1} parent=31 // loop_header
          %s1827 = sphi 0, %s1831
          %p1828 = scmp.ge.s32.totalorder %s1827, 2
          %v1832 = vphi 0.0, %v1925
          %v1833 = vphi 0.0, %v1926
          %v1834 = vphi 0.0, %v1929
          %v1835 = vphi 0.0, %v1930
        $region138: #{tpu_custom_call.1} parent=31 // loop_header_branch
          %1830 = sbr.rel (%p1828) target = $region142
        $region139: #{tpu_custom_call.1} parent=31 // loop_body
          %s1836 = smul.u32 %s1827, 2
          %s1837 = smul.u32 %s1836, 16
          %s1838 = scalar_lea.vmem %s327, %s1837 [#allocation2]
          %v1839 = vld [vmem:[%s1838] sm:$0xff]
          %v1840 = vld [vmem:[%s1838 + $0x8] sm:$0xff]
          %s1841 = smul.u32 %s1836, 4
          %s1842 = smul.addr %s1841, 8
          %s1843 = scalar_lea.vmem %s336, %s1842 [#allocation5]
          %v1844 = vld [vmem:[%s1843] sm:$0xff]
          %v1845 = vld [vmem:[%s1843 + $0x8] sm:$0xff]
          %v1846 = vld [vmem:[%s1843 + $0x10] sm:$0xff]
          %v1847 = vld [vmem:[%s1843 + $0x18] sm:$0xff]
          %1848 = vrot.lane.b32.xlu0 %v1844, 13
          %v1849 = vpop.permute.xlu0 %1848
          %1850 = vrot.lane.b32.xlu0 %v1846, 13
          %v1851 = vpop.permute.xlu0 %1850
          %1852 = vrot.lane.b32.xlu0 %v1845, 13
          %v1853 = vpop.permute.xlu0 %1852
          %1854 = vrot.lane.b32.xlu0 %v1847, 13
          %v1855 = vpop.permute.xlu0 %1854
          %v1856 = vlaneseq
          %v1857 = vand.u32 %v1856, 127
          %vm1858 = vcmp.lt.s32.totalorder %v1857, 13
          %v1859 = vsel %vm1858, %v1849, %v1853
          %v1860 = vsel %vm1858, %v1851, %v1855
          %s1861 = smul.addr %s1841, 8
          %s1862 = scalar_lea.vmem %s345, %s1861 [#allocation7]
          %v1863 = vld [vmem:[%s1862] sm:$0xff]
          %v1864 = vld [vmem:[%s1862 + $0x8] sm:$0xff]
          %v1865 = vld [vmem:[%s1862 + $0x10] sm:$0xff]
          %v1866 = vld [vmem:[%s1862 + $0x18] sm:$0xff]
          %1867 = vrot.lane.b32.xlu0 %v1863, 13
          %v1868 = vpop.permute.xlu0 %1867
          %1869 = vrot.lane.b32.xlu0 %v1865, 13
          %v1870 = vpop.permute.xlu0 %1869
          %1871 = vrot.lane.b32.xlu0 %v1864, 13
          %v1872 = vpop.permute.xlu0 %1871
          %1873 = vrot.lane.b32.xlu0 %v1866, 13
          %v1874 = vpop.permute.xlu0 %1873
          %v1875 = vsel %vm1858, %v1868, %v1872
          %v1876 = vsel %vm1858, %v1870, %v1874
          %v1877 = vmul.f32 %v1839, %v1859
          %v1878 = vmul.f32 %v1840, %v1860
          %v1879 = vadd.f32 %v1832, %v1877
          %v1880 = vadd.f32 %v1833, %v1878
          %v1881 = vmul.f32 %v1839, %v1875
          %v1882 = vmul.f32 %v1840, %v1876
          %v1883 = vadd.f32 %v1834, %v1881
          %v1884 = vadd.f32 %v1835, %v1882
          %s1885 = sadd.s32 %s1836, 1
          %s1886 = smul.u32 %s1885, 16
          %s1887 = scalar_lea.vmem %s327, %s1886 [#allocation2]
          %v1888 = vld [vmem:[%s1887] sm:$0xff]
          %v1889 = vld [vmem:[%s1887 + $0x8] sm:$0xff]
          %s1890 = smul.u32 %s1885, 4
          %s1891 = smul.addr %s1890, 8
          %s1892 = scalar_lea.vmem %s336, %s1891 [#allocation5]
          %v1893 = vld [vmem:[%s1892] sm:$0xff]
          %v1894 = vld [vmem:[%s1892 + $0x8] sm:$0xff]
          %v1895 = vld [vmem:[%s1892 + $0x10] sm:$0xff]
          %v1896 = vld [vmem:[%s1892 + $0x18] sm:$0xff]
          %1897 = vrot.lane.b32.xlu0 %v1893, 13
          %v1898 = vpop.permute.xlu0 %1897
          %1899 = vrot.lane.b32.xlu0 %v1895, 13
          %v1900 = vpop.permute.xlu0 %1899
          %1901 = vrot.lane.b32.xlu0 %v1894, 13
          %v1902 = vpop.permute.xlu0 %1901
          %1903 = vrot.lane.b32.xlu0 %v1896, 13
          %v1904 = vpop.permute.xlu0 %1903
          %v1905 = vsel %vm1858, %v1898, %v1902
          %v1906 = vsel %vm1858, %v1900, %v1904
          %s1907 = smul.addr %s1890, 8
          %s1908 = scalar_lea.vmem %s345, %s1907 [#allocation7]
          %v1909 = vld [vmem:[%s1908] sm:$0xff]
          %v1910 = vld [vmem:[%s1908 + $0x8] sm:$0xff]
          %v1911 = vld [vmem:[%s1908 + $0x10] sm:$0xff]
          %v1912 = vld [vmem:[%s1908 + $0x18] sm:$0xff]
          %1913 = vrot.lane.b32.xlu0 %v1909, 13
          %v1914 = vpop.permute.xlu0 %1913
          %1915 = vrot.lane.b32.xlu0 %v1911, 13
          %v1916 = vpop.permute.xlu0 %1915
          %1917 = vrot.lane.b32.xlu0 %v1910, 13
          %v1918 = vpop.permute.xlu0 %1917
          %1919 = vrot.lane.b32.xlu0 %v1912, 13
          %v1920 = vpop.permute.xlu0 %1919
          %v1921 = vsel %vm1858, %v1914, %v1918
          %v1922 = vsel %vm1858, %v1916, %v1920
          %v1923 = vmul.f32 %v1888, %v1905
          %v1924 = vmul.f32 %v1889, %v1906
          %v1925 = vadd.f32 %v1879, %v1923
          %v1926 = vadd.f32 %v1880, %v1924
          %v1927 = vmul.f32 %v1888, %v1921
          %v1928 = vmul.f32 %v1889, %v1922
          %v1929 = vadd.f32 %v1883, %v1927
          %v1930 = vadd.f32 %v1884, %v1928
        $region140: #{tpu_custom_call.1} parent=31 // loop_footer
          %s1831 = sadd.s32 1, %s1827
        $region141: #{tpu_custom_call.1} parent=31 // loop_footer_branch
          %1826 = sbr.rel target = $region137
        $region142: #{tpu_custom_call.1} parent=31 // loop_exit
          _
        %v1931 = vmul.f32 %v1832, 0.25
        %v1932 = vmul.f32 %v1833, 0.25
        %s1933 = scalar_lea.vmem %s377, 208 [#allocation8]
        %1934 = vst [vmem:[%s1933] sm:$0xff] %v1931
        %1935 = vst [vmem:[%s1933 + $0x8] sm:$0xff] %v1932
        %v1936 = vmul.f32 %v1834, 0.25
        %v1937 = vmul.f32 %v1835, 0.25
        %s1938 = scalar_lea.vmem %s377, 464 [#allocation8]
        %1939 = vst [vmem:[%s1938] sm:$0xff] %v1936
        %1940 = vst [vmem:[%s1938 + $0x8] sm:$0xff] %v1937
        loop: start=0, step=1, limit=2
        $region143: #{tpu_custom_call.1} parent=31 // loop_pre_header
          _
        $region144: #{tpu_custom_call.1} parent=31 // loop_header
          %s1942 = sphi 0, %s1946
          %p1943 = scmp.ge.s32.totalorder %s1942, 2
          %v1947 = vphi 0.0, %v2040
          %v1948 = vphi 0.0, %v2041
          %v1949 = vphi 0.0, %v2044
          %v1950 = vphi 0.0, %v2045
        $region145: #{tpu_custom_call.1} parent=31 // loop_header_branch
          %1945 = sbr.rel (%p1943) target = $region149
        $region146: #{tpu_custom_call.1} parent=31 // loop_body
          %s1951 = smul.u32 %s1942, 2
          %s1952 = smul.u32 %s1951, 16
          %s1953 = scalar_lea.vmem %s327, %s1952 [#allocation2]
          %v1954 = vld [vmem:[%s1953] sm:$0xff]
          %v1955 = vld [vmem:[%s1953 + $0x8] sm:$0xff]
          %s1956 = smul.u32 %s1951, 4
          %s1957 = smul.addr %s1956, 8
          %s1958 = scalar_lea.vmem %s336, %s1957 [#allocation5]
          %v1959 = vld [vmem:[%s1958] sm:$0xff]
          %v1960 = vld [vmem:[%s1958 + $0x8] sm:$0xff]
          %v1961 = vld [vmem:[%s1958 + $0x10] sm:$0xff]
          %v1962 = vld [vmem:[%s1958 + $0x18] sm:$0xff]
          %1963 = vrot.lane.b32.xlu0 %v1959, 14
          %v1964 = vpop.permute.xlu0 %1963
          %1965 = vrot.lane.b32.xlu0 %v1961, 14
          %v1966 = vpop.permute.xlu0 %1965
          %1967 = vrot.lane.b32.xlu0 %v1960, 14
          %v1968 = vpop.permute.xlu0 %1967
          %1969 = vrot.lane.b32.xlu0 %v1962, 14
          %v1970 = vpop.permute.xlu0 %1969
          %v1971 = vlaneseq
          %v1972 = vand.u32 %v1971, 127
          %vm1973 = vcmp.lt.s32.totalorder %v1972, 14
          %v1974 = vsel %vm1973, %v1964, %v1968
          %v1975 = vsel %vm1973, %v1966, %v1970
          %s1976 = smul.addr %s1956, 8
          %s1977 = scalar_lea.vmem %s345, %s1976 [#allocation7]
          %v1978 = vld [vmem:[%s1977] sm:$0xff]
          %v1979 = vld [vmem:[%s1977 + $0x8] sm:$0xff]
          %v1980 = vld [vmem:[%s1977 + $0x10] sm:$0xff]
          %v1981 = vld [vmem:[%s1977 + $0x18] sm:$0xff]
          %1982 = vrot.lane.b32.xlu0 %v1978, 14
          %v1983 = vpop.permute.xlu0 %1982
          %1984 = vrot.lane.b32.xlu0 %v1980, 14
          %v1985 = vpop.permute.xlu0 %1984
          %1986 = vrot.lane.b32.xlu0 %v1979, 14
          %v1987 = vpop.permute.xlu0 %1986
          %1988 = vrot.lane.b32.xlu0 %v1981, 14
          %v1989 = vpop.permute.xlu0 %1988
          %v1990 = vsel %vm1973, %v1983, %v1987
          %v1991 = vsel %vm1973, %v1985, %v1989
          %v1992 = vmul.f32 %v1954, %v1974
          %v1993 = vmul.f32 %v1955, %v1975
          %v1994 = vadd.f32 %v1947, %v1992
          %v1995 = vadd.f32 %v1948, %v1993
          %v1996 = vmul.f32 %v1954, %v1990
          %v1997 = vmul.f32 %v1955, %v1991
          %v1998 = vadd.f32 %v1949, %v1996
          %v1999 = vadd.f32 %v1950, %v1997
          %s2000 = sadd.s32 %s1951, 1
          %s2001 = smul.u32 %s2000, 16
          %s2002 = scalar_lea.vmem %s327, %s2001 [#allocation2]
          %v2003 = vld [vmem:[%s2002] sm:$0xff]
          %v2004 = vld [vmem:[%s2002 + $0x8] sm:$0xff]
          %s2005 = smul.u32 %s2000, 4
          %s2006 = smul.addr %s2005, 8
          %s2007 = scalar_lea.vmem %s336, %s2006 [#allocation5]
          %v2008 = vld [vmem:[%s2007] sm:$0xff]
          %v2009 = vld [vmem:[%s2007 + $0x8] sm:$0xff]
          %v2010 = vld [vmem:[%s2007 + $0x10] sm:$0xff]
          %v2011 = vld [vmem:[%s2007 + $0x18] sm:$0xff]
          %2012 = vrot.lane.b32.xlu0 %v2008, 14
          %v2013 = vpop.permute.xlu0 %2012
          %2014 = vrot.lane.b32.xlu0 %v2010, 14
          %v2015 = vpop.permute.xlu0 %2014
          %2016 = vrot.lane.b32.xlu0 %v2009, 14
          %v2017 = vpop.permute.xlu0 %2016
          %2018 = vrot.lane.b32.xlu0 %v2011, 14
          %v2019 = vpop.permute.xlu0 %2018
          %v2020 = vsel %vm1973, %v2013, %v2017
          %v2021 = vsel %vm1973, %v2015, %v2019
          %s2022 = smul.addr %s2005, 8
          %s2023 = scalar_lea.vmem %s345, %s2022 [#allocation7]
          %v2024 = vld [vmem:[%s2023] sm:$0xff]
          %v2025 = vld [vmem:[%s2023 + $0x8] sm:$0xff]
          %v2026 = vld [vmem:[%s2023 + $0x10] sm:$0xff]
          %v2027 = vld [vmem:[%s2023 + $0x18] sm:$0xff]
          %2028 = vrot.lane.b32.xlu0 %v2024, 14
          %v2029 = vpop.permute.xlu0 %2028
          %2030 = vrot.lane.b32.xlu0 %v2026, 14
          %v2031 = vpop.permute.xlu0 %2030
          %2032 = vrot.lane.b32.xlu0 %v2025, 14
          %v2033 = vpop.permute.xlu0 %2032
          %2034 = vrot.lane.b32.xlu0 %v2027, 14
          %v2035 = vpop.permute.xlu0 %2034
          %v2036 = vsel %vm1973, %v2029, %v2033
          %v2037 = vsel %vm1973, %v2031, %v2035
          %v2038 = vmul.f32 %v2003, %v2020
          %v2039 = vmul.f32 %v2004, %v2021
          %v2040 = vadd.f32 %v1994, %v2038
          %v2041 = vadd.f32 %v1995, %v2039
          %v2042 = vmul.f32 %v2003, %v2036
          %v2043 = vmul.f32 %v2004, %v2037
          %v2044 = vadd.f32 %v1998, %v2042
          %v2045 = vadd.f32 %v1999, %v2043
        $region147: #{tpu_custom_call.1} parent=31 // loop_footer
          %s1946 = sadd.s32 1, %s1942
        $region148: #{tpu_custom_call.1} parent=31 // loop_footer_branch
          %1941 = sbr.rel target = $region144
        $region149: #{tpu_custom_call.1} parent=31 // loop_exit
          _
        %v2046 = vmul.f32 %v1947, 0.25
        %v2047 = vmul.f32 %v1948, 0.25
        %s2048 = scalar_lea.vmem %s377, 224 [#allocation8]
        %2049 = vst [vmem:[%s2048] sm:$0xff] %v2046
        %2050 = vst [vmem:[%s2048 + $0x8] sm:$0xff] %v2047
        %v2051 = vmul.f32 %v1949, 0.25
        %v2052 = vmul.f32 %v1950, 0.25
        %s2053 = scalar_lea.vmem %s377, 480 [#allocation8]
        %2054 = vst [vmem:[%s2053] sm:$0xff] %v2051
        %2055 = vst [vmem:[%s2053 + $0x8] sm:$0xff] %v2052
        loop: start=0, step=1, limit=2
        $region150: #{tpu_custom_call.1} parent=31 // loop_pre_header
          _
        $region151: #{tpu_custom_call.1} parent=31 // loop_header
          %s2057 = sphi 0, %s2061
          %p2058 = scmp.ge.s32.totalorder %s2057, 2
          %v2062 = vphi 0.0, %v2155
          %v2063 = vphi 0.0, %v2156
          %v2064 = vphi 0.0, %v2159
          %v2065 = vphi 0.0, %v2160
        $region152: #{tpu_custom_call.1} parent=31 // loop_header_branch
          %2060 = sbr.rel (%p2058) target = $region156
        $region153: #{tpu_custom_call.1} parent=31 // loop_body
          %s2066 = smul.u32 %s2057, 2
          %s2067 = smul.u32 %s2066, 16
          %s2068 = scalar_lea.vmem %s327, %s2067 [#allocation2]
          %v2069 = vld [vmem:[%s2068] sm:$0xff]
          %v2070 = vld [vmem:[%s2068 + $0x8] sm:$0xff]
          %s2071 = smul.u32 %s2066, 4
          %s2072 = smul.addr %s2071, 8
          %s2073 = scalar_lea.vmem %s336, %s2072 [#allocation5]
          %v2074 = vld [vmem:[%s2073] sm:$0xff]
          %v2075 = vld [vmem:[%s2073 + $0x8] sm:$0xff]
          %v2076 = vld [vmem:[%s2073 + $0x10] sm:$0xff]
          %v2077 = vld [vmem:[%s2073 + $0x18] sm:$0xff]
          %2078 = vrot.lane.b32.xlu0 %v2074, 15
          %v2079 = vpop.permute.xlu0 %2078
          %2080 = vrot.lane.b32.xlu0 %v2076, 15
          %v2081 = vpop.permute.xlu0 %2080
          %2082 = vrot.lane.b32.xlu0 %v2075, 15
          %v2083 = vpop.permute.xlu0 %2082
          %2084 = vrot.lane.b32.xlu0 %v2077, 15
          %v2085 = vpop.permute.xlu0 %2084
          %v2086 = vlaneseq
          %v2087 = vand.u32 %v2086, 127
          %vm2088 = vcmp.lt.s32.totalorder %v2087, 15
          %v2089 = vsel %vm2088, %v2079, %v2083
          %v2090 = vsel %vm2088, %v2081, %v2085
          %s2091 = smul.addr %s2071, 8
          %s2092 = scalar_lea.vmem %s345, %s2091 [#allocation7]
          %v2093 = vld [vmem:[%s2092] sm:$0xff]
          %v2094 = vld [vmem:[%s2092 + $0x8] sm:$0xff]
          %v2095 = vld [vmem:[%s2092 + $0x10] sm:$0xff]
          %v2096 = vld [vmem:[%s2092 + $0x18] sm:$0xff]
          %2097 = vrot.lane.b32.xlu0 %v2093, 15
          %v2098 = vpop.permute.xlu0 %2097
          %2099 = vrot.lane.b32.xlu0 %v2095, 15
          %v2100 = vpop.permute.xlu0 %2099
          %2101 = vrot.lane.b32.xlu0 %v2094, 15
          %v2102 = vpop.permute.xlu0 %2101
          %2103 = vrot.lane.b32.xlu0 %v2096, 15
          %v2104 = vpop.permute.xlu0 %2103
          %v2105 = vsel %vm2088, %v2098, %v2102
          %v2106 = vsel %vm2088, %v2100, %v2104
          %v2107 = vmul.f32 %v2069, %v2089
          %v2108 = vmul.f32 %v2070, %v2090
          %v2109 = vadd.f32 %v2062, %v2107
          %v2110 = vadd.f32 %v2063, %v2108
          %v2111 = vmul.f32 %v2069, %v2105
          %v2112 = vmul.f32 %v2070, %v2106
          %v2113 = vadd.f32 %v2064, %v2111
          %v2114 = vadd.f32 %v2065, %v2112
          %s2115 = sadd.s32 %s2066, 1
          %s2116 = smul.u32 %s2115, 16
          %s2117 = scalar_lea.vmem %s327, %s2116 [#allocation2]
          %v2118 = vld [vmem:[%s2117] sm:$0xff]
          %v2119 = vld [vmem:[%s2117 + $0x8] sm:$0xff]
          %s2120 = smul.u32 %s2115, 4
          %s2121 = smul.addr %s2120, 8
          %s2122 = scalar_lea.vmem %s336, %s2121 [#allocation5]
          %v2123 = vld [vmem:[%s2122] sm:$0xff]
          %v2124 = vld [vmem:[%s2122 + $0x8] sm:$0xff]
          %v2125 = vld [vmem:[%s2122 + $0x10] sm:$0xff]
          %v2126 = vld [vmem:[%s2122 + $0x18] sm:$0xff]
          %2127 = vrot.lane.b32.xlu0 %v2123, 15
          %v2128 = vpop.permute.xlu0 %2127
          %2129 = vrot.lane.b32.xlu0 %v2125, 15
          %v2130 = vpop.permute.xlu0 %2129
          %2131 = vrot.lane.b32.xlu0 %v2124, 15
          %v2132 = vpop.permute.xlu0 %2131
          %2133 = vrot.lane.b32.xlu0 %v2126, 15
          %v2134 = vpop.permute.xlu0 %2133
          %v2135 = vsel %vm2088, %v2128, %v2132
          %v2136 = vsel %vm2088, %v2130, %v2134
          %s2137 = smul.addr %s2120, 8
          %s2138 = scalar_lea.vmem %s345, %s2137 [#allocation7]
          %v2139 = vld [vmem:[%s2138] sm:$0xff]
          %v2140 = vld [vmem:[%s2138 + $0x8] sm:$0xff]
          %v2141 = vld [vmem:[%s2138 + $0x10] sm:$0xff]
          %v2142 = vld [vmem:[%s2138 + $0x18] sm:$0xff]
          %2143 = vrot.lane.b32.xlu0 %v2139, 15
          %v2144 = vpop.permute.xlu0 %2143
          %2145 = vrot.lane.b32.xlu0 %v2141, 15
          %v2146 = vpop.permute.xlu0 %2145
          %2147 = vrot.lane.b32.xlu0 %v2140, 15
          %v2148 = vpop.permute.xlu0 %2147
          %2149 = vrot.lane.b32.xlu0 %v2142, 15
          %v2150 = vpop.permute.xlu0 %2149
          %v2151 = vsel %vm2088, %v2144, %v2148
          %v2152 = vsel %vm2088, %v2146, %v2150
          %v2153 = vmul.f32 %v2118, %v2135
          %v2154 = vmul.f32 %v2119, %v2136
          %v2155 = vadd.f32 %v2109, %v2153
          %v2156 = vadd.f32 %v2110, %v2154
          %v2157 = vmul.f32 %v2118, %v2151
          %v2158 = vmul.f32 %v2119, %v2152
          %v2159 = vadd.f32 %v2113, %v2157
          %v2160 = vadd.f32 %v2114, %v2158
        $region154: #{tpu_custom_call.1} parent=31 // loop_footer
          %s2061 = sadd.s32 1, %s2057
        $region155: #{tpu_custom_call.1} parent=31 // loop_footer_branch
          %2056 = sbr.rel target = $region151
        $region156: #{tpu_custom_call.1} parent=31 // loop_exit
          _
        %v2161 = vmul.f32 %v2062, 0.25
        %v2162 = vmul.f32 %v2063, 0.25
        %s2163 = scalar_lea.vmem %s377, 240 [#allocation8]
        %2164 = vst [vmem:[%s2163] sm:$0xff] %v2161
        %2165 = vst [vmem:[%s2163 + $0x8] sm:$0xff] %v2162
        %v2166 = vmul.f32 %v2064, 0.25
        %v2167 = vmul.f32 %v2065, 0.25
        %s2168 = scalar_lea.vmem %s377, 496 [#allocation8]
        %2169 = vst [vmem:[%s2168] sm:$0xff] %v2166
        %2170 = vst [vmem:[%s2168 + $0x8] sm:$0xff] %v2167
        %s2171 = sand.u32 %s138, 1
        %s2172 = scalar_lea.sflag [#allocation4], %s2171
        %s2173 = sand.u32 %s138, 1
        %s2174 = smul.addr %s2173, 512
        %s2175 = scalar_lea.vmem [#allocation8], %s2174
        // Predicated region
        $region157: #{tpu_custom_call.1} parent=31 // pred_check
          %p2176 = pneg %p148
        $region158: #{tpu_custom_call.1} parent=31 // pred_check_branch
          %2178 = sbr.rel (%p2176) target = $region160
        $region159: #{tpu_custom_call.1} parent=31 // pred_region
          #allocation16 [shape = 'u32[6]{0}', space=smem, size = 0x18, scoped, tag = 'DMA stride descriptor']
          %s2179 = smul.u32 16, %s30
          %s2180 = smul.u32 2, %s29
          %s2182 = ssub.s32 8192, 8192
          %2183 = vsyncadd %s2172, %s2182
          %s2184 = smul.addr %s2179, 4
          %s2185 = sadd.s32 %s2180, %s2184
          %s2186 = smul.addr %s28, 128
          %s2187 = sadd.s32 %s2185, %s2186
          %s2188 = smul.addr %s2187, 128
          %s2189 = scalar_lea.hbm %s3, %s2188
          %s2191 = sshll.u32 1, 14
          %s2192 = sxor.u32 4294967295, %s2191
          %s2195 = sshll.u32 7, 18
          %s2196 = sxor.u32 4294967295, %s2195
          %s2197 = sand.u32 0, %s2196
          %s2199 = sor.u32 %s2197, 0
          %s2201 = sshll.u32 3, 24
          %s2202 = sxor.u32 4294967295, %s2201
          %s2203 = sand.u32 %s2199, %s2202
          %s2205 = sor.u32 %s2203, 0
          %s2206 = sshll.u32 %s2175, 4
          %s2207 = int_to_ptr.vmem [resolvable:$true] %s2206
          %2213 = sst [smem:[#allocation16]] 256
          %s2214 = scalar_lea.smem [#allocation16], 1
          %2215 = sst [smem:[%s2214]] 512
          %s2216 = scalar_lea.smem [#allocation16], 2
          %2217 = sst [smem:[%s2216]] 2
          %s2218 = scalar_lea.smem [#allocation16], 3
          %2219 = sst [smem:[%s2218]] 128
          %s2220 = scalar_lea.smem [#allocation16], 4
          %2221 = sst [smem:[%s2220]] 128
          %s2222 = scalar_lea.smem [#allocation16], 5
          %2223 = sst [smem:[%s2222]] 8
          %2225 = dma.general %s2207, 8192, %s2189, %s2172, [#allocation15], [#allocation16], %s2205, 0
        $region160: #{tpu_custom_call.1} parent=31 // pred_fallthru
          _
      $region32: #{tpu_custom_call.1} parent=5 // pred_fallthru
        _
      %p2226 = scmp.le.s32.totalorder 2, %s18
      // Predicated region
      $region161: #{tpu_custom_call.1} parent=5 // pred_check
        %p2227 = pneg %p2226
      $region162: #{tpu_custom_call.1} parent=5 // pred_check_branch
        %2229 = sbr.rel (%p2227) target = $region164
      $region163: #{tpu_custom_call.1} parent=5 // pred_region
        %s2230 = ssub.s32 %s18, 2
        // Predicated region
        $region165: #{tpu_custom_call.1} parent=163 // pred_check
          %p2231 = pneg %p154
        $region166: #{tpu_custom_call.1} parent=163 // pred_check_branch
          %2233 = sbr.rel (%p2231) target = $region168
        $region167: #{tpu_custom_call.1} parent=163 // pred_region
          %s2234 = sand.u32 %s139, 1
          %s2235 = scalar_lea.sflag [#allocation4], %s2234
          %s2236 = sand.u32 %s139, 1
          %s2237 = smul.addr %s2236, 512
          %s2238 = scalar_lea.vmem [#allocation8], %s2237
          %2239 = dma.done %s2235, 8192
        $region168: #{tpu_custom_call.1} parent=163 // pred_fallthru
          _
      $region164: #{tpu_custom_call.1} parent=5 // pred_fallthru
        _
    $region6: #{tpu_custom_call.1} parent=1 // loop_footer
      %s22 = sadd.s32 1, %s18
    $region7: #{tpu_custom_call.1} parent=1 // loop_footer_branch
      %17 = sbr.rel target = $region3
    $region8: #{tpu_custom_call.1} parent=1 // loop_exit
      _
    %2240 = vsyncpa [#allocation3], 1
    %s2241 = scalar_lea.sflag [#allocation3], 1
    %2242 = vsyncpa %s2241, 1
    %2243 = vsyncpa [#allocation6], 1
    %s2244 = scalar_lea.sflag [#allocation6], 1
    %2245 = vsyncpa %s2244, 1
    %2246 = vsyncpa [#allocation4], 1
    %s2247 = scalar_lea.sflag [#allocation4], 1
    %2248 = vsyncpa %s2247, 1

</llo_original>
